<compile_context>
chip_gen: v7x
topology: tpu7x:2x2x1
jax: 0.10.0
libtpu: 0.0.40
codegen_flags: <defaults>
</compile_context>

<pallas_src>
import functools
import math

import jax
import jax.numpy as jnp
from jax.experimental import pallas as pl
from jax.experimental.pallas import tpu as pltpu


# --------------------------------------------------------------------------
# Fused kernel body: one (batch, layer) grid step
# --------------------------------------------------------------------------
def _layer_norm(x, g, b, eps=1e-5):
    mu = jnp.mean(x, axis=-1, keepdims=True)
    var = jnp.mean((x - mu) ** 2, axis=-1, keepdims=True)
    return (x - mu) * jax.lax.rsqrt(var + eps) * g + b


def _fused_kernel(nhead,
                  xs_ref, tok_ref, w_se_ref,
                  wqkv_ref, bqkv_ref, wo_ref, bo_ref,
                  g1_ref, be1_ref, w1_ref, b1_ref,
                  w2_ref, b2_ref, g2_ref, be2_ref,
                  w_ah_ref, b_ah_ref,
                  o_ref, x_scr):
    """Grid = (B, num_layers).  Per step: one encoder layer for one batch row.

    xs_ref  : [L_pad, state_dim] f32  rows 0..S-1 = states, row S = zeros (task
                                      slot), rows S+1.. = zero padding
    tok_ref : [L_pad, D]        f32   rows 0..S-1 = b_se, row S = task embed
    weights : per-layer bf16 blocks selected by the layer grid index
    o_ref   : [S, A_pad]        f32   written only at the last layer
    x_scr   : [L_pad, D]        f32   activation carried across the layer axis
    """
    f32, bf16 = jnp.float32, jnp.bfloat16
    L_pad, D = x_scr.shape
    S = o_ref.shape[0]
    L = S + 1                       # real tokens (states + task token)
    dh = D // nhead
    layer = pl.program_id(1)

    # ---- layer 0: state embedding + task-token / bias injection -------------
    @pl.when(layer == 0)
    def _embed():
        x_scr[...] = (jnp.dot(xs_ref[...].astype(bf16), w_se_ref[...],
                              preferred_element_type=f32) + tok_ref[...])

    x = x_scr[...]                                                # [L_pad, D] f32

    # ---- key-padding bias built in-kernel (no HBM bias array) ---------------
    if L_pad > L:
        key_id = jax.lax.broadcasted_iota(jnp.int32, (1, L_pad), 1)
        kbias = jnp.where(key_id < L, jnp.float32(0.0), jnp.float32(-1e30))
    else:
        kbias = None

    # ---- multi-head self-attention (1/sqrt(dh) pre-folded into Wq) ----------
    x_b = x.astype(bf16)
    qkv = jnp.dot(x_b, wqkv_ref[...], preferred_element_type=f32) + bqkv_ref[...]
    q = qkv[:, :D].astype(bf16)
    k = qkv[:, D:2 * D].astype(bf16)
    v = qkv[:, 2 * D:].astype(bf16)

    attn = jnp.zeros((L_pad, D), f32)
    for h in range(nhead):
        sl = slice(h * dh, (h + 1) * dh)
        # q @ k^T without materializing the transpose.
        s = jax.lax.dot_general(q[:, sl], k[:, sl],
                                (((1,), (1,)), ((), ())),
                                preferred_element_type=f32)       # [L_pad, L_pad]
        if kbias is not None:
            s = s + kbias
        m = jnp.max(s, axis=-1, keepdims=True)
        e = jnp.exp(s - m)
        den = jnp.sum(e, axis=-1, keepdims=True)
        hv = jnp.dot(e.astype(bf16), v[:, sl],
                     preferred_element_type=f32) / den            # exact softmax
        # fold output projection per head -> no head concatenation.
        attn = attn + jnp.dot(hv.astype(bf16), wo_ref[sl, :],
                              preferred_element_type=f32)
    attn = attn + bo_ref[...]

    # ---- residual + LN1, FFN (ReLU), residual + LN2 --------------------------
    x = _layer_norm(x + attn, g1_ref[...], be1_ref[...])
    h1 = jnp.maximum(
        jnp.dot(x.astype(bf16), w1_ref[...], preferred_element_type=f32)
        + b1_ref[...], 0.0)
    ff = jnp.dot(h1.astype(bf16), w2_ref[...], preferred_element_type=f32) \
        + b2_ref[...]
    x = _layer_norm(x + ff, g2_ref[...], be2_ref[...])
    x_scr[...] = x

    # ---- last layer: lane-dense (padded) action head over the state rows ----
    @pl.when(layer == pl.num_programs(1) - 1)
    def _head():
        o_ref[...] = (jnp.dot(x[:S].astype(bf16), w_ah_ref[...],
                              preferred_element_type=f32) + b_ah_ref[...])


# --------------------------------------------------------------------------
# Parameters
# --------------------------------------------------------------------------
def init_params(key, state_dim, action_dim, num_tasks,
                d_model, num_layers, dim_feedforward):
    """PyTorch-equivalent parameters, weights pre-transposed to [in, out]."""
    keys = jax.random.split(key, 4 + num_layers)

    def w(k, shape, scale=0.02):
        return scale * jax.random.normal(k, shape, jnp.float32)

    params = {
        "W_se": w(keys[0], (state_dim, d_model)),
        "b_se": jnp.zeros((d_model,), jnp.float32),
        "task_table": w(keys[1], (num_tasks, d_model)),
        "W_ah": w(keys[2], (d_model, action_dim)),
        "b_ah": jnp.zeros((action_dim,), jnp.float32),
        "layers": [],
    }
    for i in range(num_layers):
        lk = jax.random.split(keys[4 + i], 4)
        params["layers"].append({
            "wqkv": w(lk[0], (d_model, 3 * d_model)),
            "bqkv": jnp.zeros((3 * d_model,), jnp.float32),
            "wo": w(lk[1], (d_model, d_model)),
            "bo": jnp.zeros((d_model,), jnp.float32),
            "g1": jnp.ones((d_model,), jnp.float32),
            "be1": jnp.zeros((d_model,), jnp.float32),
            "w1": w(lk[2], (d_model, dim_feedforward)),
            "b1": jnp.zeros((dim_feedforward,), jnp.float32),
            "w2": w(lk[3], (dim_feedforward, d_model)),
            "b2": jnp.zeros((d_model,), jnp.float32),
            "g2": jnp.ones((d_model,), jnp.float32),
            "be2": jnp.zeros((d_model,), jnp.float32),
        })
    return params


def prepare_params(params, nhead):
    """Kernel-ready packing: stack layers along a leading axis (so a layer grid
    axis can stream them), fold 1/sqrt(dh) into the query projection, cast
    matmul weights to bf16, pad the action head to a lane-dense width."""
    bf16 = jnp.bfloat16
    D = params["W_se"].shape[1]
    A = params["W_ah"].shape[1]
    dh = D // nhead
    scale = 1.0 / math.sqrt(dh)
    a_pad = ((A + 127) // 128) * 128

    def stack(key_):
        return jnp.stack([l[key_] for l in params["layers"]], axis=0)

    wqkv = stack("wqkv")                       # [N, D, 3D]
    bqkv = stack("bqkv")[:, None, :]           # [N, 1, 3D]
    wqkv = wqkv.at[:, :, :D].multiply(scale)   # fold softmax scale into Wq / bq
    bqkv = bqkv.at[:, :, :D].multiply(scale)

    w_ah = jnp.zeros((D, a_pad), jnp.float32).at[:, :A].set(params["W_ah"])
    b_ah = jnp.zeros((1, a_pad), jnp.float32).at[:, :A].set(params["b_ah"])

    return {
        "nhead": nhead,
        "action_dim": A,
        "task_table": params["task_table"],                 # f32 lookup table
        "w_se": params["W_se"].astype(bf16),
        "b_se": params["b_se"],
        "wqkv": wqkv.astype(bf16), "bqkv": bqkv,
        "wo": stack("wo").astype(bf16), "bo": stack("bo")[:, None, :],
        "g1": stack("g1")[:, None, :], "be1": stack("be1")[:, None, :],
        "w1": stack("w1").astype(bf16), "b1": stack("b1")[:, None, :],
        "w2": stack("w2").astype(bf16), "b2": stack("b2")[:, None, :],
        "g2": stack("g2")[:, None, :], "be2": stack("be2")[:, None, :],
        "w_ah": w_ah.astype(bf16), "b_ah": b_ah,
    }


# --------------------------------------------------------------------------
# Forward: one fused pallas_call over a (batch, layer) grid
# --------------------------------------------------------------------------
def ad_transformer_forward(prep, states, task_id):
    """states: [B, S, state_dim] f32; task_id: [B] int32 -> [B, S, action_dim]."""
    B, S, Sd = states.shape
    D = prep["w_se"].shape[1]
    F = prep["w1"].shape[2]
    A = prep["action_dim"]
    A_pad = prep["w_ah"].shape[1]
    nhead = prep["nhead"]
    num_layers = prep["wqkv"].shape[0]
    L = S + 1
    L_pad = ((L + 7) // 8) * 8                         # sublane-aligned token dim

    # glue (tiny, runs in XLA): embedding gather + token-slot assembly.
    # Layout: rows 0..S-1 states, row S task token, rows S+1.. zero padding —
    # attention has no positional encoding, so token order is irrelevant, and
    # this keeps the action-head slice starting at sublane offset 0.
    task_emb = prep["task_table"][task_id]                              # [B, D]
    states_pad = jnp.zeros((B, L_pad, Sd), jnp.float32).at[:, :S, :].set(states)
    tok = jnp.zeros((B, L_pad, D), jnp.float32)
    tok = tok.at[:, :S, :].set(prep["b_se"])
    tok = tok.at[:, S, :].set(task_emb)

    grid = (B, num_layers)
    per_batch = lambda b, l: (b, 0, 0)     # noqa: E731
    per_layer = lambda b, l: (l, 0, 0)     # noqa: E731
    whole = lambda b, l: (0, 0)            # noqa: E731

    in_specs = [
        pl.BlockSpec((None, L_pad, Sd), per_batch),        # states
        pl.BlockSpec((None, L_pad, D), per_batch),         # token bias / task emb
        pl.BlockSpec((Sd, D), whole),                      # w_se (resident)
        pl.BlockSpec((None, D, 3 * D), per_layer),         # wqkv (streamed)
        pl.BlockSpec((None, 1, 3 * D), per_layer),         # bqkv
        pl.BlockSpec((None, D, D), per_layer),             # wo
        pl.BlockSpec((None, 1, D), per_layer),             # bo
        pl.BlockSpec((None, 1, D), per_layer),             # g1
        pl.BlockSpec((None, 1, D), per_layer),              # be1
        pl.BlockSpec((None, D, F), per_layer),             # w1
        pl.BlockSpec((None, 1, F), per_layer),             # b1
        pl.BlockSpec((None, F, D), per_layer),             # w2
        pl.BlockSpec((None, 1, D), per_layer),             # b2
        pl.BlockSpec((None, 1, D), per_layer),             # g2
        pl.BlockSpec((None, 1, D), per_layer),             # be2
        pl.BlockSpec((D, A_pad), whole),                   # w_ah (resident)
        pl.BlockSpec((1, A_pad), whole),                   # b_ah
    ]
    out_spec = pl.BlockSpec((None, S, A_pad), per_batch)

    out_pad = pl.pallas_call(
        functools.partial(_fused_kernel, nhead),
        out_shape=jax.ShapeDtypeStruct((B, S, A_pad), jnp.float32),
        grid_spec=pltpu.PrefetchScalarGridSpec(
            num_scalar_prefetch=0,
            grid=grid,
            in_specs=in_specs,
            out_specs=out_spec,
            scratch_shapes=[pltpu.VMEM((L_pad, D), jnp.float32)]),
        compiler_params=pltpu.CompilerParams(
            # batch across TensorCores (v7x megacore); layers carry state.
            dimension_semantics=("parallel", "arbitrary"),
            # ~2 streamed bf16 layers + activations; well under 64 MiB on v7x,
            # raise toward ~100 MiB on v5e/v6e if more layers are kept resident.
            vmem_limit_bytes=48 * 1024 * 1024),
    )(states_pad, tok, prep["w_se"],
      prep["wqkv"], prep["bqkv"], prep["wo"], prep["bo"],
      prep["g1"], prep["be1"], prep["w1"], prep["b1"],
      prep["w2"], prep["b2"], prep["g2"], prep["be2"],
      prep["w_ah"], prep["b_ah"])

    return out_pad[:, :, :A]


# --------------------------------------------------------------------------
# Pure-JAX reference with matched precision (bf16 matmuls, f32 accumulation)
# --------------------------------------------------------------------------
def reference_forward(prep, states, task_id):
    f32, bf16 = jnp.float32, jnp.bfloat16
    B, S, Sd = states.shape
    D = prep["w_se"].shape[1]
    nhead = prep["nhead"]
    dh = D // nhead
    num_layers = prep["wqkv"].shape[0]
    L = S + 1

    def mm(a, w):
        return jnp.dot(a.astype(bf16), w, preferred_element_type=f32)

    state_emb = mm(states.reshape(B * S, Sd), prep["w_se"]) + prep["b_se"]
    task_emb = prep["task_table"][task_id]
    x = jnp.concatenate([state_emb.reshape(B, S, D), task_emb[:, None, :]], axis=1)

    def ln(z, g, b, eps=1e-5):
        mu = jnp.mean(z, -1, keepdims=True)
        var = jnp.mean((z - mu) ** 2, -1, keepdims=True)
        return (z - mu) * jax.lax.rsqrt(var + eps) * g + b

    for i in range(num_layers):
        qkv = mm(x.reshape(B * L, D), prep["wqkv"][i]) + prep["bqkv"][i]
        qkv = qkv.reshape(B, L, 3 * D)
        q, k, v = qkv[..., :D], qkv[..., D:2 * D], qkv[..., 2 * D:]
        q = q.reshape(B, L, nhead, dh).transpose(0, 2, 1, 3).astype(bf16)
        k = k.reshape(B, L, nhead, dh).transpose(0, 2, 1, 3).astype(bf16)
        v = v.reshape(B, L, nhead, dh).transpose(0, 2, 1, 3).astype(bf16)
        s = jnp.einsum("bhqd,bhkd->bhqk", q, k, preferred_element_type=f32)
        m = jnp.max(s, -1, keepdims=True)
        e = jnp.exp(s - m)
        den = jnp.sum(e, -1, keepdims=True)
        o = jnp.einsum("bhqk,bhkd->bhqd", e.astype(bf16), v,
                       preferred_element_type=f32) / den
        o = o.transpose(0, 2, 1, 3).reshape(B * L, D)
        attn = mm(o, prep["wo"][i]) + prep["bo"][i]
        x = ln(x + attn.reshape(B, L, D), prep["g1"][i], prep["be1"][i])
        h1 = jnp.maximum(mm(x.reshape(B * L, D), prep["w1"][i]) + prep["b1"][i], 0.0)
        ff = mm(h1, prep["w2"][i]) + prep["b2"][i]
        x = ln(x + ff.reshape(B, L, D), prep["g2"][i], prep["be2"][i])

    xs = x[:, :S, :].reshape(B * S, D)
    out = mm(xs, prep["w_ah"]) + prep["b_ah"]
    A = prep["action_dim"]
    return out[:, :A].reshape(B, S, A)


# --------------------------------------------------------------------------
if __name__ == "__main__":
    # module defaults: d_model=128, nhead=4, num_layers=4; TransformerEncoderLayer
    # default dim_feedforward=2048 (dropout = identity at inference).
    state_dim, action_dim, num_tasks = 16, 6, 5
    d_model, nhead, num_layers = 128, 4, 4
    dim_feedforward = 2048
    B, S = 2, 8

    key = jax.random.PRNGKey(0)
    kp, ks, kt = jax.random.split(key, 3)
    params = init_params(kp, state_dim, action_dim, num_tasks,
                         d_model, num_layers, dim_feedforward)
    prep = prepare_params(params, nhead)

    states = jax.random.normal(ks, (B, S, state_dim), jnp.float32)
    task_id = jax.random.randint(kt, (B,), 0, num_tasks)

    out = ad_transformer_forward(prep, states, task_id)
    out = jax.block_until_ready(out)
    assert out.shape == (B, S, action_dim), out.shape

    ref = reference_forward(prep, states, task_id)
    max_err = float(jnp.max(jnp.abs(out - ref)))
    assert max_err < 3e-3, f"mismatch vs reference: {max_err}"

    print("KERNEL_OK")
</pallas_src>

<mosaic_0001>
module attributes {stable_mosaic.version = 11 : i64} {
  func.func @_fused_kernel(%arg0: i32, %arg1: i32, %arg2: memref<1x16x16xf32, #tpu.memory_space<vmem>>, %arg3: memref<1x16x128xf32, #tpu.memory_space<vmem>>, %arg4: memref<16x128xbf16, #tpu.memory_space<vmem>>, %arg5: memref<1x128x384xbf16, #tpu.memory_space<vmem>>, %arg6: memref<1x1x384xf32, #tpu.memory_space<vmem>>, %arg7: memref<1x128x128xbf16, #tpu.memory_space<vmem>>, %arg8: memref<1x1x128xf32, #tpu.memory_space<vmem>>, %arg9: memref<1x1x128xf32, #tpu.memory_space<vmem>>, %arg10: memref<1x1x128xf32, #tpu.memory_space<vmem>>, %arg11: memref<1x128x2048xbf16, #tpu.memory_space<vmem>>, %arg12: memref<1x1x2048xf32, #tpu.memory_space<vmem>>, %arg13: memref<1x2048x128xbf16, #tpu.memory_space<vmem>>, %arg14: memref<1x1x128xf32, #tpu.memory_space<vmem>>, %arg15: memref<1x1x128xf32, #tpu.memory_space<vmem>>, %arg16: memref<1x1x128xf32, #tpu.memory_space<vmem>>, %arg17: memref<128x128xbf16, #tpu.memory_space<vmem>>, %arg18: memref<1x128xf32, #tpu.memory_space<vmem>>, %arg19: memref<1x8x128xf32, #tpu.memory_space<vmem>>, %arg20: memref<16x128xf32, #tpu.memory_space<vmem>>) attributes {dimension_semantics = [#tpu.dimension_semantics<parallel>, #tpu.dimension_semantics<arbitrary>], iteration_bounds = array<i64: 2, 4>, scalar_prefetch = 0 : i64, scratch_operands = 1 : i64, tpu.core_type = #tpu.core_type<tc>, window_params = [{transform_indices = @transform_0, window_bounds = array<i64: 1, 16, 16>}, {transform_indices = @transform_1, window_bounds = array<i64: 1, 16, 128>}, {pipeline_mode = #tpu.pipeline_mode<synchronous>, transform_indices = @transform_2, window_bounds = array<i64: 16, 128>}, {transform_indices = @transform_3, window_bounds = array<i64: 1, 128, 384>}, {transform_indices = @transform_4, window_bounds = array<i64: 1, 1, 384>}, {transform_indices = @transform_5, window_bounds = array<i64: 1, 128, 128>}, {transform_indices = @transform_6, window_bounds = array<i64: 1, 1, 128>}, {transform_indices = @transform_7, window_bounds = array<i64: 1, 1, 128>}, {transform_indices = @transform_8, window_bounds = array<i64: 1, 1, 128>}, {transform_indices = @transform_9, window_bounds = array<i64: 1, 128, 2048>}, {transform_indices = @transform_10, window_bounds = array<i64: 1, 1, 2048>}, {transform_indices = @transform_11, window_bounds = array<i64: 1, 2048, 128>}, {transform_indices = @transform_12, window_bounds = array<i64: 1, 1, 128>}, {transform_indices = @transform_13, window_bounds = array<i64: 1, 1, 128>}, {transform_indices = @transform_14, window_bounds = array<i64: 1, 1, 128>}, {pipeline_mode = #tpu.pipeline_mode<synchronous>, transform_indices = @transform_15, window_bounds = array<i64: 128, 128>}, {pipeline_mode = #tpu.pipeline_mode<synchronous>, transform_indices = @transform_16, window_bounds = array<i64: 1, 128>}, {transform_indices = @transform_17, window_bounds = array<i64: 1, 8, 128>}]} {
    %c0_i32 = arith.constant 0 : i32
    %0 = arith.cmpi eq, %arg1, %c0_i32 : i32
    %1 = arith.extui %0 : i1 to i32
    %c0_i32_0 = arith.constant 0 : i32
    %2 = arith.cmpi ne, %1, %c0_i32_0 : i32
    scf.if %2 {
      %c0_83 = arith.constant 0 : index
      %c0_84 = arith.constant 0 : index
      %c0_85 = arith.constant 0 : index
      %193 = vector.load %arg2[%c0_83, %c0_84, %c0_85] : memref<1x16x16xf32, #tpu.memory_space<vmem>>, vector<1x16x16xf32>
      %194 = vector.shape_cast %193 : vector<1x16x16xf32> to vector<16x16xf32>
      %195 = arith.truncf %194 : vector<16x16xf32> to vector<16x16xbf16>
      %c0_86 = arith.constant 0 : index
      %c0_87 = arith.constant 0 : index
      %196 = vector.load %arg4[%c0_86, %c0_87] : memref<16x128xbf16, #tpu.memory_space<vmem>>, vector<16x128xbf16>
      %cst_88 = arith.constant dense<0.000000e+00> : vector<16x128xf32>
      %197 = tpu.matmul %195, %196, %cst_88 {dimension_numbers = #tpu.dot_dimension_numbers<[1], [0], [0], [1], [0, 0, 1, 1], [], []>} : vector<16x16xbf16>, vector<16x128xbf16>, vector<16x128xf32> -> vector<16x128xf32>
      %c0_89 = arith.constant 0 : index
      %c0_90 = arith.constant 0 : index
      %c0_91 = arith.constant 0 : index
      %198 = vector.load %arg3[%c0_89, %c0_90, %c0_91] : memref<1x16x128xf32, #tpu.memory_space<vmem>>, vector<1x16x128xf32>
      %199 = vector.shape_cast %198 : vector<1x16x128xf32> to vector<16x128xf32>
      %200 = arith.addf %197, %199 : vector<16x128xf32>
      %c0_92 = arith.constant 0 : index
      %c0_93 = arith.constant 0 : index
      %201 = vector.load %arg20[%c0_92, %c0_93] : memref<16x128xf32, #tpu.memory_space<vmem>>, vector<16x128xf32>
      tpu.vector_store %arg20[%c0_92, %c0_93], %200 {strides = array<i32>} : memref<16x128xf32, #tpu.memory_space<vmem>>, vector<16x128xf32>,
    } else {
    }
    %c0 = arith.constant 0 : index
    %c0_1 = arith.constant 0 : index
    %3 = vector.load %arg20[%c0, %c0_1] : memref<16x128xf32, #tpu.memory_space<vmem>>, vector<16x128xf32>
    %4 = tpu.iota {dimensions = array<i32: 1>} : vector<1x16xi32>
    %c9_i32 = arith.constant 9 : i32
    %5 = vector.broadcast %c9_i32 : i32 to vector<1x16xi32>
    %6 = arith.cmpi slt, %4, %5 : vector<1x16xi32>
    %cst = arith.constant 0.000000e+00 : f32
    %cst_2 = arith.constant -1.000000e+30 : f32
    %7 = vector.broadcast %cst : f32 to vector<1x16xf32>
    %8 = vector.broadcast %cst_2 : f32 to vector<1x16xf32>
    %9 = arith.select %6, %7, %8 : vector<1x16xi1>, vector<1x16xf32>
    %10 = arith.truncf %3 : vector<16x128xf32> to vector<16x128xbf16>
    %c0_3 = arith.constant 0 : index
    %c0_4 = arith.constant 0 : index
    %c0_5 = arith.constant 0 : index
    %11 = vector.load %arg5[%c0_3, %c0_4, %c0_5] : memref<1x128x384xbf16, #tpu.memory_space<vmem>>, vector<1x128x384xbf16>
    %12 = vector.shape_cast %11 : vector<1x128x384xbf16> to vector<128x384xbf16>
    %cst_6 = arith.constant dense<0.000000e+00> : vector<16x384xf32>
    %13 = tpu.matmul %10, %12, %cst_6 {dimension_numbers = #tpu.dot_dimension_numbers<[1], [0], [0], [1], [0, 0, 1, 1], [], []>} : vector<16x128xbf16>, vector<128x384xbf16>, vector<16x384xf32> -> vector<16x384xf32>
    %c0_7 = arith.constant 0 : index
    %c0_8 = arith.constant 0 : index
    %c0_9 = arith.constant 0 : index
    %14 = vector.load %arg6[%c0_7, %c0_8, %c0_9] : memref<1x1x384xf32, #tpu.memory_space<vmem>>, vector<1x1x384xf32>
    %15 = vector.shape_cast %14 : vector<1x1x384xf32> to vector<1x384xf32>
    %16 = vector.broadcast %15 : vector<1x384xf32> to vector<16x384xf32>
    %17 = arith.addf %13, %16 : vector<16x384xf32>
    %18 = vector.extract_strided_slice %17 {offsets = [0, 0], sizes = [16, 128], strides = [1, 1]} : vector<16x384xf32> to vector<16x128xf32>
    %19 = arith.truncf %18 : vector<16x128xf32> to vector<16x128xbf16>
    %20 = vector.extract_strided_slice %17 {offsets = [0, 128], sizes = [16, 128], strides = [1, 1]} : vector<16x384xf32> to vector<16x128xf32>
    %21 = arith.truncf %20 : vector<16x128xf32> to vector<16x128xbf16>
    %22 = vector.extract_strided_slice %17 {offsets = [0, 256], sizes = [16, 128], strides = [1, 1]} : vector<16x384xf32> to vector<16x128xf32>
    %23 = arith.truncf %22 : vector<16x128xf32> to vector<16x128xbf16>
    %cst_10 = arith.constant 0.000000e+00 : f32
    %24 = vector.broadcast %cst_10 : f32 to vector<16x128xf32>
    %25 = vector.extract_strided_slice %19 {offsets = [0, 0], sizes = [16, 32], strides = [1, 1]} : vector<16x128xbf16> to vector<16x32xbf16>
    %26 = vector.extract_strided_slice %21 {offsets = [0, 0], sizes = [16, 32], strides = [1, 1]} : vector<16x128xbf16> to vector<16x32xbf16>
    %cst_11 = arith.constant dense<0.000000e+00> : vector<16x16xf32>
    %27 = tpu.matmul %25, %26, %cst_11 {dimension_numbers = #tpu.dot_dimension_numbers<[1], [1], [0], [0], [0, 0, 1, 0], [], []>} : vector<16x32xbf16>, vector<16x32xbf16>, vector<16x16xf32> -> vector<16x16xf32>
    %28 = vector.broadcast %9 : vector<1x16xf32> to vector<16x16xf32>
    %29 = arith.addf %27, %28 : vector<16x16xf32>
    %cst_12 = arith.constant dense<0xFF800000> : vector<16xf32>
    %30 = vector.multi_reduction <maximumf>, %29, %cst_12 [1] : vector<16x16xf32> to vector<16xf32>
    %31 = vector.shape_cast %30 : vector<16xf32> to vector<16x1xf32>
    %32 = vector.broadcast %31 : vector<16x1xf32> to vector<16x16xf32>
    %33 = arith.subf %29, %32 : vector<16x16xf32>
    %34 = math.exp %33 : vector<16x16xf32>
    %cst_13 = arith.constant dense<0.000000e+00> : vector<16xf32>
    %35 = vector.multi_reduction <add>, %34, %cst_13 [1] : vector<16x16xf32> to vector<16xf32>
    %36 = vector.shape_cast %35 : vector<16xf32> to vector<16x1xf32>
    %37 = arith.truncf %34 : vector<16x16xf32> to vector<16x16xbf16>
    %38 = vector.extract_strided_slice %23 {offsets = [0, 0], sizes = [16, 32], strides = [1, 1]} : vector<16x128xbf16> to vector<16x32xbf16>
    %cst_14 = arith.constant dense<0.000000e+00> : vector<16x32xf32>
    %39 = tpu.matmul %37, %38, %cst_14 {dimension_numbers = #tpu.dot_dimension_numbers<[1], [0], [0], [1], [0, 0, 1, 1], [], []>} : vector<16x16xbf16>, vector<16x32xbf16>, vector<16x32xf32> -> vector<16x32xf32>
    %40 = vector.broadcast %36 : vector<16x1xf32> to vector<16x32xf32>
    %41 = arith.divf %39, %40 : vector<16x32xf32>
    %42 = arith.truncf %41 : vector<16x32xf32> to vector<16x32xbf16>
    %c0_15 = arith.constant 0 : index
    %c0_16 = arith.constant 0 : index
    %c0_17 = arith.constant 0 : index
    %43 = vector.load %arg7[%c0_15, %c0_16, %c0_17] : memref<1x128x128xbf16, #tpu.memory_space<vmem>>, vector<1x32x128xbf16>
    %44 = vector.shape_cast %43 : vector<1x32x128xbf16> to vector<32x128xbf16>
    %cst_18 = arith.constant dense<0.000000e+00> : vector<16x128xf32>
    %45 = tpu.matmul %42, %44, %cst_18 {dimension_numbers = #tpu.dot_dimension_numbers<[1], [0], [0], [1], [0, 0, 1, 1], [], []>} : vector<16x32xbf16>, vector<32x128xbf16>, vector<16x128xf32> -> vector<16x128xf32>
    %46 = arith.addf %24, %45 : vector<16x128xf32>
    %47 = vector.extract_strided_slice %19 {offsets = [0, 32], sizes = [16, 32], strides = [1, 1]} : vector<16x128xbf16> to vector<16x32xbf16>
    %48 = vector.extract_strided_slice %21 {offsets = [0, 32], sizes = [16, 32], strides = [1, 1]} : vector<16x128xbf16> to vector<16x32xbf16>
    %cst_19 = arith.constant dense<0.000000e+00> : vector<16x16xf32>
    %49 = tpu.matmul %47, %48, %cst_19 {dimension_numbers = #tpu.dot_dimension_numbers<[1], [1], [0], [0], [0, 0, 1, 0], [], []>} : vector<16x32xbf16>, vector<16x32xbf16>, vector<16x16xf32> -> vector<16x16xf32>
    %50 = vector.broadcast %9 : vector<1x16xf32> to vector<16x16xf32>
    %51 = arith.addf %49, %50 : vector<16x16xf32>
    %cst_20 = arith.constant dense<0xFF800000> : vector<16xf32>
    %52 = vector.multi_reduction <maximumf>, %51, %cst_20 [1] : vector<16x16xf32> to vector<16xf32>
    %53 = vector.shape_cast %52 : vector<16xf32> to vector<16x1xf32>
    %54 = vector.broadcast %53 : vector<16x1xf32> to vector<16x16xf32>
    %55 = arith.subf %51, %54 : vector<16x16xf32>
    %56 = math.exp %55 : vector<16x16xf32>
    %cst_21 = arith.constant dense<0.000000e+00> : vector<16xf32>
    %57 = vector.multi_reduction <add>, %56, %cst_21 [1] : vector<16x16xf32> to vector<16xf32>
    %58 = vector.shape_cast %57 : vector<16xf32> to vector<16x1xf32>
    %59 = arith.truncf %56 : vector<16x16xf32> to vector<16x16xbf16>
    %60 = vector.extract_strided_slice %23 {offsets = [0, 32], sizes = [16, 32], strides = [1, 1]} : vector<16x128xbf16> to vector<16x32xbf16>
    %cst_22 = arith.constant dense<0.000000e+00> : vector<16x32xf32>
    %61 = tpu.matmul %59, %60, %cst_22 {dimension_numbers = #tpu.dot_dimension_numbers<[1], [0], [0], [1], [0, 0, 1, 1], [], []>} : vector<16x16xbf16>, vector<16x32xbf16>, vector<16x32xf32> -> vector<16x32xf32>
    %62 = vector.broadcast %58 : vector<16x1xf32> to vector<16x32xf32>
    %63 = arith.divf %61, %62 : vector<16x32xf32>
    %64 = arith.truncf %63 : vector<16x32xf32> to vector<16x32xbf16>
    %c0_23 = arith.constant 0 : index
    %c32 = arith.constant 32 : index
    %c0_24 = arith.constant 0 : index
    %65 = vector.load %arg7[%c0_23, %c32, %c0_24] : memref<1x128x128xbf16, #tpu.memory_space<vmem>>, vector<1x32x128xbf16>
    %66 = vector.shape_cast %65 : vector<1x32x128xbf16> to vector<32x128xbf16>
    %cst_25 = arith.constant dense<0.000000e+00> : vector<16x128xf32>
    %67 = tpu.matmul %64, %66, %cst_25 {dimension_numbers = #tpu.dot_dimension_numbers<[1], [0], [0], [1], [0, 0, 1, 1], [], []>} : vector<16x32xbf16>, vector<32x128xbf16>, vector<16x128xf32> -> vector<16x128xf32>
    %68 = arith.addf %46, %67 : vector<16x128xf32>
    %69 = vector.extract_strided_slice %19 {offsets = [0, 64], sizes = [16, 32], strides = [1, 1]} : vector<16x128xbf16> to vector<16x32xbf16>
    %70 = vector.extract_strided_slice %21 {offsets = [0, 64], sizes = [16, 32], strides = [1, 1]} : vector<16x128xbf16> to vector<16x32xbf16>
    %cst_26 = arith.constant dense<0.000000e+00> : vector<16x16xf32>
    %71 = tpu.matmul %69, %70, %cst_26 {dimension_numbers = #tpu.dot_dimension_numbers<[1], [1], [0], [0], [0, 0, 1, 0], [], []>} : vector<16x32xbf16>, vector<16x32xbf16>, vector<16x16xf32> -> vector<16x16xf32>
    %72 = vector.broadcast %9 : vector<1x16xf32> to vector<16x16xf32>
    %73 = arith.addf %71, %72 : vector<16x16xf32>
    %cst_27 = arith.constant dense<0xFF800000> : vector<16xf32>
    %74 = vector.multi_reduction <maximumf>, %73, %cst_27 [1] : vector<16x16xf32> to vector<16xf32>
    %75 = vector.shape_cast %74 : vector<16xf32> to vector<16x1xf32>
    %76 = vector.broadcast %75 : vector<16x1xf32> to vector<16x16xf32>
    %77 = arith.subf %73, %76 : vector<16x16xf32>
    %78 = math.exp %77 : vector<16x16xf32>
    %cst_28 = arith.constant dense<0.000000e+00> : vector<16xf32>
    %79 = vector.multi_reduction <add>, %78, %cst_28 [1] : vector<16x16xf32> to vector<16xf32>
    %80 = vector.shape_cast %79 : vector<16xf32> to vector<16x1xf32>
    %81 = arith.truncf %78 : vector<16x16xf32> to vector<16x16xbf16>
    %82 = vector.extract_strided_slice %23 {offsets = [0, 64], sizes = [16, 32], strides = [1, 1]} : vector<16x128xbf16> to vector<16x32xbf16>
    %cst_29 = arith.constant dense<0.000000e+00> : vector<16x32xf32>
    %83 = tpu.matmul %81, %82, %cst_29 {dimension_numbers = #tpu.dot_dimension_numbers<[1], [0], [0], [1], [0, 0, 1, 1], [], []>} : vector<16x16xbf16>, vector<16x32xbf16>, vector<16x32xf32> -> vector<16x32xf32>
    %84 = vector.broadcast %80 : vector<16x1xf32> to vector<16x32xf32>
    %85 = arith.divf %83, %84 : vector<16x32xf32>
    %86 = arith.truncf %85 : vector<16x32xf32> to vector<16x32xbf16>
    %c0_30 = arith.constant 0 : index
    %c64 = arith.constant 64 : index
    %c0_31 = arith.constant 0 : index
    %87 = vector.load %arg7[%c0_30, %c64, %c0_31] : memref<1x128x128xbf16, #tpu.memory_space<vmem>>, vector<1x32x128xbf16>
    %88 = vector.shape_cast %87 : vector<1x32x128xbf16> to vector<32x128xbf16>
    %cst_32 = arith.constant dense<0.000000e+00> : vector<16x128xf32>
    %89 = tpu.matmul %86, %88, %cst_32 {dimension_numbers = #tpu.dot_dimension_numbers<[1], [0], [0], [1], [0, 0, 1, 1], [], []>} : vector<16x32xbf16>, vector<32x128xbf16>, vector<16x128xf32> -> vector<16x128xf32>
    %90 = arith.addf %68, %89 : vector<16x128xf32>
    %91 = vector.extract_strided_slice %19 {offsets = [0, 96], sizes = [16, 32], strides = [1, 1]} : vector<16x128xbf16> to vector<16x32xbf16>
    %92 = vector.extract_strided_slice %21 {offsets = [0, 96], sizes = [16, 32], strides = [1, 1]} : vector<16x128xbf16> to vector<16x32xbf16>
    %cst_33 = arith.constant dense<0.000000e+00> : vector<16x16xf32>
    %93 = tpu.matmul %91, %92, %cst_33 {dimension_numbers = #tpu.dot_dimension_numbers<[1], [1], [0], [0], [0, 0, 1, 0], [], []>} : vector<16x32xbf16>, vector<16x32xbf16>, vector<16x16xf32> -> vector<16x16xf32>
    %94 = vector.broadcast %9 : vector<1x16xf32> to vector<16x16xf32>
    %95 = arith.addf %93, %94 : vector<16x16xf32>
    %cst_34 = arith.constant dense<0xFF800000> : vector<16xf32>
    %96 = vector.multi_reduction <maximumf>, %95, %cst_34 [1] : vector<16x16xf32> to vector<16xf32>
    %97 = vector.shape_cast %96 : vector<16xf32> to vector<16x1xf32>
    %98 = vector.broadcast %97 : vector<16x1xf32> to vector<16x16xf32>
    %99 = arith.subf %95, %98 : vector<16x16xf32>
    %100 = math.exp %99 : vector<16x16xf32>
    %cst_35 = arith.constant dense<0.000000e+00> : vector<16xf32>
    %101 = vector.multi_reduction <add>, %100, %cst_35 [1] : vector<16x16xf32> to vector<16xf32>
    %102 = vector.shape_cast %101 : vector<16xf32> to vector<16x1xf32>
    %103 = arith.truncf %100 : vector<16x16xf32> to vector<16x16xbf16>
    %104 = vector.extract_strided_slice %23 {offsets = [0, 96], sizes = [16, 32], strides = [1, 1]} : vector<16x128xbf16> to vector<16x32xbf16>
    %cst_36 = arith.constant dense<0.000000e+00> : vector<16x32xf32>
    %105 = tpu.matmul %103, %104, %cst_36 {dimension_numbers = #tpu.dot_dimension_numbers<[1], [0], [0], [1], [0, 0, 1, 1], [], []>} : vector<16x16xbf16>, vector<16x32xbf16>, vector<16x32xf32> -> vector<16x32xf32>
    %106 = vector.broadcast %102 : vector<16x1xf32> to vector<16x32xf32>
    %107 = arith.divf %105, %106 : vector<16x32xf32>
    %108 = arith.truncf %107 : vector<16x32xf32> to vector<16x32xbf16>
    %c0_37 = arith.constant 0 : index
    %c96 = arith.constant 96 : index
    %c0_38 = arith.constant 0 : index
    %109 = vector.load %arg7[%c0_37, %c96, %c0_38] : memref<1x128x128xbf16, #tpu.memory_space<vmem>>, vector<1x32x128xbf16>
    %110 = vector.shape_cast %109 : vector<1x32x128xbf16> to vector<32x128xbf16>
    %cst_39 = arith.constant dense<0.000000e+00> : vector<16x128xf32>
    %111 = tpu.matmul %108, %110, %cst_39 {dimension_numbers = #tpu.dot_dimension_numbers<[1], [0], [0], [1], [0, 0, 1, 1], [], []>} : vector<16x32xbf16>, vector<32x128xbf16>, vector<16x128xf32> -> vector<16x128xf32>
    %112 = arith.addf %90, %111 : vector<16x128xf32>
    %c0_40 = arith.constant 0 : index
    %c0_41 = arith.constant 0 : index
    %c0_42 = arith.constant 0 : index
    %113 = vector.load %arg8[%c0_40, %c0_41, %c0_42] : memref<1x1x128xf32, #tpu.memory_space<vmem>>, vector<1x1x128xf32>
    %114 = vector.shape_cast %113 : vector<1x1x128xf32> to vector<1x128xf32>
    %115 = vector.broadcast %114 : vector<1x128xf32> to vector<16x128xf32>
    %116 = arith.addf %112, %115 : vector<16x128xf32>
    %117 = arith.addf %3, %116 : vector<16x128xf32>
    %c0_43 = arith.constant 0 : index
    %c0_44 = arith.constant 0 : index
    %c0_45 = arith.constant 0 : index
    %118 = vector.load %arg9[%c0_43, %c0_44, %c0_45] : memref<1x1x128xf32, #tpu.memory_space<vmem>>, vector<1x1x128xf32>
    %119 = vector.shape_cast %118 : vector<1x1x128xf32> to vector<1x128xf32>
    %c0_46 = arith.constant 0 : index
    %c0_47 = arith.constant 0 : index
    %c0_48 = arith.constant 0 : index
    %120 = vector.load %arg10[%c0_46, %c0_47, %c0_48] : memref<1x1x128xf32, #tpu.memory_space<vmem>>, vector<1x1x128xf32>
    %121 = vector.shape_cast %120 : vector<1x1x128xf32> to vector<1x128xf32>
    %cst_49 = arith.constant dense<0.000000e+00> : vector<16xf32>
    %122 = vector.multi_reduction <add>, %117, %cst_49 [1] : vector<16x128xf32> to vector<16xf32>
    %123 = vector.shape_cast %122 : vector<16xf32> to vector<16x1xf32>
    %cst_50 = arith.constant 1.280000e+02 : f32
    %124 = vector.broadcast %cst_50 : f32 to vector<16x1xf32>
    %125 = arith.divf %123, %124 : vector<16x1xf32>
    %126 = vector.broadcast %125 : vector<16x1xf32> to vector<16x128xf32>
    %127 = arith.subf %117, %126 : vector<16x128xf32>
    %128 = arith.mulf %127, %127 : vector<16x128xf32>
    %cst_51 = arith.constant dense<0.000000e+00> : vector<16xf32>
    %129 = vector.multi_reduction <add>, %128, %cst_51 [1] : vector<16x128xf32> to vector<16xf32>
    %130 = vector.shape_cast %129 : vector<16xf32> to vector<16x1xf32>
    %cst_52 = arith.constant 1.280000e+02 : f32
    %131 = vector.broadcast %cst_52 : f32 to vector<16x1xf32>
    %132 = arith.divf %130, %131 : vector<16x1xf32>
    %133 = vector.broadcast %125 : vector<16x1xf32> to vector<16x128xf32>
    %134 = arith.subf %117, %133 : vector<16x128xf32>
    %cst_53 = arith.constant 9.99999974E-6 : f32
    %135 = vector.broadcast %cst_53 : f32 to vector<16x1xf32>
    %136 = arith.addf %132, %135 : vector<16x1xf32>
    %137 = math.rsqrt %136 : vector<16x1xf32>
    %138 = vector.broadcast %137 : vector<16x1xf32> to vector<16x128xf32>
    %139 = arith.mulf %134, %138 : vector<16x128xf32>
    %140 = vector.broadcast %119 : vector<1x128xf32> to vector<16x128xf32>
    %141 = arith.mulf %139, %140 : vector<16x128xf32>
    %142 = vector.broadcast %121 : vector<1x128xf32> to vector<16x128xf32>
    %143 = arith.addf %141, %142 : vector<16x128xf32>
    %144 = arith.truncf %143 : vector<16x128xf32> to vector<16x128xbf16>
    %c0_54 = arith.constant 0 : index
    %c0_55 = arith.constant 0 : index
    %c0_56 = arith.constant 0 : index
    %145 = vector.load %arg11[%c0_54, %c0_55, %c0_56] : memref<1x128x2048xbf16, #tpu.memory_space<vmem>>, vector<1x128x2048xbf16>
    %146 = vector.shape_cast %145 : vector<1x128x2048xbf16> to vector<128x2048xbf16>
    %cst_57 = arith.constant dense<0.000000e+00> : vector<16x2048xf32>
    %147 = tpu.matmul %144, %146, %cst_57 {dimension_numbers = #tpu.dot_dimension_numbers<[1], [0], [0], [1], [0, 0, 1, 1], [], []>} : vector<16x128xbf16>, vector<128x2048xbf16>, vector<16x2048xf32> -> vector<16x2048xf32>
    %c0_58 = arith.constant 0 : index
    %c0_59 = arith.constant 0 : index
    %c0_60 = arith.constant 0 : index
    %148 = vector.load %arg12[%c0_58, %c0_59, %c0_60] : memref<1x1x2048xf32, #tpu.memory_space<vmem>>, vector<1x1x2048xf32>
    %149 = vector.shape_cast %148 : vector<1x1x2048xf32> to vector<1x2048xf32>
    %150 = vector.broadcast %149 : vector<1x2048xf32> to vector<16x2048xf32>
    %151 = arith.addf %147, %150 : vector<16x2048xf32>
    %cst_61 = arith.constant 0.000000e+00 : f32
    %152 = vector.broadcast %cst_61 : f32 to vector<16x2048xf32>
    %153 = arith.maximumf %151, %152 : vector<16x2048xf32>
    %154 = arith.truncf %153 : vector<16x2048xf32> to vector<16x2048xbf16>
    %c0_62 = arith.constant 0 : index
    %c0_63 = arith.constant 0 : index
    %c0_64 = arith.constant 0 : index
    %155 = vector.load %arg13[%c0_62, %c0_63, %c0_64] : memref<1x2048x128xbf16, #tpu.memory_space<vmem>>, vector<1x2048x128xbf16>
    %156 = vector.shape_cast %155 : vector<1x2048x128xbf16> to vector<2048x128xbf16>
    %cst_65 = arith.constant dense<0.000000e+00> : vector<16x128xf32>
    %157 = tpu.matmul %154, %156, %cst_65 {dimension_numbers = #tpu.dot_dimension_numbers<[1], [0], [0], [1], [0, 0, 1, 1], [], []>} : vector<16x2048xbf16>, vector<2048x128xbf16>, vector<16x128xf32> -> vector<16x128xf32>
    %c0_66 = arith.constant 0 : index
    %c0_67 = arith.constant 0 : index
    %c0_68 = arith.constant 0 : index
    %158 = vector.load %arg14[%c0_66, %c0_67, %c0_68] : memref<1x1x128xf32, #tpu.memory_space<vmem>>, vector<1x1x128xf32>
    %159 = vector.shape_cast %158 : vector<1x1x128xf32> to vector<1x128xf32>
    %160 = vector.broadcast %159 : vector<1x128xf32> to vector<16x128xf32>
    %161 = arith.addf %157, %160 : vector<16x128xf32>
    %162 = arith.addf %143, %161 : vector<16x128xf32>
    %c0_69 = arith.constant 0 : index
    %c0_70 = arith.constant 0 : index
    %c0_71 = arith.constant 0 : index
    %163 = vector.load %arg15[%c0_69, %c0_70, %c0_71] : memref<1x1x128xf32, #tpu.memory_space<vmem>>, vector<1x1x128xf32>
    %164 = vector.shape_cast %163 : vector<1x1x128xf32> to vector<1x128xf32>
    %c0_72 = arith.constant 0 : index
    %c0_73 = arith.constant 0 : index
    %c0_74 = arith.constant 0 : index
    %165 = vector.load %arg16[%c0_72, %c0_73, %c0_74] : memref<1x1x128xf32, #tpu.memory_space<vmem>>, vector<1x1x128xf32>
    %166 = vector.shape_cast %165 : vector<1x1x128xf32> to vector<1x128xf32>
    %cst_75 = arith.constant dense<0.000000e+00> : vector<16xf32>
    %167 = vector.multi_reduction <add>, %162, %cst_75 [1] : vector<16x128xf32> to vector<16xf32>
    %168 = vector.shape_cast %167 : vector<16xf32> to vector<16x1xf32>
    %cst_76 = arith.constant 1.280000e+02 : f32
    %169 = vector.broadcast %cst_76 : f32 to vector<16x1xf32>
    %170 = arith.divf %168, %169 : vector<16x1xf32>
    %171 = vector.broadcast %170 : vector<16x1xf32> to vector<16x128xf32>
    %172 = arith.subf %162, %171 : vector<16x128xf32>
    %173 = arith.mulf %172, %172 : vector<16x128xf32>
    %cst_77 = arith.constant dense<0.000000e+00> : vector<16xf32>
    %174 = vector.multi_reduction <add>, %173, %cst_77 [1] : vector<16x128xf32> to vector<16xf32>
    %175 = vector.shape_cast %174 : vector<16xf32> to vector<16x1xf32>
    %cst_78 = arith.constant 1.280000e+02 : f32
    %176 = vector.broadcast %cst_78 : f32 to vector<16x1xf32>
    %177 = arith.divf %175, %176 : vector<16x1xf32>
    %178 = vector.broadcast %170 : vector<16x1xf32> to vector<16x128xf32>
    %179 = arith.subf %162, %178 : vector<16x128xf32>
    %cst_79 = arith.constant 9.99999974E-6 : f32
    %180 = vector.broadcast %cst_79 : f32 to vector<16x1xf32>
    %181 = arith.addf %177, %180 : vector<16x1xf32>
    %182 = math.rsqrt %181 : vector<16x1xf32>
    %183 = vector.broadcast %182 : vector<16x1xf32> to vector<16x128xf32>
    %184 = arith.mulf %179, %183 : vector<16x128xf32>
    %185 = vector.broadcast %164 : vector<1x128xf32> to vector<16x128xf32>
    %186 = arith.mulf %184, %185 : vector<16x128xf32>
    %187 = vector.broadcast %166 : vector<1x128xf32> to vector<16x128xf32>
    %188 = arith.addf %186, %187 : vector<16x128xf32>
    %c0_80 = arith.constant 0 : index
    %c0_81 = arith.constant 0 : index
    %189 = vector.load %arg20[%c0_80, %c0_81] : memref<16x128xf32, #tpu.memory_space<vmem>>, vector<16x128xf32>
    tpu.vector_store %arg20[%c0_80, %c0_81], %188 {strides = array<i32>} : memref<16x128xf32, #tpu.memory_space<vmem>>, vector<16x128xf32>,
    %c3_i32 = arith.constant 3 : i32
    %190 = arith.cmpi eq, %arg1, %c3_i32 : i32
    %191 = arith.extui %190 : i1 to i32
    %c0_i32_82 = arith.constant 0 : i32
    %192 = arith.cmpi ne, %191, %c0_i32_82 : i32
    scf.if %192 {
      %193 = vector.extract_strided_slice %188 {offsets = [0, 0], sizes = [8, 128], strides = [1, 1]} : vector<16x128xf32> to vector<8x128xf32>
      %194 = arith.truncf %193 : vector<8x128xf32> to vector<8x128xbf16>
      %c0_83 = arith.constant 0 : index
      %c0_84 = arith.constant 0 : index
      %195 = vector.load %arg17[%c0_83, %c0_84] : memref<128x128xbf16, #tpu.memory_space<vmem>>, vector<128x128xbf16>
      %cst_85 = arith.constant dense<0.000000e+00> : vector<8x128xf32>
      %196 = tpu.matmul %194, %195, %cst_85 {dimension_numbers = #tpu.dot_dimension_numbers<[1], [0], [0], [1], [0, 0, 1, 1], [], []>} : vector<8x128xbf16>, vector<128x128xbf16>, vector<8x128xf32> -> vector<8x128xf32>
      %c0_86 = arith.constant 0 : index
      %c0_87 = arith.constant 0 : index
      %197 = vector.load %arg18[%c0_86, %c0_87] : memref<1x128xf32, #tpu.memory_space<vmem>>, vector<1x128xf32>
      %198 = vector.broadcast %197 : vector<1x128xf32> to vector<8x128xf32>
      %199 = arith.addf %196, %198 : vector<8x128xf32>
      %c0_88 = arith.constant 0 : index
      %c0_89 = arith.constant 0 : index
      %c0_90 = arith.constant 0 : index
      %200 = vector.load %arg19[%c0_88, %c0_89, %c0_90] : memref<1x8x128xf32, #tpu.memory_space<vmem>>, vector<1x8x128xf32>
      %201 = vector.shape_cast %200 : vector<1x8x128xf32> to vector<8x128xf32>
      %202 = vector.shape_cast %199 : vector<8x128xf32> to vector<1x8x128xf32>
      tpu.vector_store %arg19[%c0_88, %c0_89, %c0_90], %202 {strides = array<i32>} : memref<1x8x128xf32, #tpu.memory_space<vmem>>, vector<1x8x128xf32>,
    } else {
    }
    return
  }
  func.func @transform_0(%arg0: i32, %arg1: i32) -> (i32, i32, i32) {
    %c0_i32 = arith.constant 0 : i32
    %c0_i32_0 = arith.constant 0 : i32
    %c0_i32_1 = arith.constant 0 : i32
    return %arg0, %c0_i32, %c0_i32_0 : i32, i32, i32
  }
  func.func @transform_1(%arg0: i32, %arg1: i32) -> (i32, i32, i32) {
    %c0_i32 = arith.constant 0 : i32
    %c0_i32_0 = arith.constant 0 : i32
    %c0_i32_1 = arith.constant 0 : i32
    return %arg0, %c0_i32, %c0_i32_0 : i32, i32, i32
  }
  func.func @transform_2(%arg0: i32, %arg1: i32) -> (i32, i32) {
    %c0_i32 = arith.constant 0 : i32
    %c0_i32_0 = arith.constant 0 : i32
    %c0_i32_1 = arith.constant 0 : i32
    return %c0_i32, %c0_i32_0 : i32, i32
  }
  func.func @transform_3(%arg0: i32, %arg1: i32) -> (i32, i32, i32) {
    %c0_i32 = arith.constant 0 : i32
    %c0_i32_0 = arith.constant 0 : i32
    %c0_i32_1 = arith.constant 0 : i32
    return %arg1, %c0_i32, %c0_i32_0 : i32, i32, i32
  }
  func.func @transform_4(%arg0: i32, %arg1: i32) -> (i32, i32, i32) {
    %c0_i32 = arith.constant 0 : i32
    %c0_i32_0 = arith.constant 0 : i32
    %c0_i32_1 = arith.constant 0 : i32
    return %arg1, %c0_i32, %c0_i32_0 : i32, i32, i32
  }
  func.func @transform_5(%arg0: i32, %arg1: i32) -> (i32, i32, i32) {
    %c0_i32 = arith.constant 0 : i32
    %c0_i32_0 = arith.constant 0 : i32
    %c0_i32_1 = arith.constant 0 : i32
    return %arg1, %c0_i32, %c0_i32_0 : i32, i32, i32
  }
  func.func @transform_6(%arg0: i32, %arg1: i32) -> (i32, i32, i32) {
    %c0_i32 = arith.constant 0 : i32
    %c0_i32_0 = arith.constant 0 : i32
    %c0_i32_1 = arith.constant 0 : i32
    return %arg1, %c0_i32, %c0_i32_0 : i32, i32, i32
  }
  func.func @transform_7(%arg0: i32, %arg1: i32) -> (i32, i32, i32) {
    %c0_i32 = arith.constant 0 : i32
    %c0_i32_0 = arith.constant 0 : i32
    %c0_i32_1 = arith.constant 0 : i32
    return %arg1, %c0_i32, %c0_i32_0 : i32, i32, i32
  }
  func.func @transform_8(%arg0: i32, %arg1: i32) -> (i32, i32, i32) {
    %c0_i32 = arith.constant 0 : i32
    %c0_i32_0 = arith.constant 0 : i32
    %c0_i32_1 = arith.constant 0 : i32
    return %arg1, %c0_i32, %c0_i32_0 : i32, i32, i32
  }
  func.func @transform_9(%arg0: i32, %arg1: i32) -> (i32, i32, i32) {
    %c0_i32 = arith.constant 0 : i32
    %c0_i32_0 = arith.constant 0 : i32
    %c0_i32_1 = arith.constant 0 : i32
    return %arg1, %c0_i32, %c0_i32_0 : i32, i32, i32
  }
  func.func @transform_10(%arg0: i32, %arg1: i32) -> (i32, i32, i32) {
    %c0_i32 = arith.constant 0 : i32
    %c0_i32_0 = arith.constant 0 : i32
    %c0_i32_1 = arith.constant 0 : i32
    return %arg1, %c0_i32, %c0_i32_0 : i32, i32, i32
  }
  func.func @transform_11(%arg0: i32, %arg1: i32) -> (i32, i32, i32) {
    %c0_i32 = arith.constant 0 : i32
    %c0_i32_0 = arith.constant 0 : i32
    %c0_i32_1 = arith.constant 0 : i32
    return %arg1, %c0_i32, %c0_i32_0 : i32, i32, i32
  }
  func.func @transform_12(%arg0: i32, %arg1: i32) -> (i32, i32, i32) {
    %c0_i32 = arith.constant 0 : i32
    %c0_i32_0 = arith.constant 0 : i32
    %c0_i32_1 = arith.constant 0 : i32
    return %arg1, %c0_i32, %c0_i32_0 : i32, i32, i32
  }
  func.func @transform_13(%arg0: i32, %arg1: i32) -> (i32, i32, i32) {
    %c0_i32 = arith.constant 0 : i32
    %c0_i32_0 = arith.constant 0 : i32
    %c0_i32_1 = arith.constant 0 : i32
    return %arg1, %c0_i32, %c0_i32_0 : i32, i32, i32
  }
  func.func @transform_14(%arg0: i32, %arg1: i32) -> (i32, i32, i32) {
    %c0_i32 = arith.constant 0 : i32
    %c0_i32_0 = arith.constant 0 : i32
    %c0_i32_1 = arith.constant 0 : i32
    return %arg1, %c0_i32, %c0_i32_0 : i32, i32, i32
  }
  func.func @transform_15(%arg0: i32, %arg1: i32) -> (i32, i32) {
    %c0_i32 = arith.constant 0 : i32
    %c0_i32_0 = arith.constant 0 : i32
    %c0_i32_1 = arith.constant 0 : i32
    return %c0_i32, %c0_i32_0 : i32, i32
  }
  func.func @transform_16(%arg0: i32, %arg1: i32) -> (i32, i32) {
    %c0_i32 = arith.constant 0 : i32
    %c0_i32_0 = arith.constant 0 : i32
    %c0_i32_1 = arith.constant 0 : i32
    return %c0_i32, %c0_i32_0 : i32, i32
  }
  func.func @transform_17(%arg0: i32, %arg1: i32) -> (i32, i32, i32) {
    %c0_i32 = arith.constant 0 : i32
    %c0_i32_0 = arith.constant 0 : i32
    %c0_i32_1 = arith.constant 0 : i32
    return %arg0, %c0_i32, %c0_i32_0 : i32, i32, i32
  }
}

</mosaic_0001>

<llo_original>
// kernel: tpu_custom_call.1
$region0: #{tpu_custom_call.1}
  #allocation0 [shape = 'u32[]', space=smem, size = 0x4, offset = 0x4, fixed_abs, tag = 'smem constant byte address 0x4 - core index']
  #allocation1 [shape = 'u32[144,128]{1,0:T(1,128)}', space=vmem, size = 0x12000, scoped, tag = 'internal scratch']
  #allocation2 [shape = 'f32[16,128]{1,0:T(8,128)}', space=vmem, size = 0x2000, scoped, tag = 'scratch operand']
  %s0 = inlined_call_operand.hbm [shape: f32[2,16,16], index: 0, kind: input, shape index: {}]
  %s1 = inlined_call_operand.hbm [shape: f32[2,16,128], index: 1, kind: input, shape index: {}]
  %s2 = inlined_call_operand.hbm [shape: bf16[16,128], index: 2, kind: input, shape index: {}]
  %s3 = inlined_call_operand.hbm [shape: bf16[4,128,384], index: 3, kind: input, shape index: {}]
  %s4 = inlined_call_operand.hbm [shape: f32[4,1,384], index: 4, kind: input, shape index: {}]
  %s5 = inlined_call_operand.hbm [shape: bf16[4,128,128], index: 5, kind: input, shape index: {}]
  %s6 = inlined_call_operand.hbm [shape: f32[4,1,128], index: 6, kind: input, shape index: {}]
  %s7 = inlined_call_operand.hbm [shape: f32[4,1,128], index: 7, kind: input, shape index: {}]
  %s8 = inlined_call_operand.hbm [shape: f32[4,1,128], index: 8, kind: input, shape index: {}]
  %s9 = inlined_call_operand.hbm [shape: bf16[4,128,2048], index: 9, kind: input, shape index: {}]
  %s10 = inlined_call_operand.hbm [shape: f32[4,1,2048], index: 10, kind: input, shape index: {}]
  %s11 = inlined_call_operand.hbm [shape: bf16[4,2048,128], index: 11, kind: input, shape index: {}]
  %s12 = inlined_call_operand.hbm [shape: f32[4,1,128], index: 12, kind: input, shape index: {}]
  %s13 = inlined_call_operand.hbm [shape: f32[4,1,128], index: 13, kind: input, shape index: {}]
  %s14 = inlined_call_operand.hbm [shape: f32[4,1,128], index: 14, kind: input, shape index: {}]
  %s15 = inlined_call_operand.hbm [shape: bf16[128,128], index: 15, kind: input, shape index: {}]
  %s16 = inlined_call_operand.hbm [shape: f32[1,128], index: 16, kind: input, shape index: {}]
  %s17 = inlined_call_operand.hbm [shape: f32[2,8,128], index: 17, kind: output, shape index: {}]
  %s18 = sld [smem:[#allocation0]]
  $region177: #{tpu_custom_call.1} parent=0
    _
  %s20 = ssub.s32 1, %s18
  %s21 = scalar_select 0, %s20, %s18
  $region1: #{tpu_custom_call.1} parent=0
    #allocation3 [shape = 'u8[16384]{0}', space=vmem, size = 0x4000, scoped, tag = 'input window, operand 0']
    #allocation4 [shape = 's32[2]{0}', space=sflag, size = 0x8, scoped, tag = 'scoped memory for tpu_custom_call.1']
    #allocation5 [shape = 's32[2]{0}', space=sflag, size = 0x8, scoped, tag = 'scoped memory for tpu_custom_call.1']
    #allocation6 [shape = 'u8[16384]{0}', space=vmem, size = 0x4000, scoped, tag = 'input window, operand 1']
    #allocation7 [shape = 's32[2]{0}', space=sflag, size = 0x8, scoped, tag = 'scoped memory for tpu_custom_call.1']
    #allocation8 [shape = 'u8[4096]{0}', space=vmem, size = 0x1000, scoped, tag = 'input window, operand 2, single buffered']
    #allocation9 [shape = 'u8[196608]{0}', space=vmem, size = 0x30000, scoped, tag = 'input window, operand 3']
    #allocation10 [shape = 's32[2]{0}', space=sflag, size = 0x8, scoped, tag = 'scoped memory for tpu_custom_call.1']
    #allocation11 [shape = 'u8[3072]{0}', space=vmem, size = 0xc00, scoped, tag = 'input window, operand 4']
    #allocation12 [shape = 'u8[65536]{0}', space=vmem, size = 0x10000, scoped, tag = 'input window, operand 5']
    #allocation13 [shape = 's32[2]{0}', space=sflag, size = 0x8, scoped, tag = 'scoped memory for tpu_custom_call.1']
    #allocation14 [shape = 'u8[1024]{0}', space=vmem, size = 0x400, scoped, tag = 'input window, operand 6']
    #allocation15 [shape = 'u8[1024]{0}', space=vmem, size = 0x400, scoped, tag = 'input window, operand 7']
    #allocation16 [shape = 's32[2]{0}', space=sflag, size = 0x8, scoped, tag = 'scoped memory for tpu_custom_call.1']
    #allocation17 [shape = 'u8[1024]{0}', space=vmem, size = 0x400, scoped, tag = 'input window, operand 8']
    #allocation18 [shape = 'u8[1048576]{0}', space=vmem, size = 0x100000, scoped, tag = 'input window, operand 9']
    #allocation19 [shape = 's32[2]{0}', space=sflag, size = 0x8, scoped, tag = 'scoped memory for tpu_custom_call.1']
    #allocation20 [shape = 'u8[16384]{0}', space=vmem, size = 0x4000, scoped, tag = 'input window, operand 10']
    #allocation21 [shape = 'u8[1048576]{0}', space=vmem, size = 0x100000, scoped, tag = 'input window, operand 11']
    #allocation22 [shape = 's32[2]{0}', space=sflag, size = 0x8, scoped, tag = 'scoped memory for tpu_custom_call.1']
    #allocation23 [shape = 'u8[1024]{0}', space=vmem, size = 0x400, scoped, tag = 'input window, operand 12']
    #allocation24 [shape = 'u8[1024]{0}', space=vmem, size = 0x400, scoped, tag = 'input window, operand 13']
    #allocation25 [shape = 's32[2]{0}', space=sflag, size = 0x8, scoped, tag = 'scoped memory for tpu_custom_call.1']
    #allocation26 [shape = 'u8[1024]{0}', space=vmem, size = 0x400, scoped, tag = 'input window, operand 14']
    #allocation27 [shape = 'u8[32768]{0}', space=vmem, size = 0x8000, scoped, tag = 'input window, operand 15, single buffered']
    #allocation28 [shape = 's32[1]{0}', space=sflag, size = 0x4, scoped, tag = 'scoped memory for tpu_custom_call.1']
    #allocation29 [shape = 'u8[512]{0}', space=vmem, size = 0x400, scoped, tag = 'input window, operand 16, single buffered']
    #allocation30 [shape = 'u8[8192]{0}', space=vmem, size = 0x2000, scoped, tag = 'output window, operand 0']
    %22 = vsyncpa [#allocation4], 0
    %s23 = scalar_lea.sflag [#allocation4], 1
    %24 = vsyncpa %s23, 0
    %25 = vsyncpa [#allocation7], 0
    %s26 = scalar_lea.sflag [#allocation7], 1
    %27 = vsyncpa %s26, 0
    %28 = vsyncpa [#allocation10], 0
    %s29 = scalar_lea.sflag [#allocation10], 1
    %30 = vsyncpa %s29, 0
    %31 = vsyncpa [#allocation13], 0
    %s32 = scalar_lea.sflag [#allocation13], 1
    %33 = vsyncpa %s32, 0
    %34 = vsyncpa [#allocation16], 0
    %s35 = scalar_lea.sflag [#allocation16], 1
    %36 = vsyncpa %s35, 0
    %37 = vsyncpa [#allocation19], 0
    %s38 = scalar_lea.sflag [#allocation19], 1
    %39 = vsyncpa %s38, 0
    %40 = vsyncpa [#allocation22], 0
    %s41 = scalar_lea.sflag [#allocation22], 1
    %42 = vsyncpa %s41, 0
    %43 = vsyncpa [#allocation25], 0
    %s44 = scalar_lea.sflag [#allocation25], 1
    %45 = vsyncpa %s44, 0
    %46 = vsyncpa [#allocation28], 0
    %47 = vsyncpa [#allocation5], 0
    %s48 = scalar_lea.sflag [#allocation5], 1
    %49 = vsyncpa %s48, 0
    loop: start=0, step=1, limit=10
    $region2: #{tpu_custom_call.1} parent=1 // loop_pre_header
      _
    $region3: #{tpu_custom_call.1} parent=1 // loop_header
      %s51 = sphi 0, %s55
      %p52 = scmp.ge.s32.totalorder %s51, 10
      %s58 = sphi 0, %s70
      %s59 = sphi 0, %s66
      %s60 = sphi 0, %s58
      %s61 = sphi 0, %s59
      %s62 = sphi 0, %s60
      %s63 = sphi 0, %s61
      %s73 = sphi 0, %s75
      %s76 = sphi 0, %s73
      %s77 = sphi 0, %s76
      %s93 = sphi 0, %s77
      %s99 = sphi 0, %s101
      %s102 = sphi 0, %s99
      %s103 = sphi 0, %s102
      %s119 = sphi 0, %s103
      %s123 = sphi 0, %s123
      %s125 = sphi 0, %s123
      %s126 = sphi 0, %s125
      %s140 = sphi 0, %s126
      %s146 = sphi 0, %s148
      %s149 = sphi 0, %s146
      %s150 = sphi 0, %s149
      %s166 = sphi 0, %s150
      %s172 = sphi 0, %s174
      %s175 = sphi 0, %s172
      %s176 = sphi 0, %s175
      %s192 = sphi 0, %s176
      %s198 = sphi 0, %s200
      %s201 = sphi 0, %s198
      %s202 = sphi 0, %s201
      %s218 = sphi 0, %s202
      %s224 = sphi 0, %s226
      %s227 = sphi 0, %s224
      %s228 = sphi 0, %s227
      %s244 = sphi 0, %s228
      %s250 = sphi 0, %s252
      %s253 = sphi 0, %s250
      %s254 = sphi 0, %s253
      %s270 = sphi 0, %s254
      %s276 = sphi 0, %s278
      %s279 = sphi 0, %s276
      %s280 = sphi 0, %s279
      %s296 = sphi 0, %s280
      %s302 = sphi 0, %s304
      %s305 = sphi 0, %s302
      %s306 = sphi 0, %s305
      %s322 = sphi 0, %s306
      %s328 = sphi 0, %s330
      %s331 = sphi 0, %s328
      %s332 = sphi 0, %s331
      %s348 = sphi 0, %s332
      %s354 = sphi 0, %s356
      %s357 = sphi 0, %s354
      %s358 = sphi 0, %s357
      %s374 = sphi 0, %s358
      %s380 = sphi 0, %s382
      %s383 = sphi 0, %s380
      %s384 = sphi 0, %s383
      %s400 = sphi 0, %s384
      %s406 = sphi 0, %s408
      %s409 = sphi 0, %s406
      %s410 = sphi 0, %s409
      %s426 = sphi 0, %s410
      %s432 = sphi 0, %s434
      %s435 = sphi 0, %s432
      %s436 = sphi 0, %s435
      %s452 = sphi 0, %s436
      %s456 = sphi 0, %s456
      %s458 = sphi 0, %s456
      %s459 = sphi 0, %s458
      %s473 = sphi 0, %s459
      %s477 = sphi 0, %s477
      %s479 = sphi 0, %s477
      %s480 = sphi 0, %s479
      %s494 = sphi 0, %s480
      %s500 = sphi 0, %s502
      %s503 = sphi 0, %s500
      %s504 = sphi 0, %s503
      %s520 = sphi 0, %s504
    $region4: #{tpu_custom_call.1} parent=1 // loop_header_branch
      %54 = sbr.rel (%p52) target = $region8
    $region5: #{tpu_custom_call.1} parent=1 // loop_body
      %s56 = ssub.s32 %s51, 1
      %s57 = ssub.s32 %s51, 2
      %s64 = sadd.s32 1, %s59
      %p65 = scmp.ge.s32.totalorder %s64, 4
      %s66 = scalar_select %p65, 0, %s64
      %s67 = sadd.s32 1, %s58
      %s68 = scalar_select %p65, %s67, %s58
      %p69 = scmp.ge.s32.totalorder %s68, 2
      %s70 = scalar_select %p69, 0, %s68
      %s71 = ssub.s32 %s58, %s70
      %p72 = scmp.eq.s32.totalorder %s71, 0
      %s74 = sadd.s32 %s73, 1
      %s75 = scalar_select %p72, %s73, %s74
      %p78 = pneg %p72
      %p79 = scmp.eq.s32.totalorder %s51, 7
      %p80 = por %p78, %p79
      %p81 = scmp.ne.s32.totalorder %s73, %s76
      %p82 = scmp.eq.s32.totalorder %s51, 0
      %p83 = por %p81, %p82
      %p84 = scmp.ne.s32.totalorder %s73, %s76
      %p85 = scmp.eq.s32.totalorder %s56, 7
      %p86 = por %p84, %p85
      %p87 = scmp.ne.s32.totalorder %s76, %s77
      %p88 = scmp.eq.s32.totalorder %s56, 0
      %p89 = por %p87, %p88
      %p90 = scmp.ne.s32.totalorder %s76, %s77
      %p91 = scmp.eq.s32.totalorder %s57, 7
      %p92 = por %p90, %p91
      %p94 = scmp.ne.s32.totalorder %s77, %s93
      %p95 = scmp.eq.s32.totalorder %s57, 0
      %p96 = por %p94, %p95
      %s97 = ssub.s32 %s58, %s70
      %p98 = scmp.eq.s32.totalorder %s97, 0
      %s100 = sadd.s32 %s99, 1
      %s101 = scalar_select %p98, %s99, %s100
      %p104 = pneg %p98
      %p105 = scmp.eq.s32.totalorder %s51, 7
      %p106 = por %p104, %p105
      %p107 = scmp.ne.s32.totalorder %s99, %s102
      %p108 = scmp.eq.s32.totalorder %s51, 0
      %p109 = por %p107, %p108
      %p110 = scmp.ne.s32.totalorder %s99, %s102
      %p111 = scmp.eq.s32.totalorder %s56, 7
      %p112 = por %p110, %p111
      %p113 = scmp.ne.s32.totalorder %s102, %s103
      %p114 = scmp.eq.s32.totalorder %s56, 0
      %p115 = por %p113, %p114
      %p116 = scmp.ne.s32.totalorder %s102, %s103
      %p117 = scmp.eq.s32.totalorder %s57, 7
      %p118 = por %p116, %p117
      %p120 = scmp.ne.s32.totalorder %s103, %s119
      %p121 = scmp.eq.s32.totalorder %s57, 0
      %p122 = por %p120, %p121
      %s124 = sadd.s32 %s123, 1
      %p127 = scmp.eq.s32.totalorder %s51, 7
      %p128 = scmp.ne.s32.totalorder %s123, %s125
      %p129 = scmp.eq.s32.totalorder %s51, 0
      %p130 = por %p128, %p129
      %p131 = scmp.ne.s32.totalorder %s123, %s125
      %p132 = scmp.eq.s32.totalorder %s56, 7
      %p133 = por %p131, %p132
      %p134 = scmp.ne.s32.totalorder %s125, %s126
      %p135 = scmp.eq.s32.totalorder %s56, 0
      %p136 = por %p134, %p135
      %p137 = scmp.ne.s32.totalorder %s125, %s126
      %p138 = scmp.eq.s32.totalorder %s57, 7
      %p139 = por %p137, %p138
      %p141 = scmp.ne.s32.totalorder %s126, %s140
      %p142 = scmp.eq.s32.totalorder %s57, 0
      %p143 = por %p141, %p142
      %s144 = ssub.s32 %s59, %s66
      %p145 = scmp.eq.s32.totalorder %s144, 0
      %s147 = sadd.s32 %s146, 1
      %s148 = scalar_select %p145, %s146, %s147
      %p151 = pneg %p145
      %p152 = scmp.eq.s32.totalorder %s51, 7
      %p153 = por %p151, %p152
      %p154 = scmp.ne.s32.totalorder %s146, %s149
      %p155 = scmp.eq.s32.totalorder %s51, 0
      %p156 = por %p154, %p155
      %p157 = scmp.ne.s32.totalorder %s146, %s149
      %p158 = scmp.eq.s32.totalorder %s56, 7
      %p159 = por %p157, %p158
      %p160 = scmp.ne.s32.totalorder %s149, %s150
      %p161 = scmp.eq.s32.totalorder %s56, 0
      %p162 = por %p160, %p161
      %p163 = scmp.ne.s32.totalorder %s149, %s150
      %p164 = scmp.eq.s32.totalorder %s57, 7
      %p165 = por %p163, %p164
      %p167 = scmp.ne.s32.totalorder %s150, %s166
      %p168 = scmp.eq.s32.totalorder %s57, 0
      %p169 = por %p167, %p168
      %s170 = ssub.s32 %s59, %s66
      %p171 = scmp.eq.s32.totalorder %s170, 0
      %s173 = sadd.s32 %s172, 1
      %s174 = scalar_select %p171, %s172, %s173
      %p177 = pneg %p171
      %p178 = scmp.eq.s32.totalorder %s51, 7
      %p179 = por %p177, %p178
      %p180 = scmp.ne.s32.totalorder %s172, %s175
      %p181 = scmp.eq.s32.totalorder %s51, 0
      %p182 = por %p180, %p181
      %p183 = scmp.ne.s32.totalorder %s172, %s175
      %p184 = scmp.eq.s32.totalorder %s56, 7
      %p185 = por %p183, %p184
      %p186 = scmp.ne.s32.totalorder %s175, %s176
      %p187 = scmp.eq.s32.totalorder %s56, 0
      %p188 = por %p186, %p187
      %p189 = scmp.ne.s32.totalorder %s175, %s176
      %p190 = scmp.eq.s32.totalorder %s57, 7
      %p191 = por %p189, %p190
      %p193 = scmp.ne.s32.totalorder %s176, %s192
      %p194 = scmp.eq.s32.totalorder %s57, 0
      %p195 = por %p193, %p194
      %s196 = ssub.s32 %s59, %s66
      %p197 = scmp.eq.s32.totalorder %s196, 0
      %s199 = sadd.s32 %s198, 1
      %s200 = scalar_select %p197, %s198, %s199
      %p203 = pneg %p197
      %p204 = scmp.eq.s32.totalorder %s51, 7
      %p205 = por %p203, %p204
      %p206 = scmp.ne.s32.totalorder %s198, %s201
      %p207 = scmp.eq.s32.totalorder %s51, 0
      %p208 = por %p206, %p207
      %p209 = scmp.ne.s32.totalorder %s198, %s201
      %p210 = scmp.eq.s32.totalorder %s56, 7
      %p211 = por %p209, %p210
      %p212 = scmp.ne.s32.totalorder %s201, %s202
      %p213 = scmp.eq.s32.totalorder %s56, 0
      %p214 = por %p212, %p213
      %p215 = scmp.ne.s32.totalorder %s201, %s202
      %p216 = scmp.eq.s32.totalorder %s57, 7
      %p217 = por %p215, %p216
      %p219 = scmp.ne.s32.totalorder %s202, %s218
      %p220 = scmp.eq.s32.totalorder %s57, 0
      %p221 = por %p219, %p220
      %s222 = ssub.s32 %s59, %s66
      %p223 = scmp.eq.s32.totalorder %s222, 0
      %s225 = sadd.s32 %s224, 1
      %s226 = scalar_select %p223, %s224, %s225
      %p229 = pneg %p223
      %p230 = scmp.eq.s32.totalorder %s51, 7
      %p231 = por %p229, %p230
      %p232 = scmp.ne.s32.totalorder %s224, %s227
      %p233 = scmp.eq.s32.totalorder %s51, 0
      %p234 = por %p232, %p233
      %p235 = scmp.ne.s32.totalorder %s224, %s227
      %p236 = scmp.eq.s32.totalorder %s56, 7
      %p237 = por %p235, %p236
      %p238 = scmp.ne.s32.totalorder %s227, %s228
      %p239 = scmp.eq.s32.totalorder %s56, 0
      %p240 = por %p238, %p239
      %p241 = scmp.ne.s32.totalorder %s227, %s228
      %p242 = scmp.eq.s32.totalorder %s57, 7
      %p243 = por %p241, %p242
      %p245 = scmp.ne.s32.totalorder %s228, %s244
      %p246 = scmp.eq.s32.totalorder %s57, 0
      %p247 = por %p245, %p246
      %s248 = ssub.s32 %s59, %s66
      %p249 = scmp.eq.s32.totalorder %s248, 0
      %s251 = sadd.s32 %s250, 1
      %s252 = scalar_select %p249, %s250, %s251
      %p255 = pneg %p249
      %p256 = scmp.eq.s32.totalorder %s51, 7
      %p257 = por %p255, %p256
      %p258 = scmp.ne.s32.totalorder %s250, %s253
      %p259 = scmp.eq.s32.totalorder %s51, 0
      %p260 = por %p258, %p259
      %p261 = scmp.ne.s32.totalorder %s250, %s253
      %p262 = scmp.eq.s32.totalorder %s56, 7
      %p263 = por %p261, %p262
      %p264 = scmp.ne.s32.totalorder %s253, %s254
      %p265 = scmp.eq.s32.totalorder %s56, 0
      %p266 = por %p264, %p265
      %p267 = scmp.ne.s32.totalorder %s253, %s254
      %p268 = scmp.eq.s32.totalorder %s57, 7
      %p269 = por %p267, %p268
      %p271 = scmp.ne.s32.totalorder %s254, %s270
      %p272 = scmp.eq.s32.totalorder %s57, 0
      %p273 = por %p271, %p272
      %s274 = ssub.s32 %s59, %s66
      %p275 = scmp.eq.s32.totalorder %s274, 0
      %s277 = sadd.s32 %s276, 1
      %s278 = scalar_select %p275, %s276, %s277
      %p281 = pneg %p275
      %p282 = scmp.eq.s32.totalorder %s51, 7
      %p283 = por %p281, %p282
      %p284 = scmp.ne.s32.totalorder %s276, %s279
      %p285 = scmp.eq.s32.totalorder %s51, 0
      %p286 = por %p284, %p285
      %p287 = scmp.ne.s32.totalorder %s276, %s279
      %p288 = scmp.eq.s32.totalorder %s56, 7
      %p289 = por %p287, %p288
      %p290 = scmp.ne.s32.totalorder %s279, %s280
      %p291 = scmp.eq.s32.totalorder %s56, 0
      %p292 = por %p290, %p291
      %p293 = scmp.ne.s32.totalorder %s279, %s280
      %p294 = scmp.eq.s32.totalorder %s57, 7
      %p295 = por %p293, %p294
      %p297 = scmp.ne.s32.totalorder %s280, %s296
      %p298 = scmp.eq.s32.totalorder %s57, 0
      %p299 = por %p297, %p298
      %s300 = ssub.s32 %s59, %s66
      %p301 = scmp.eq.s32.totalorder %s300, 0
      %s303 = sadd.s32 %s302, 1
      %s304 = scalar_select %p301, %s302, %s303
      %p307 = pneg %p301
      %p308 = scmp.eq.s32.totalorder %s51, 7
      %p309 = por %p307, %p308
      %p310 = scmp.ne.s32.totalorder %s302, %s305
      %p311 = scmp.eq.s32.totalorder %s51, 0
      %p312 = por %p310, %p311
      %p313 = scmp.ne.s32.totalorder %s302, %s305
      %p314 = scmp.eq.s32.totalorder %s56, 7
      %p315 = por %p313, %p314
      %p316 = scmp.ne.s32.totalorder %s305, %s306
      %p317 = scmp.eq.s32.totalorder %s56, 0
      %p318 = por %p316, %p317
      %p319 = scmp.ne.s32.totalorder %s305, %s306
      %p320 = scmp.eq.s32.totalorder %s57, 7
      %p321 = por %p319, %p320
      %p323 = scmp.ne.s32.totalorder %s306, %s322
      %p324 = scmp.eq.s32.totalorder %s57, 0
      %p325 = por %p323, %p324
      %s326 = ssub.s32 %s59, %s66
      %p327 = scmp.eq.s32.totalorder %s326, 0
      %s329 = sadd.s32 %s328, 1
      %s330 = scalar_select %p327, %s328, %s329
      %p333 = pneg %p327
      %p334 = scmp.eq.s32.totalorder %s51, 7
      %p335 = por %p333, %p334
      %p336 = scmp.ne.s32.totalorder %s328, %s331
      %p337 = scmp.eq.s32.totalorder %s51, 0
      %p338 = por %p336, %p337
      %p339 = scmp.ne.s32.totalorder %s328, %s331
      %p340 = scmp.eq.s32.totalorder %s56, 7
      %p341 = por %p339, %p340
      %p342 = scmp.ne.s32.totalorder %s331, %s332
      %p343 = scmp.eq.s32.totalorder %s56, 0
      %p344 = por %p342, %p343
      %p345 = scmp.ne.s32.totalorder %s331, %s332
      %p346 = scmp.eq.s32.totalorder %s57, 7
      %p347 = por %p345, %p346
      %p349 = scmp.ne.s32.totalorder %s332, %s348
      %p350 = scmp.eq.s32.totalorder %s57, 0
      %p351 = por %p349, %p350
      %s352 = ssub.s32 %s59, %s66
      %p353 = scmp.eq.s32.totalorder %s352, 0
      %s355 = sadd.s32 %s354, 1
      %s356 = scalar_select %p353, %s354, %s355
      %p359 = pneg %p353
      %p360 = scmp.eq.s32.totalorder %s51, 7
      %p361 = por %p359, %p360
      %p362 = scmp.ne.s32.totalorder %s354, %s357
      %p363 = scmp.eq.s32.totalorder %s51, 0
      %p364 = por %p362, %p363
      %p365 = scmp.ne.s32.totalorder %s354, %s357
      %p366 = scmp.eq.s32.totalorder %s56, 7
      %p367 = por %p365, %p366
      %p368 = scmp.ne.s32.totalorder %s357, %s358
      %p369 = scmp.eq.s32.totalorder %s56, 0
      %p370 = por %p368, %p369
      %p371 = scmp.ne.s32.totalorder %s357, %s358
      %p372 = scmp.eq.s32.totalorder %s57, 7
      %p373 = por %p371, %p372
      %p375 = scmp.ne.s32.totalorder %s358, %s374
      %p376 = scmp.eq.s32.totalorder %s57, 0
      %p377 = por %p375, %p376
      %s378 = ssub.s32 %s59, %s66
      %p379 = scmp.eq.s32.totalorder %s378, 0
      %s381 = sadd.s32 %s380, 1
      %s382 = scalar_select %p379, %s380, %s381
      %p385 = pneg %p379
      %p386 = scmp.eq.s32.totalorder %s51, 7
      %p387 = por %p385, %p386
      %p388 = scmp.ne.s32.totalorder %s380, %s383
      %p389 = scmp.eq.s32.totalorder %s51, 0
      %p390 = por %p388, %p389
      %p391 = scmp.ne.s32.totalorder %s380, %s383
      %p392 = scmp.eq.s32.totalorder %s56, 7
      %p393 = por %p391, %p392
      %p394 = scmp.ne.s32.totalorder %s383, %s384
      %p395 = scmp.eq.s32.totalorder %s56, 0
      %p396 = por %p394, %p395
      %p397 = scmp.ne.s32.totalorder %s383, %s384
      %p398 = scmp.eq.s32.totalorder %s57, 7
      %p399 = por %p397, %p398
      %p401 = scmp.ne.s32.totalorder %s384, %s400
      %p402 = scmp.eq.s32.totalorder %s57, 0
      %p403 = por %p401, %p402
      %s404 = ssub.s32 %s59, %s66
      %p405 = scmp.eq.s32.totalorder %s404, 0
      %s407 = sadd.s32 %s406, 1
      %s408 = scalar_select %p405, %s406, %s407
      %p411 = pneg %p405
      %p412 = scmp.eq.s32.totalorder %s51, 7
      %p413 = por %p411, %p412
      %p414 = scmp.ne.s32.totalorder %s406, %s409
      %p415 = scmp.eq.s32.totalorder %s51, 0
      %p416 = por %p414, %p415
      %p417 = scmp.ne.s32.totalorder %s406, %s409
      %p418 = scmp.eq.s32.totalorder %s56, 7
      %p419 = por %p417, %p418
      %p420 = scmp.ne.s32.totalorder %s409, %s410
      %p421 = scmp.eq.s32.totalorder %s56, 0
      %p422 = por %p420, %p421
      %p423 = scmp.ne.s32.totalorder %s409, %s410
      %p424 = scmp.eq.s32.totalorder %s57, 7
      %p425 = por %p423, %p424
      %p427 = scmp.ne.s32.totalorder %s410, %s426
      %p428 = scmp.eq.s32.totalorder %s57, 0
      %p429 = por %p427, %p428
      %s430 = ssub.s32 %s59, %s66
      %p431 = scmp.eq.s32.totalorder %s430, 0
      %s433 = sadd.s32 %s432, 1
      %s434 = scalar_select %p431, %s432, %s433
      %p437 = pneg %p431
      %p438 = scmp.eq.s32.totalorder %s51, 7
      %p439 = por %p437, %p438
      %p440 = scmp.ne.s32.totalorder %s432, %s435
      %p441 = scmp.eq.s32.totalorder %s51, 0
      %p442 = por %p440, %p441
      %p443 = scmp.ne.s32.totalorder %s432, %s435
      %p444 = scmp.eq.s32.totalorder %s56, 7
      %p445 = por %p443, %p444
      %p446 = scmp.ne.s32.totalorder %s435, %s436
      %p447 = scmp.eq.s32.totalorder %s56, 0
      %p448 = por %p446, %p447
      %p449 = scmp.ne.s32.totalorder %s435, %s436
      %p450 = scmp.eq.s32.totalorder %s57, 7
      %p451 = por %p449, %p450
      %p453 = scmp.ne.s32.totalorder %s436, %s452
      %p454 = scmp.eq.s32.totalorder %s57, 0
      %p455 = por %p453, %p454
      %s457 = sadd.s32 %s456, 1
      %p460 = scmp.eq.s32.totalorder %s51, 7
      %p461 = scmp.ne.s32.totalorder %s456, %s458
      %p462 = scmp.eq.s32.totalorder %s51, 0
      %p463 = por %p461, %p462
      %p464 = scmp.ne.s32.totalorder %s456, %s458
      %p465 = scmp.eq.s32.totalorder %s56, 7
      %p466 = por %p464, %p465
      %p467 = scmp.ne.s32.totalorder %s458, %s459
      %p468 = scmp.eq.s32.totalorder %s56, 0
      %p469 = por %p467, %p468
      %p470 = scmp.ne.s32.totalorder %s458, %s459
      %p471 = scmp.eq.s32.totalorder %s57, 7
      %p472 = por %p470, %p471
      %p474 = scmp.ne.s32.totalorder %s459, %s473
      %p475 = scmp.eq.s32.totalorder %s57, 0
      %p476 = por %p474, %p475
      %s478 = sadd.s32 %s477, 1
      %p481 = scmp.eq.s32.totalorder %s51, 7
      %p482 = scmp.ne.s32.totalorder %s477, %s479
      %p483 = scmp.eq.s32.totalorder %s51, 0
      %p484 = por %p482, %p483
      %p485 = scmp.ne.s32.totalorder %s477, %s479
      %p486 = scmp.eq.s32.totalorder %s56, 7
      %p487 = por %p485, %p486
      %p488 = scmp.ne.s32.totalorder %s479, %s480
      %p489 = scmp.eq.s32.totalorder %s56, 0
      %p490 = por %p488, %p489
      %p491 = scmp.ne.s32.totalorder %s479, %s480
      %p492 = scmp.eq.s32.totalorder %s57, 7
      %p493 = por %p491, %p492
      %p495 = scmp.ne.s32.totalorder %s480, %s494
      %p496 = scmp.eq.s32.totalorder %s57, 0
      %p497 = por %p495, %p496
      %s498 = ssub.s32 %s58, %s70
      %p499 = scmp.eq.s32.totalorder %s498, 0
      %s501 = sadd.s32 %s500, 1
      %s502 = scalar_select %p499, %s500, %s501
      %p505 = pneg %p499
      %p506 = scmp.eq.s32.totalorder %s51, 7
      %p507 = por %p505, %p506
      %p508 = scmp.ne.s32.totalorder %s500, %s503
      %p509 = scmp.eq.s32.totalorder %s51, 0
      %p510 = por %p508, %p509
      %p511 = scmp.ne.s32.totalorder %s500, %s503
      %p512 = scmp.eq.s32.totalorder %s56, 7
      %p513 = por %p511, %p512
      %p514 = scmp.ne.s32.totalorder %s503, %s504
      %p515 = scmp.eq.s32.totalorder %s56, 0
      %p516 = por %p514, %p515
      %p517 = scmp.ne.s32.totalorder %s503, %s504
      %p518 = scmp.eq.s32.totalorder %s57, 7
      %p519 = por %p517, %p518
      %p521 = scmp.ne.s32.totalorder %s504, %s520
      %p522 = scmp.eq.s32.totalorder %s57, 0
      %p523 = por %p521, %p522
      %p524 = scmp.le.s32.totalorder 1, %s51
      %p525 = scmp.lt.s32.totalorder %s51, 9
      %p526 = pnand %p524, %p525
      %p527 = pneg %p526
      // Predicated region
      $region9: #{tpu_custom_call.1} parent=5 // pred_check
        _
      $region10: #{tpu_custom_call.1} parent=5 // pred_check_branch
        %529 = sbr.rel (%p526) target = $region12
      $region11: #{tpu_custom_call.1} parent=5 // pred_region
        %s530 = ssub.s32 %s51, 1
        // Predicated region
        $region13: #{tpu_custom_call.1} parent=11 // pred_check
          %p531 = pneg %p136
        $region14: #{tpu_custom_call.1} parent=11 // pred_check_branch
          %533 = sbr.rel (%p531) target = $region16
        $region15: #{tpu_custom_call.1} parent=11 // pred_region
          %s535 = ssub.s32 128, 128
          %536 = vsyncadd [#allocation7], %s535
          %s537 = sshll.u32 [#allocation8], 4
          %s538 = int_to_ptr.vmem [resolvable:$true] %s537
          %543 = dma.hbm_to_vmem [thread:$0]  %s2, 128, %s538, [#allocation7], 64, 64, 4
        $region16: #{tpu_custom_call.1} parent=11 // pred_fallthru
          _
        // Predicated region
        $region17: #{tpu_custom_call.1} parent=11 // pred_check
          %p544 = pneg %p469
        $region18: #{tpu_custom_call.1} parent=11 // pred_check_branch
          %546 = sbr.rel (%p544) target = $region20
        $region19: #{tpu_custom_call.1} parent=11 // pred_region
          %s548 = ssub.s32 1024, 1024
          %549 = vsyncadd [#allocation28], %s548
          %s550 = sshll.u32 [#allocation27], 4
          %s551 = int_to_ptr.vmem [resolvable:$true] %s550
          %556 = dma.hbm_to_vmem [thread:$0]  %s15, 1024, %s551, [#allocation28], 64, 64, 4
        $region20: #{tpu_custom_call.1} parent=11 // pred_fallthru
          _
        // Predicated region
        $region21: #{tpu_custom_call.1} parent=11 // pred_check
          %p557 = pneg %p490
        $region22: #{tpu_custom_call.1} parent=11 // pred_check_branch
          %559 = sbr.rel (%p557) target = $region24
        $region23: #{tpu_custom_call.1} parent=11 // pred_region
          %s561 = ssub.s32 16, 16
          %562 = vsyncadd [#allocation28], %s561
          %s564 = sshll.u32 [#allocation29], 4
          %s565 = int_to_ptr.vmem [resolvable:$true] %s564
          %567 = dma.hbm_to_vmem [thread:$0]  %s16, 16, %s565, [#allocation28]
        $region24: #{tpu_custom_call.1} parent=11 // pred_fallthru
          _
      $region12: #{tpu_custom_call.1} parent=5 // pred_fallthru
        _
      %p568 = scmp.lt.s32.totalorder %s51, 8
      // Predicated region
      $region25: #{tpu_custom_call.1} parent=5 // pred_check
        %p569 = pneg %p568
      $region26: #{tpu_custom_call.1} parent=5 // pred_check_branch
        %571 = sbr.rel (%p569) target = $region28
      $region27: #{tpu_custom_call.1} parent=5 // pred_region
        // Predicated region
        $region29: #{tpu_custom_call.1} parent=27 // pred_check
          %p572 = pneg %p83
        $region30: #{tpu_custom_call.1} parent=27 // pred_check_branch
          %574 = sbr.rel (%p572) target = $region32
        $region31: #{tpu_custom_call.1} parent=27 // pred_region
          %s575 = sand.u32 %s73, 1
          %s576 = scalar_lea.sflag [#allocation4], %s575
          %s577 = sand.u32 %s73, 1
          %s578 = smul.addr %s577, 16
          %s579 = scalar_lea.vmem [#allocation3], %s578
          %s581 = ssub.s32 256, 256
          %582 = vsyncadd %s576, %s581
          %s583 = smul.addr %s58, 2
          %s584 = smul.addr %s583, 128
          %s585 = scalar_lea.hbm %s0, %s584
          %s586 = sshll.u32 %s579, 4
          %s587 = int_to_ptr.vmem [resolvable:$true] %s586
          %592 = dma.hbm_to_vmem [thread:$0]  %s585, 256, %s587, %s576, 128, 128, 8
        $region32: #{tpu_custom_call.1} parent=27 // pred_fallthru
          _
        // Predicated region
        $region33: #{tpu_custom_call.1} parent=27 // pred_check
          %p593 = pneg %p109
        $region34: #{tpu_custom_call.1} parent=27 // pred_check_branch
          %595 = sbr.rel (%p593) target = $region36
        $region35: #{tpu_custom_call.1} parent=27 // pred_region
          %s596 = sand.u32 %s51, 1
          %s597 = scalar_lea.sflag [#allocation7], %s596
          %s598 = sand.u32 %s99, 1
          %s599 = smul.addr %s598, 16
          %s600 = scalar_lea.vmem [#allocation6], %s599
          %s602 = ssub.s32 256, 256
          %603 = vsyncadd %s597, %s602
          %s604 = smul.addr %s58, 2
          %s605 = smul.addr %s604, 128
          %s606 = scalar_lea.hbm %s1, %s605
          %s607 = sshll.u32 %s600, 4
          %s608 = int_to_ptr.vmem [resolvable:$true] %s607
          %613 = dma.hbm_to_vmem [thread:$0]  %s606, 256, %s608, %s597, 128, 128, 8
        $region36: #{tpu_custom_call.1} parent=27 // pred_fallthru
          _
        // Predicated region
        $region37: #{tpu_custom_call.1} parent=27 // pred_check
          %p614 = pneg %p156
        $region38: #{tpu_custom_call.1} parent=27 // pred_check_branch
          %616 = sbr.rel (%p614) target = $region40
        $region39: #{tpu_custom_call.1} parent=27 // pred_region
          %s617 = sand.u32 %s51, 1
          %s618 = scalar_lea.sflag [#allocation10], %s617
          %s619 = sand.u32 %s146, 1
          %s620 = smul.addr %s619, 192
          %s621 = scalar_lea.vmem [#allocation9], %s620
          %s623 = ssub.s32 3072, 3072
          %624 = vsyncadd %s618, %s623
          %s625 = smul.addr %s59, 48
          %s626 = smul.addr %s625, 64
          %s627 = scalar_lea.hbm %s3, %s626
          %s628 = sshll.u32 %s621, 4
          %s629 = int_to_ptr.vmem [resolvable:$true] %s628
          %634 = dma.hbm_to_vmem [thread:$0]  %s627, 3072, %s629, %s618, 192, 192, 12
        $region40: #{tpu_custom_call.1} parent=27 // pred_fallthru
          _
        // Predicated region
        $region41: #{tpu_custom_call.1} parent=27 // pred_check
          %p635 = pneg %p182
        $region42: #{tpu_custom_call.1} parent=27 // pred_check_branch
          %637 = sbr.rel (%p635) target = $region44
        $region43: #{tpu_custom_call.1} parent=27 // pred_region
          %s638 = sand.u32 %s51, 1
          %s639 = scalar_lea.sflag [#allocation10], %s638
          %s640 = sand.u32 %s172, 1
          %s641 = smul.addr %s640, 3
          %s642 = scalar_lea.vmem [#allocation11], %s641
          %s644 = ssub.s32 48, 48
          %645 = vsyncadd %s639, %s644
          %s646 = smul.addr %s59, 3
          %s647 = smul.addr %s646, 16
          %s648 = scalar_lea.hbm %s4, %s647
          %s650 = sshll.u32 %s642, 4
          %s651 = int_to_ptr.vmem [resolvable:$true] %s650
          %653 = dma.hbm_to_vmem [thread:$0]  %s648, 48, %s651, %s639
        $region44: #{tpu_custom_call.1} parent=27 // pred_fallthru
          _
        // Predicated region
        $region45: #{tpu_custom_call.1} parent=27 // pred_check
          %p654 = pneg %p208
        $region46: #{tpu_custom_call.1} parent=27 // pred_check_branch
          %656 = sbr.rel (%p654) target = $region48
        $region47: #{tpu_custom_call.1} parent=27 // pred_region
          %s657 = sand.u32 %s51, 1
          %s658 = scalar_lea.sflag [#allocation13], %s657
          %s659 = sand.u32 %s198, 1
          %s660 = smul.addr %s659, 64
          %s661 = scalar_lea.vmem [#allocation12], %s660
          %s663 = ssub.s32 1024, 1024
          %664 = vsyncadd %s658, %s663
          %s665 = smul.addr %s59, 16
          %s666 = smul.addr %s665, 64
          %s667 = scalar_lea.hbm %s5, %s666
          %s668 = sshll.u32 %s661, 4
          %s669 = int_to_ptr.vmem [resolvable:$true] %s668
          %674 = dma.hbm_to_vmem [thread:$0]  %s667, 1024, %s669, %s658, 64, 64, 4
        $region48: #{tpu_custom_call.1} parent=27 // pred_fallthru
          _
        // Predicated region
        $region49: #{tpu_custom_call.1} parent=27 // pred_check
          %p675 = pneg %p234
        $region50: #{tpu_custom_call.1} parent=27 // pred_check_branch
          %677 = sbr.rel (%p675) target = $region52
        $region51: #{tpu_custom_call.1} parent=27 // pred_region
          %s678 = sand.u32 %s51, 1
          %s679 = scalar_lea.sflag [#allocation13], %s678
          %s680 = sand.u32 %s224, 1
          %s681 = scalar_lea.vmem [#allocation14], %s680
          %s683 = ssub.s32 16, 16
          %684 = vsyncadd %s679, %s683
          %s685 = smul.addr %s59, 16
          %s686 = scalar_lea.hbm %s6, %s685
          %s688 = sshll.u32 %s681, 4
          %s689 = int_to_ptr.vmem [resolvable:$true] %s688
          %691 = dma.hbm_to_vmem [thread:$0]  %s686, 16, %s689, %s679
        $region52: #{tpu_custom_call.1} parent=27 // pred_fallthru
          _
        // Predicated region
        $region53: #{tpu_custom_call.1} parent=27 // pred_check
          %p692 = pneg %p260
        $region54: #{tpu_custom_call.1} parent=27 // pred_check_branch
          %694 = sbr.rel (%p692) target = $region56
        $region55: #{tpu_custom_call.1} parent=27 // pred_region
          %s695 = sand.u32 %s51, 1
          %s696 = scalar_lea.sflag [#allocation16], %s695
          %s697 = sand.u32 %s250, 1
          %s698 = scalar_lea.vmem [#allocation15], %s697
          %s700 = ssub.s32 16, 16
          %701 = vsyncadd %s696, %s700
          %s702 = smul.addr %s59, 16
          %s703 = scalar_lea.hbm %s7, %s702
          %s705 = sshll.u32 %s698, 4
          %s706 = int_to_ptr.vmem [resolvable:$true] %s705
          %708 = dma.hbm_to_vmem [thread:$0]  %s703, 16, %s706, %s696
        $region56: #{tpu_custom_call.1} parent=27 // pred_fallthru
          _
        // Predicated region
        $region57: #{tpu_custom_call.1} parent=27 // pred_check
          %p709 = pneg %p286
        $region58: #{tpu_custom_call.1} parent=27 // pred_check_branch
          %711 = sbr.rel (%p709) target = $region60
        $region59: #{tpu_custom_call.1} parent=27 // pred_region
          %s712 = sand.u32 %s51, 1
          %s713 = scalar_lea.sflag [#allocation16], %s712
          %s714 = sand.u32 %s276, 1
          %s715 = scalar_lea.vmem [#allocation17], %s714
          %s717 = ssub.s32 16, 16
          %718 = vsyncadd %s713, %s717
          %s719 = smul.addr %s59, 16
          %s720 = scalar_lea.hbm %s8, %s719
          %s722 = sshll.u32 %s715, 4
          %s723 = int_to_ptr.vmem [resolvable:$true] %s722
          %725 = dma.hbm_to_vmem [thread:$0]  %s720, 16, %s723, %s713
        $region60: #{tpu_custom_call.1} parent=27 // pred_fallthru
          _
        // Predicated region
        $region61: #{tpu_custom_call.1} parent=27 // pred_check
          %p726 = pneg %p312
        $region62: #{tpu_custom_call.1} parent=27 // pred_check_branch
          %728 = sbr.rel (%p726) target = $region64
        $region63: #{tpu_custom_call.1} parent=27 // pred_region
          %s729 = sand.u32 %s51, 1
          %s730 = scalar_lea.sflag [#allocation19], %s729
          %s731 = sand.u32 %s302, 1
          %s732 = smul.addr %s731, 1024
          %s733 = scalar_lea.vmem [#allocation18], %s732
          %s735 = ssub.s32 16384, 16384
          %736 = vsyncadd %s730, %s735
          %s737 = smul.addr %s59, 256
          %s738 = smul.addr %s737, 64
          %s739 = scalar_lea.hbm %s9, %s738
          %s740 = sshll.u32 %s733, 4
          %s741 = int_to_ptr.vmem [resolvable:$true] %s740
          %746 = dma.hbm_to_vmem [thread:$0]  %s739, 16384, %s741, %s730, 1024, 1024, 64
        $region64: #{tpu_custom_call.1} parent=27 // pred_fallthru
          _
        // Predicated region
        $region65: #{tpu_custom_call.1} parent=27 // pred_check
          %p747 = pneg %p338
        $region66: #{tpu_custom_call.1} parent=27 // pred_check_branch
          %749 = sbr.rel (%p747) target = $region68
        $region67: #{tpu_custom_call.1} parent=27 // pred_region
          %s750 = sand.u32 %s51, 1
          %s751 = scalar_lea.sflag [#allocation19], %s750
          %s752 = sand.u32 %s328, 1
          %s753 = smul.addr %s752, 16
          %s754 = scalar_lea.vmem [#allocation20], %s753
          %s756 = ssub.s32 256, 256
          %757 = vsyncadd %s751, %s756
          %s758 = smul.addr %s59, 16
          %s759 = smul.addr %s758, 16
          %s760 = scalar_lea.hbm %s10, %s759
          %s762 = sshll.u32 %s754, 4
          %s763 = int_to_ptr.vmem [resolvable:$true] %s762
          %765 = dma.hbm_to_vmem [thread:$0]  %s760, 256, %s763, %s751
        $region68: #{tpu_custom_call.1} parent=27 // pred_fallthru
          _
        // Predicated region
        $region69: #{tpu_custom_call.1} parent=27 // pred_check
          %p766 = pneg %p364
        $region70: #{tpu_custom_call.1} parent=27 // pred_check_branch
          %768 = sbr.rel (%p766) target = $region72
        $region71: #{tpu_custom_call.1} parent=27 // pred_region
          %s769 = sand.u32 %s51, 1
          %s770 = scalar_lea.sflag [#allocation22], %s769
          %s771 = sand.u32 %s354, 1
          %s772 = smul.addr %s771, 1024
          %s773 = scalar_lea.vmem [#allocation21], %s772
          %s775 = ssub.s32 16384, 16384
          %776 = vsyncadd %s770, %s775
          %s777 = smul.addr %s59, 256
          %s778 = smul.addr %s777, 64
          %s779 = scalar_lea.hbm %s11, %s778
          %s780 = sshll.u32 %s773, 4
          %s781 = int_to_ptr.vmem [resolvable:$true] %s780
          %786 = dma.hbm_to_vmem [thread:$0]  %s779, 16384, %s781, %s770, 64, 64, 4
        $region72: #{tpu_custom_call.1} parent=27 // pred_fallthru
          _
        // Predicated region
        $region73: #{tpu_custom_call.1} parent=27 // pred_check
          %p787 = pneg %p390
        $region74: #{tpu_custom_call.1} parent=27 // pred_check_branch
          %789 = sbr.rel (%p787) target = $region76
        $region75: #{tpu_custom_call.1} parent=27 // pred_region
          %s790 = sand.u32 %s51, 1
          %s791 = scalar_lea.sflag [#allocation22], %s790
          %s792 = sand.u32 %s380, 1
          %s793 = scalar_lea.vmem [#allocation23], %s792
          %s795 = ssub.s32 16, 16
          %796 = vsyncadd %s791, %s795
          %s797 = smul.addr %s59, 16
          %s798 = scalar_lea.hbm %s12, %s797
          %s800 = sshll.u32 %s793, 4
          %s801 = int_to_ptr.vmem [resolvable:$true] %s800
          %803 = dma.hbm_to_vmem [thread:$0]  %s798, 16, %s801, %s791
        $region76: #{tpu_custom_call.1} parent=27 // pred_fallthru
          _
        // Predicated region
        $region77: #{tpu_custom_call.1} parent=27 // pred_check
          %p804 = pneg %p416
        $region78: #{tpu_custom_call.1} parent=27 // pred_check_branch
          %806 = sbr.rel (%p804) target = $region80
        $region79: #{tpu_custom_call.1} parent=27 // pred_region
          %s807 = sand.u32 %s51, 1
          %s808 = scalar_lea.sflag [#allocation25], %s807
          %s809 = sand.u32 %s406, 1
          %s810 = scalar_lea.vmem [#allocation24], %s809
          %s812 = ssub.s32 16, 16
          %813 = vsyncadd %s808, %s812
          %s814 = smul.addr %s59, 16
          %s815 = scalar_lea.hbm %s13, %s814
          %s817 = sshll.u32 %s810, 4
          %s818 = int_to_ptr.vmem [resolvable:$true] %s817
          %820 = dma.hbm_to_vmem [thread:$0]  %s815, 16, %s818, %s808
        $region80: #{tpu_custom_call.1} parent=27 // pred_fallthru
          _
        // Predicated region
        $region81: #{tpu_custom_call.1} parent=27 // pred_check
          %p821 = pneg %p442
        $region82: #{tpu_custom_call.1} parent=27 // pred_check_branch
          %823 = sbr.rel (%p821) target = $region84
        $region83: #{tpu_custom_call.1} parent=27 // pred_region
          %s824 = sand.u32 %s51, 1
          %s825 = scalar_lea.sflag [#allocation25], %s824
          %s826 = sand.u32 %s432, 1
          %s827 = scalar_lea.vmem [#allocation26], %s826
          %s829 = ssub.s32 16, 16
          %830 = vsyncadd %s825, %s829
          %s831 = smul.addr %s59, 16
          %s832 = scalar_lea.hbm %s14, %s831
          %s834 = sshll.u32 %s827, 4
          %s835 = int_to_ptr.vmem [resolvable:$true] %s834
          %837 = dma.hbm_to_vmem [thread:$0]  %s832, 16, %s835, %s825
        $region84: #{tpu_custom_call.1} parent=27 // pred_fallthru
          _
      $region28: #{tpu_custom_call.1} parent=5 // pred_fallthru
        _
      %p838 = scmp.le.s32.totalorder 1, %s51
      %p839 = scmp.lt.s32.totalorder %s51, 9
      %p840 = pnand %p838, %p839
      %p841 = pneg %p840
      // Predicated region
      $region85: #{tpu_custom_call.1} parent=5 // pred_check
        _
      $region86: #{tpu_custom_call.1} parent=5 // pred_check_branch
        %843 = sbr.rel (%p840) target = $region88
      $region87: #{tpu_custom_call.1} parent=5 // pred_region
        %s844 = ssub.s32 %s51, 1
        %s845 = sand.u32 %s76, 1
        %s846 = scalar_lea.sflag [#allocation4], %s845
        %s847 = sand.u32 %s76, 1
        %s848 = smul.addr %s847, 16
        %s849 = scalar_lea.vmem [#allocation3], %s848
        // Predicated region
        $region89: #{tpu_custom_call.1} parent=87 // pred_check
          %p850 = pneg %p89
        $region90: #{tpu_custom_call.1} parent=87 // pred_check_branch
          %852 = sbr.rel (%p850) target = $region92
        $region91: #{tpu_custom_call.1} parent=87 // pred_region
          %853 = dma.done %s846, 256
        $region92: #{tpu_custom_call.1} parent=87 // pred_fallthru
          _
        %s854 = sand.u32 %s56, 1
        %s855 = scalar_lea.sflag [#allocation7], %s854
        %s856 = sand.u32 %s102, 1
        %s857 = smul.addr %s856, 16
        %s858 = scalar_lea.vmem [#allocation6], %s857
        // Predicated region
        $region93: #{tpu_custom_call.1} parent=87 // pred_check
          %p859 = pneg %p115
        $region94: #{tpu_custom_call.1} parent=87 // pred_check_branch
          %861 = sbr.rel (%p859) target = $region96
        $region95: #{tpu_custom_call.1} parent=87 // pred_region
          %862 = dma.done %s855, 256
        $region96: #{tpu_custom_call.1} parent=87 // pred_fallthru
          _
        // Predicated region
        $region97: #{tpu_custom_call.1} parent=87 // pred_check
          %p863 = pneg %p136
        $region98: #{tpu_custom_call.1} parent=87 // pred_check_branch
          %865 = sbr.rel (%p863) target = $region100
        $region99: #{tpu_custom_call.1} parent=87 // pred_region
          %866 = dma.done [#allocation7], 128
        $region100: #{tpu_custom_call.1} parent=87 // pred_fallthru
          _
        %s867 = sand.u32 %s56, 1
        %s868 = scalar_lea.sflag [#allocation10], %s867
        %s869 = sand.u32 %s149, 1
        %s870 = smul.addr %s869, 192
        %s871 = scalar_lea.vmem [#allocation9], %s870
        // Predicated region
        $region101: #{tpu_custom_call.1} parent=87 // pred_check
          %p872 = pneg %p162
        $region102: #{tpu_custom_call.1} parent=87 // pred_check_branch
          %874 = sbr.rel (%p872) target = $region104
        $region103: #{tpu_custom_call.1} parent=87 // pred_region
          %875 = dma.done %s868, 3072
        $region104: #{tpu_custom_call.1} parent=87 // pred_fallthru
          _
        %s876 = sand.u32 %s56, 1
        %s877 = scalar_lea.sflag [#allocation10], %s876
        %s878 = sand.u32 %s175, 1
        %s879 = smul.addr %s878, 3
        %s880 = scalar_lea.vmem [#allocation11], %s879
        // Predicated region
        $region105: #{tpu_custom_call.1} parent=87 // pred_check
          %p881 = pneg %p188
        $region106: #{tpu_custom_call.1} parent=87 // pred_check_branch
          %883 = sbr.rel (%p881) target = $region108
        $region107: #{tpu_custom_call.1} parent=87 // pred_region
          %884 = dma.done %s877, 48
        $region108: #{tpu_custom_call.1} parent=87 // pred_fallthru
          _
        %s885 = sand.u32 %s56, 1
        %s886 = scalar_lea.sflag [#allocation13], %s885
        %s887 = sand.u32 %s201, 1
        %s888 = smul.addr %s887, 64
        %s889 = scalar_lea.vmem [#allocation12], %s888
        // Predicated region
        $region109: #{tpu_custom_call.1} parent=87 // pred_check
          %p890 = pneg %p214
        $region110: #{tpu_custom_call.1} parent=87 // pred_check_branch
          %892 = sbr.rel (%p890) target = $region112
        $region111: #{tpu_custom_call.1} parent=87 // pred_region
          %893 = dma.done %s886, 1024
        $region112: #{tpu_custom_call.1} parent=87 // pred_fallthru
          _
        %s894 = sand.u32 %s56, 1
        %s895 = scalar_lea.sflag [#allocation13], %s894
        %s896 = sand.u32 %s227, 1
        %s897 = scalar_lea.vmem [#allocation14], %s896
        // Predicated region
        $region113: #{tpu_custom_call.1} parent=87 // pred_check
          %p898 = pneg %p240
        $region114: #{tpu_custom_call.1} parent=87 // pred_check_branch
          %900 = sbr.rel (%p898) target = $region116
        $region115: #{tpu_custom_call.1} parent=87 // pred_region
          %901 = dma.done %s895, 16
        $region116: #{tpu_custom_call.1} parent=87 // pred_fallthru
          _
        %s902 = sand.u32 %s56, 1
        %s903 = scalar_lea.sflag [#allocation16], %s902
        %s904 = sand.u32 %s253, 1
        %s905 = scalar_lea.vmem [#allocation15], %s904
        // Predicated region
        $region117: #{tpu_custom_call.1} parent=87 // pred_check
          %p906 = pneg %p266
        $region118: #{tpu_custom_call.1} parent=87 // pred_check_branch
          %908 = sbr.rel (%p906) target = $region120
        $region119: #{tpu_custom_call.1} parent=87 // pred_region
          %909 = dma.done %s903, 16
        $region120: #{tpu_custom_call.1} parent=87 // pred_fallthru
          _
        %s910 = sand.u32 %s56, 1
        %s911 = scalar_lea.sflag [#allocation16], %s910
        %s912 = sand.u32 %s279, 1
        %s913 = scalar_lea.vmem [#allocation17], %s912
        // Predicated region
        $region121: #{tpu_custom_call.1} parent=87 // pred_check
          %p914 = pneg %p292
        $region122: #{tpu_custom_call.1} parent=87 // pred_check_branch
          %916 = sbr.rel (%p914) target = $region124
        $region123: #{tpu_custom_call.1} parent=87 // pred_region
          %917 = dma.done %s911, 16
        $region124: #{tpu_custom_call.1} parent=87 // pred_fallthru
          _
        %s918 = sand.u32 %s56, 1
        %s919 = scalar_lea.sflag [#allocation19], %s918
        %s920 = sand.u32 %s305, 1
        %s921 = smul.addr %s920, 1024
        %s922 = scalar_lea.vmem [#allocation18], %s921
        // Predicated region
        $region125: #{tpu_custom_call.1} parent=87 // pred_check
          %p923 = pneg %p318
        $region126: #{tpu_custom_call.1} parent=87 // pred_check_branch
          %925 = sbr.rel (%p923) target = $region128
        $region127: #{tpu_custom_call.1} parent=87 // pred_region
          %926 = dma.done %s919, 16384
        $region128: #{tpu_custom_call.1} parent=87 // pred_fallthru
          _
        %s927 = sand.u32 %s56, 1
        %s928 = scalar_lea.sflag [#allocation19], %s927
        %s929 = sand.u32 %s331, 1
        %s930 = smul.addr %s929, 16
        %s931 = scalar_lea.vmem [#allocation20], %s930
        // Predicated region
        $region129: #{tpu_custom_call.1} parent=87 // pred_check
          %p932 = pneg %p344
        $region130: #{tpu_custom_call.1} parent=87 // pred_check_branch
          %934 = sbr.rel (%p932) target = $region132
        $region131: #{tpu_custom_call.1} parent=87 // pred_region
          %935 = dma.done %s928, 256
        $region132: #{tpu_custom_call.1} parent=87 // pred_fallthru
          _
        %s936 = sand.u32 %s56, 1
        %s937 = scalar_lea.sflag [#allocation22], %s936
        %s938 = sand.u32 %s357, 1
        %s939 = smul.addr %s938, 1024
        %s940 = scalar_lea.vmem [#allocation21], %s939
        // Predicated region
        $region133: #{tpu_custom_call.1} parent=87 // pred_check
          %p941 = pneg %p370
        $region134: #{tpu_custom_call.1} parent=87 // pred_check_branch
          %943 = sbr.rel (%p941) target = $region136
        $region135: #{tpu_custom_call.1} parent=87 // pred_region
          %944 = dma.done %s937, 16384
        $region136: #{tpu_custom_call.1} parent=87 // pred_fallthru
          _
        %s945 = sand.u32 %s56, 1
        %s946 = scalar_lea.sflag [#allocation22], %s945
        %s947 = sand.u32 %s383, 1
        %s948 = scalar_lea.vmem [#allocation23], %s947
        // Predicated region
        $region137: #{tpu_custom_call.1} parent=87 // pred_check
          %p949 = pneg %p396
        $region138: #{tpu_custom_call.1} parent=87 // pred_check_branch
          %951 = sbr.rel (%p949) target = $region140
        $region139: #{tpu_custom_call.1} parent=87 // pred_region
          %952 = dma.done %s946, 16
        $region140: #{tpu_custom_call.1} parent=87 // pred_fallthru
          _
        %s953 = sand.u32 %s56, 1
        %s954 = scalar_lea.sflag [#allocation25], %s953
        %s955 = sand.u32 %s409, 1
        %s956 = scalar_lea.vmem [#allocation24], %s955
        // Predicated region
        $region141: #{tpu_custom_call.1} parent=87 // pred_check
          %p957 = pneg %p422
        $region142: #{tpu_custom_call.1} parent=87 // pred_check_branch
          %959 = sbr.rel (%p957) target = $region144
        $region143: #{tpu_custom_call.1} parent=87 // pred_region
          %960 = dma.done %s954, 16
        $region144: #{tpu_custom_call.1} parent=87 // pred_fallthru
          _
        %s961 = sand.u32 %s56, 1
        %s962 = scalar_lea.sflag [#allocation25], %s961
        %s963 = sand.u32 %s435, 1
        %s964 = scalar_lea.vmem [#allocation26], %s963
        // Predicated region
        $region145: #{tpu_custom_call.1} parent=87 // pred_check
          %p965 = pneg %p448
        $region146: #{tpu_custom_call.1} parent=87 // pred_check_branch
          %967 = sbr.rel (%p965) target = $region148
        $region147: #{tpu_custom_call.1} parent=87 // pred_region
          %968 = dma.done %s962, 16
        $region148: #{tpu_custom_call.1} parent=87 // pred_fallthru
          _
        // Predicated region
        $region149: #{tpu_custom_call.1} parent=87 // pred_check
          %p969 = pneg %p469
        $region150: #{tpu_custom_call.1} parent=87 // pred_check_branch
          %971 = sbr.rel (%p969) target = $region152
        $region151: #{tpu_custom_call.1} parent=87 // pred_region
          %972 = dma.done [#allocation28], 1024
        $region152: #{tpu_custom_call.1} parent=87 // pred_fallthru
          _
        // Predicated region
        $region153: #{tpu_custom_call.1} parent=87 // pred_check
          %p973 = pneg %p490
        $region154: #{tpu_custom_call.1} parent=87 // pred_check_branch
          %975 = sbr.rel (%p973) target = $region156
        $region155: #{tpu_custom_call.1} parent=87 // pred_region
          %976 = dma.done [#allocation28], 16
        $region156: #{tpu_custom_call.1} parent=87 // pred_fallthru
          _
        %s977 = sand.u32 %s76, 1
        %s978 = scalar_lea.sflag [#allocation4], %s977
        %s979 = sand.u32 %s76, 1
        %s980 = smul.addr %s979, 16
        %s981 = scalar_lea.vmem [#allocation3], %s980
        %p982 = pneg %p89
        %p983 = pneg %p86
        %s984 = sand.u32 %s56, 1
        %s985 = scalar_lea.sflag [#allocation7], %s984
        %s986 = sand.u32 %s102, 1
        %s987 = smul.addr %s986, 16
        %s988 = scalar_lea.vmem [#allocation6], %s987
        %p989 = pneg %p115
        %p990 = pneg %p112
        %p991 = pneg %p136
        %p992 = pneg %p133
        %s993 = sand.u32 %s56, 1
        %s994 = scalar_lea.sflag [#allocation10], %s993
        %s995 = sand.u32 %s149, 1
        %s996 = smul.addr %s995, 192
        %s997 = scalar_lea.vmem [#allocation9], %s996
        %p998 = pneg %p162
        %p999 = pneg %p159
        %s1000 = sand.u32 %s56, 1
        %s1001 = scalar_lea.sflag [#allocation10], %s1000
        %s1002 = sand.u32 %s175, 1
        %s1003 = smul.addr %s1002, 3
        %s1004 = scalar_lea.vmem [#allocation11], %s1003
        %p1005 = pneg %p188
        %p1006 = pneg %p185
        %s1007 = sand.u32 %s56, 1
        %s1008 = scalar_lea.sflag [#allocation13], %s1007
        %s1009 = sand.u32 %s201, 1
        %s1010 = smul.addr %s1009, 64
        %s1011 = scalar_lea.vmem [#allocation12], %s1010
        %p1012 = pneg %p214
        %p1013 = pneg %p211
        %s1014 = sand.u32 %s56, 1
        %s1015 = scalar_lea.sflag [#allocation13], %s1014
        %s1016 = sand.u32 %s227, 1
        %s1017 = scalar_lea.vmem [#allocation14], %s1016
        %p1018 = pneg %p240
        %p1019 = pneg %p237
        %s1020 = sand.u32 %s56, 1
        %s1021 = scalar_lea.sflag [#allocation16], %s1020
        %s1022 = sand.u32 %s253, 1
        %s1023 = scalar_lea.vmem [#allocation15], %s1022
        %p1024 = pneg %p266
        %p1025 = pneg %p263
        %s1026 = sand.u32 %s56, 1
        %s1027 = scalar_lea.sflag [#allocation16], %s1026
        %s1028 = sand.u32 %s279, 1
        %s1029 = scalar_lea.vmem [#allocation17], %s1028
        %p1030 = pneg %p292
        %p1031 = pneg %p289
        %s1032 = sand.u32 %s56, 1
        %s1033 = scalar_lea.sflag [#allocation19], %s1032
        %s1034 = sand.u32 %s305, 1
        %s1035 = smul.addr %s1034, 1024
        %s1036 = scalar_lea.vmem [#allocation18], %s1035
        %p1037 = pneg %p318
        %p1038 = pneg %p315
        %s1039 = sand.u32 %s56, 1
        %s1040 = scalar_lea.sflag [#allocation19], %s1039
        %s1041 = sand.u32 %s331, 1
        %s1042 = smul.addr %s1041, 16
        %s1043 = scalar_lea.vmem [#allocation20], %s1042
        %p1044 = pneg %p344
        %p1045 = pneg %p341
        %s1046 = sand.u32 %s56, 1
        %s1047 = scalar_lea.sflag [#allocation22], %s1046
        %s1048 = sand.u32 %s357, 1
        %s1049 = smul.addr %s1048, 1024
        %s1050 = scalar_lea.vmem [#allocation21], %s1049
        %p1051 = pneg %p370
        %p1052 = pneg %p367
        %s1053 = sand.u32 %s56, 1
        %s1054 = scalar_lea.sflag [#allocation22], %s1053
        %s1055 = sand.u32 %s383, 1
        %s1056 = scalar_lea.vmem [#allocation23], %s1055
        %p1057 = pneg %p396
        %p1058 = pneg %p393
        %s1059 = sand.u32 %s56, 1
        %s1060 = scalar_lea.sflag [#allocation25], %s1059
        %s1061 = sand.u32 %s409, 1
        %s1062 = scalar_lea.vmem [#allocation24], %s1061
        %p1063 = pneg %p422
        %p1064 = pneg %p419
        %s1065 = sand.u32 %s56, 1
        %s1066 = scalar_lea.sflag [#allocation25], %s1065
        %s1067 = sand.u32 %s435, 1
        %s1068 = scalar_lea.vmem [#allocation26], %s1067
        %p1069 = pneg %p448
        %p1070 = pneg %p445
        %p1071 = pneg %p469
        %p1072 = pneg %p466
        %p1073 = pneg %p490
        %p1074 = pneg %p487
        %p1075 = pneg %p516
        %p1076 = pneg %p513
        %s1077 = sand.u32 %s503, 1
        %s1078 = scalar_lea.sflag [#allocation5], %s1077
        %s1079 = sand.u32 %s503, 1
        %s1080 = smul.addr %s1079, 8
        %s1081 = scalar_lea.vmem [#allocation30], %s1080
        %p1083 = scmp.eq.s32.totalorder %s61, 0
        // Predicated region
        $region157: #{tpu_custom_call.1} parent=87 // pred_check
          %p1084 = pneg %p1083
        $region158: #{tpu_custom_call.1} parent=87 // pred_check_branch
          %1086 = sbr.rel (%p1084) target = $region160
        $region159: #{tpu_custom_call.1} parent=87 // pred_region
          %v1087 = vld [vmem:[%s849] sm:$0xff]
          %v1088 = vld [vmem:[%s849 + $0x8] sm:$0xff]
          %v1089 = vpack.c.bf16 %v1088, %v1087
          %v1090 = vld [vmem:[#allocation8] sm:$0xf]
          %v1091 = vld [vmem:[#allocation8 + $0x4] sm:$0xf]
          %v1092 = vld [vmem:[%s858] sm:$0xff]
          %v1093 = vld [vmem:[%s858 + $0x8] sm:$0xff]
          %v1096 = vunpack.c.l.b16 %v1090
          %v1097 = vunpack.c.l.b16 %v1091
          %v1098 = vpack.c.b16 %v1097, %v1096
          %vm1100 = vcmask 130048
          %v1102 = vsel %vm1100, %v1089, 0
          %1104 = vmatprep.subr.bf16.mxu0 0
          %1105 = vmatpush1.bf16.msra.mxu0 %v1098
          %1106 = vmatprep.subr.bf16.mxu0 0
          %1107 = vmatpush1.bf16.msra.mxu0 0
          %1108 = vmatprep.subr.bf16.mxu0 0
          %1109 = vmatpush1.bf16.msra.mxu0 0
          %1110 = vmatprep.subr.bf16.mxu0 0
          %1111 = vmatpush1.bf16.msra.mxu0 0
          %1112 = vmatprep.subr.bf16.mxu0 0
          %1113 = vmatpush1.bf16.msra.mxu0 0
          %1114 = vmatprep.subr.bf16.mxu0 0
          %1115 = vmatpush1.bf16.msra.mxu0 0
          %1116 = vmatprep.subr.bf16.mxu0 0
          %1117 = vmatpush1.bf16.msra.mxu0 0
          %1118 = vmatprep.subr.bf16.mxu0 0
          %1119 = vmatpush1.bf16.msra.mxu0 0
          %1120 = vmatprep.subr.bf16.mxu0 0
          %1121 = vmatpush1.bf16.msra.mxu0 0
          %1122 = vmatprep.subr.bf16.mxu0 0
          %1123 = vmatpush1.bf16.msra.mxu0 0
          %1124 = vmatprep.subr.bf16.mxu0 0
          %1125 = vmatpush1.bf16.msra.mxu0 0
          %1126 = vmatprep.subr.bf16.mxu0 0
          %1127 = vmatpush1.bf16.msra.mxu0 0
          %1128 = vmatprep.subr.bf16.mxu0 0
          %1129 = vmatpush1.bf16.msra.mxu0 0
          %1130 = vmatprep.subr.bf16.mxu0 0
          %1131 = vmatpush1.bf16.msra.mxu0 0
          %1132 = vmatprep.subr.bf16.mxu0 0
          %1133 = vmatpush1.bf16.msra.mxu0 0
          %1134 = vmatprep.subr.bf16.mxu0 0
          %1135 = vmatpush1.bf16.msra.mxu0 0
          %1136 = vmatprep.mubr.bf16.mxu0 0
          %1137 = vmatmul.mubr.bf16.gmra.mrb[0].mxu0 %v1102
          %v1138 = vpop.f32.mrb[0].mxu0
          %v1139 = vadd.f32 %v1092, %v1138
          %v1140 = vpop.f32.mrb[0].mxu0
          %v1141 = vpop.f32.mrb[0].mxu0
          %v1142 = vadd.f32 %v1093, %v1141
          %v1143 = vpop.f32.mrb[0].mxu0
          %1144 = vdwg.mxu0
          %1145 = vst [vmem:[#allocation2] sm:$0xff] %v1139
          %1146 = vst [vmem:[#allocation2 + $0x8] sm:$0xff] %v1142
        $region160: #{tpu_custom_call.1} parent=87 // pred_fallthru
          _
        %v1147 = vld [vmem:[#allocation2] sm:$0xff]
        %v1148 = vld [vmem:[#allocation2 + $0x8] sm:$0xff]
        %v1149 = vlaneseq
        %v1150 = vand.u32 %v1149, 127
        %vm1151 = vcmp.lt.s32.totalorder %v1150, 9
        %v1152 = vsel %vm1151, 0.0, -1e+30
        %v1153 = vpack.c.bf16 %v1148, %v1147
        %v1154 = vld [vmem:[%s871] sm:$0xff]
        %v1155 = vld [vmem:[%s871 + $0x8] sm:$0xf]
        %v1156 = vld [vmem:[%s871 + $0xc] sm:$0xff]
        %v1157 = vld [vmem:[%s871 + $0x14] sm:$0xf]
        %v1158 = vld [vmem:[%s871 + $0x18] sm:$0xff]
        %v1159 = vld [vmem:[%s871 + $0x20] sm:$0xf]
        %v1160 = vld [vmem:[%s871 + $0x24] sm:$0xff]
        %v1161 = vld [vmem:[%s871 + $0x2c] sm:$0xf]
        %v1162 = vld [vmem:[%s871 + $0x30] sm:$0xff]
        %v1163 = vld [vmem:[%s871 + $0x38] sm:$0xf]
        %v1164 = vld [vmem:[%s871 + $0x3c] sm:$0xff]
        %v1165 = vld [vmem:[%s871 + $0x44] sm:$0xf]
        %v1166 = vld [vmem:[%s871 + $0x48] sm:$0xff]
        %v1167 = vld [vmem:[%s871 + $0x50] sm:$0xf]
        %v1168 = vld [vmem:[%s871 + $0x54] sm:$0xff]
        %v1169 = vld [vmem:[%s871 + $0x5c] sm:$0xf]
        %v1170 = vld [vmem:[%s871 + $0x60] sm:$0xff]
        %v1171 = vld [vmem:[%s871 + $0x68] sm:$0xf]
        %v1172 = vld [vmem:[%s871 + $0x6c] sm:$0xff]
        %v1173 = vld [vmem:[%s871 + $0x74] sm:$0xf]
        %v1174 = vld [vmem:[%s871 + $0x78] sm:$0xff]
        %v1175 = vld [vmem:[%s871 + $0x80] sm:$0xf]
        %v1176 = vld [vmem:[%s871 + $0x84] sm:$0xff]
        %v1177 = vld [vmem:[%s871 + $0x8c] sm:$0xf]
        %v1178 = vld [vmem:[%s871 + $0x90] sm:$0xff]
        %v1179 = vld [vmem:[%s871 + $0x98] sm:$0xf]
        %v1180 = vld [vmem:[%s871 + $0x9c] sm:$0xff]
        %v1181 = vld [vmem:[%s871 + $0xa4] sm:$0xf]
        %v1182 = vld [vmem:[%s871 + $0xa8] sm:$0xff]
        %v1183 = vld [vmem:[%s871 + $0xb0] sm:$0xf]
        %v1184 = vld [vmem:[%s871 + $0xb4] sm:$0xff]
        %v1185 = vld [vmem:[%s871 + $0xbc] sm:$0xf]
        %v1186 = vld [vmem:[%s880] sm:$0x7]
        %v1188 = vlaneseq
        %v1189 = vshrl.u32 %v1188, 7
        %v1190 = vsub.s32 0, %v1189
        %v1191 = vrot.slane %v1186, %v1190
        %v1192 = vlaneseq
        %v1193 = vshrl.u32 %v1192, 7
        %v1194 = vsub.s32 1, %v1193
        %v1195 = vrot.slane %v1186, %v1194
        %v1196 = vlaneseq
        %v1197 = vshrl.u32 %v1196, 7
        %v1198 = vsub.s32 2, %v1197
        %v1199 = vrot.slane %v1186, %v1198
        %v1235 = vunpack.c.l.b16 %v1154
        %v1236 = vunpack.c.h.b16 %v1154
        %v1237 = vunpack.c.l.b16 %v1155
        %v1238 = vunpack.c.l.b16 %v1156
        %v1239 = vunpack.c.h.b16 %v1156
        %v1240 = vunpack.c.l.b16 %v1157
        %v1241 = vunpack.c.l.b16 %v1158
        %v1242 = vunpack.c.h.b16 %v1158
        %v1243 = vunpack.c.l.b16 %v1159
        %v1244 = vunpack.c.l.b16 %v1160
        %v1245 = vunpack.c.h.b16 %v1160
        %v1246 = vunpack.c.l.b16 %v1161
        %v1247 = vunpack.c.l.b16 %v1162
        %v1248 = vunpack.c.h.b16 %v1162
        %v1249 = vunpack.c.l.b16 %v1163
        %v1250 = vunpack.c.l.b16 %v1164
        %v1251 = vunpack.c.h.b16 %v1164
        %v1252 = vunpack.c.l.b16 %v1165
        %v1253 = vunpack.c.l.b16 %v1166
        %v1254 = vunpack.c.h.b16 %v1166
        %v1255 = vunpack.c.l.b16 %v1167
        %v1256 = vunpack.c.l.b16 %v1168
        %v1257 = vunpack.c.h.b16 %v1168
        %v1258 = vunpack.c.l.b16 %v1169
        %v1259 = vunpack.c.l.b16 %v1170
        %v1260 = vunpack.c.h.b16 %v1170
        %v1261 = vunpack.c.l.b16 %v1171
        %v1262 = vunpack.c.l.b16 %v1172
        %v1263 = vunpack.c.h.b16 %v1172
        %v1264 = vunpack.c.l.b16 %v1173
        %v1265 = vunpack.c.l.b16 %v1174
        %v1266 = vunpack.c.h.b16 %v1174
        %v1267 = vunpack.c.l.b16 %v1175
        %v1268 = vunpack.c.l.b16 %v1176
        %v1269 = vunpack.c.h.b16 %v1176
        %v1270 = vunpack.c.l.b16 %v1177
        %v1271 = vunpack.c.l.b16 %v1178
        %v1272 = vunpack.c.h.b16 %v1178
        %v1273 = vunpack.c.l.b16 %v1179
        %v1274 = vunpack.c.l.b16 %v1180
        %v1275 = vunpack.c.h.b16 %v1180
        %v1276 = vunpack.c.l.b16 %v1181
        %v1277 = vunpack.c.l.b16 %v1182
        %v1278 = vunpack.c.h.b16 %v1182
        %v1279 = vunpack.c.l.b16 %v1183
        %v1280 = vunpack.c.l.b16 %v1184
        %v1281 = vunpack.c.h.b16 %v1184
        %v1282 = vunpack.c.l.b16 %v1185
        %v1283 = vpack.c.b16 %v1238, %v1235
        %v1284 = vpack.c.b16 %v1239, %v1236
        %v1285 = vpack.c.b16 %v1240, %v1237
        %v1286 = vpack.c.b16 %v1244, %v1241
        %v1287 = vpack.c.b16 %v1245, %v1242
        %v1288 = vpack.c.b16 %v1246, %v1243
        %v1289 = vpack.c.b16 %v1250, %v1247
        %v1290 = vpack.c.b16 %v1251, %v1248
        %v1291 = vpack.c.b16 %v1252, %v1249
        %v1292 = vpack.c.b16 %v1256, %v1253
        %v1293 = vpack.c.b16 %v1257, %v1254
        %v1294 = vpack.c.b16 %v1258, %v1255
        %v1295 = vpack.c.b16 %v1262, %v1259
        %v1296 = vpack.c.b16 %v1263, %v1260
        %v1297 = vpack.c.b16 %v1264, %v1261
        %v1298 = vpack.c.b16 %v1268, %v1265
        %v1299 = vpack.c.b16 %v1269, %v1266
        %v1300 = vpack.c.b16 %v1270, %v1267
        %v1301 = vpack.c.b16 %v1274, %v1271
        %v1302 = vpack.c.b16 %v1275, %v1272
        %v1303 = vpack.c.b16 %v1276, %v1273
        %v1304 = vpack.c.b16 %v1280, %v1277
        %v1305 = vpack.c.b16 %v1281, %v1278
        %v1306 = vpack.c.b16 %v1282, %v1279
        %1331 = vmatprep.subr.bf16.mxu0 %v1284
        %1332 = vmatpush1.bf16.msra.mxu0 %v1283
        %1333 = vmatprep.subr.bf16.mxu0 %v1287
        %1334 = vmatpush1.bf16.msra.mxu0 %v1286
        %1335 = vmatprep.subr.bf16.mxu0 %v1290
        %1336 = vmatpush1.bf16.msra.mxu0 %v1289
        %1337 = vmatprep.subr.bf16.mxu0 %v1293
        %1338 = vmatpush1.bf16.msra.mxu0 %v1292
        %1339 = vmatprep.subr.bf16.mxu0 %v1296
        %1340 = vmatpush1.bf16.msra.mxu0 %v1295
        %1341 = vmatprep.subr.bf16.mxu0 %v1299
        %1342 = vmatpush1.bf16.msra.mxu0 %v1298
        %1343 = vmatprep.subr.bf16.mxu0 %v1302
        %1344 = vmatpush1.bf16.msra.mxu0 %v1301
        %1345 = vmatprep.subr.bf16.mxu0 %v1305
        %1346 = vmatpush1.bf16.msra.mxu0 %v1304
        %1347 = vmatprep.subr.bf16.mxu0 0
        %1348 = vmatpush1.bf16.msra.mxu0 0
        %1349 = vmatprep.subr.bf16.mxu0 0
        %1350 = vmatpush1.bf16.msra.mxu0 0
        %1351 = vmatprep.subr.bf16.mxu0 0
        %1352 = vmatpush1.bf16.msra.mxu0 0
        %1353 = vmatprep.subr.bf16.mxu0 0
        %1354 = vmatpush1.bf16.msra.mxu0 0
        %1355 = vmatprep.subr.bf16.mxu0 0
        %1356 = vmatpush1.bf16.msra.mxu0 0
        %1357 = vmatprep.subr.bf16.mxu0 0
        %1358 = vmatpush1.bf16.msra.mxu0 0
        %1359 = vmatprep.subr.bf16.mxu0 0
        %1360 = vmatpush1.bf16.msra.mxu0 0
        %1361 = vmatprep.subr.bf16.mxu0 0
        %1362 = vmatpush1.bf16.msra.mxu0 0
        %1363 = vmatprep.mubr.bf16.mxu0 0
        %1364 = vmatmul.mubr.bf16.gmra.mrb[0].mxu0 %v1153
        %v1365 = vpop.f32.mrb[0].mxu0
        %v1366 = vadd.f32 %v1191, %v1365
        %v1367 = vpop.f32.mrb[0].mxu0
        %v1368 = vadd.f32 %v1195, %v1367
        %v1369 = vpop.f32.mrb[0].mxu0
        %v1370 = vadd.f32 %v1191, %v1369
        %v1371 = vpop.f32.mrb[0].mxu0
        %v1372 = vadd.f32 %v1195, %v1371
        %1373 = vdwg.mxu0
        %1374 = vmatprep.subr.bf16.mxu0 0
        %1375 = vmatpush1.bf16.msra.mxu0 %v1285
        %1376 = vmatprep.subr.bf16.mxu0 0
        %1377 = vmatpush1.bf16.msra.mxu0 %v1288
        %1378 = vmatprep.subr.bf16.mxu0 0
        %1379 = vmatpush1.bf16.msra.mxu0 %v1291
        %1380 = vmatprep.subr.bf16.mxu0 0
        %1381 = vmatpush1.bf16.msra.mxu0 %v1294
        %1382 = vmatprep.subr.bf16.mxu0 0
        %1383 = vmatpush1.bf16.msra.mxu0 %v1297
        %1384 = vmatprep.subr.bf16.mxu0 0
        %1385 = vmatpush1.bf16.msra.mxu0 %v1300
        %1386 = vmatprep.subr.bf16.mxu0 0
        %1387 = vmatpush1.bf16.msra.mxu0 %v1303
        %1388 = vmatprep.subr.bf16.mxu0 0
        %1389 = vmatpush1.bf16.msra.mxu0 %v1306
        %1390 = vmatprep.subr.bf16.mxu0 0
        %1391 = vmatpush1.bf16.msra.mxu0 0
        %1392 = vmatprep.subr.bf16.mxu0 0
        %1393 = vmatpush1.bf16.msra.mxu0 0
        %1394 = vmatprep.subr.bf16.mxu0 0
        %1395 = vmatpush1.bf16.msra.mxu0 0
        %1396 = vmatprep.subr.bf16.mxu0 0
        %1397 = vmatpush1.bf16.msra.mxu0 0
        %1398 = vmatprep.subr.bf16.mxu0 0
        %1399 = vmatpush1.bf16.msra.mxu0 0
        %1400 = vmatprep.subr.bf16.mxu0 0
        %1401 = vmatpush1.bf16.msra.mxu0 0
        %1402 = vmatprep.subr.bf16.mxu0 0
        %1403 = vmatpush1.bf16.msra.mxu0 0
        %1404 = vmatprep.subr.bf16.mxu0 0
        %1405 = vmatpush1.bf16.msra.mxu0 0
        %1406 = vmatprep.mubr.bf16.mxu0 0
        %1407 = vmatmul.mubr.bf16.gmra.mrb[0].mxu0 %v1153
        %v1408 = vpop.f32.mrb[0].mxu0
        %v1409 = vadd.f32 %v1199, %v1408
        %v1410 = vpop.f32.mrb[0].mxu0
        %v1411 = vpop.f32.mrb[0].mxu0
        %v1412 = vadd.f32 %v1199, %v1411
        %v1413 = vpop.f32.mrb[0].mxu0
        %1414 = vdwg.mxu0
        %v1415 = vpack.c.bf16 %v1370, %v1366
        %v1416 = vpack.c.bf16 %v1372, %v1368
        %v1417 = vpack.c.bf16 %v1412, %v1409
        %vm1418 = vcmask 261120
        %v1420 = vsel %vm1418, %v1415, 0
        %v1423 = vsel %vm1418, %v1416, 0
        %1425 = vmatprep.subr.bf16.mxu0 0
        %1426 = vmatpush1.bf16.xpose.msra.mxu0 %v1423
        %1427 = vmatprep.subr.bf16.mxu0 0
        %1428 = vmatpush1.bf16.xpose.msra.mxu0 0
        %1429 = vmatprep.subr.bf16.mxu0 0
        %1430 = vmatpush1.bf16.xpose.msra.mxu0 0
        %1431 = vmatprep.subr.bf16.mxu0 0
        %1432 = vmatpush1.bf16.xpose.msra.mxu0 0
        %1433 = vmatprep.subr.bf16.mxu0 0
        %1434 = vmatpush1.bf16.xpose.msra.mxu0 0
        %1435 = vmatprep.subr.bf16.mxu0 0
        %1436 = vmatpush1.bf16.xpose.msra.mxu0 0
        %1437 = vmatprep.subr.bf16.mxu0 0
        %1438 = vmatpush1.bf16.xpose.msra.mxu0 0
        %1439 = vmatprep.subr.bf16.mxu0 0
        %1440 = vmatpush1.bf16.xpose.msra.mxu0 0
        %1441 = vmatprep.subr.bf16.mxu0 0
        %1442 = vmatpush1.bf16.xpose.msra.mxu0 0
        %1443 = vmatprep.subr.bf16.mxu0 0
        %1444 = vmatpush1.bf16.xpose.msra.mxu0 0
        %1445 = vmatprep.subr.bf16.mxu0 0
        %1446 = vmatpush1.bf16.xpose.msra.mxu0 0
        %1447 = vmatprep.subr.bf16.mxu0 0
        %1448 = vmatpush1.bf16.xpose.msra.mxu0 0
        %1449 = vmatprep.subr.bf16.mxu0 0
        %1450 = vmatpush1.bf16.xpose.msra.mxu0 0
        %1451 = vmatprep.subr.bf16.mxu0 0
        %1452 = vmatpush1.bf16.xpose.msra.mxu0 0
        %1453 = vmatprep.subr.bf16.mxu0 0
        %1454 = vmatpush1.bf16.xpose.msra.mxu0 0
        %1455 = vmatprep.subr.bf16.mxu0 0
        %1456 = vmatpush1.bf16.xpose.msra.mxu0 0
        %1457 = vmatprep.mubr.bf16.mxu0 0
        %1458 = vmatmul.mubr.bf16.gmra.mrb[0].mxu0 %v1420
        %v1459 = vpop.f32.mrb[0].mxu0
        %v1460 = vadd.f32 %v1152, %v1459
        %v1461 = vpop.f32.mrb[0].mxu0
        %v1462 = vpop.f32.mrb[0].mxu0
        %v1463 = vadd.f32 %v1152, %v1462
        %v1464 = vpop.f32.mrb[0].mxu0
        %1465 = vdwg.mxu0
        %vm1466 = vcmask 130048
        %v1467 = vsel %vm1466, %v1460, -inf
        %1468 = vmax.xlane.f32.xlu0 %v1467
        %v1469 = vpop.xlane.xlu0 %1468
        %v1470 = vsel %vm1466, %v1463, -inf
        %1471 = vmax.xlane.f32.xlu0 %v1470
        %v1472 = vpop.xlane.xlu0 %1471
        %v1473 = vsub.f32 %v1460, %v1469
        %v1474 = vsub.f32 %v1463, %v1472
        %v1475 = vmul.f32 %v1473, 1.442695
        %v1476 = vpow.pop %v1475
        %v1477 = vmul.f32 %v1474, 1.442695
        %v1478 = vpow.pop %v1477
        %v1479 = vsel %vm1466, %v1476, 0.0
        %1480 = vadd.xlane.f32.xlu0 %v1479
        %v1481 = vpop.xlane.xlu0 %1480
        %v1482 = vsel %vm1466, %v1478, 0.0
        %1483 = vadd.xlane.f32.xlu0 %v1482
        %v1484 = vpop.xlane.xlu0 %1483
        %v1485 = vpack.c.bf16 %v1478, %v1476
        %v1487 = vsel %vm1466, %v1485, 0
        %1489 = vmatprep.subr.bf16.mxu0 0
        %1490 = vmatpush1.bf16.msra.mxu0 %v1417
        %1491 = vmatprep.subr.bf16.mxu0 0
        %1492 = vmatpush1.bf16.msra.mxu0 0
        %1493 = vmatprep.subr.bf16.mxu0 0
        %1494 = vmatpush1.bf16.msra.mxu0 0
        %1495 = vmatprep.subr.bf16.mxu0 0
        %1496 = vmatpush1.bf16.msra.mxu0 0
        %1497 = vmatprep.subr.bf16.mxu0 0
        %1498 = vmatpush1.bf16.msra.mxu0 0
        %1499 = vmatprep.subr.bf16.mxu0 0
        %1500 = vmatpush1.bf16.msra.mxu0 0
        %1501 = vmatprep.subr.bf16.mxu0 0
        %1502 = vmatpush1.bf16.msra.mxu0 0
        %1503 = vmatprep.subr.bf16.mxu0 0
        %1504 = vmatpush1.bf16.msra.mxu0 0
        %1505 = vmatprep.subr.bf16.mxu0 0
        %1506 = vmatpush1.bf16.msra.mxu0 0
        %1507 = vmatprep.subr.bf16.mxu0 0
        %1508 = vmatpush1.bf16.msra.mxu0 0
        %1509 = vmatprep.subr.bf16.mxu0 0
        %1510 = vmatpush1.bf16.msra.mxu0 0
        %1511 = vmatprep.subr.bf16.mxu0 0
        %1512 = vmatpush1.bf16.msra.mxu0 0
        %1513 = vmatprep.subr.bf16.mxu0 0
        %1514 = vmatpush1.bf16.msra.mxu0 0
        %1515 = vmatprep.subr.bf16.mxu0 0
        %1516 = vmatpush1.bf16.msra.mxu0 0
        %1517 = vmatprep.subr.bf16.mxu0 0
        %1518 = vmatpush1.bf16.msra.mxu0 0
        %1519 = vmatprep.subr.bf16.mxu0 0
        %1520 = vmatpush1.bf16.msra.mxu0 0
        %1521 = vmatprep.mubr.bf16.mxu0 0
        %1522 = vmatmul.mubr.bf16.gmra.mrb[0].mxu0 %v1487
        %v1523 = vpop.f32.mrb[0].mxu0
        %v1524 = vadd.f32 0.0, %v1523
        %v1525 = vpop.f32.mrb[0].mxu0
        %v1526 = vpop.f32.mrb[0].mxu0
        %v1527 = vadd.f32 0.0, %v1526
        %v1528 = vpop.f32.mrb[0].mxu0
        %1529 = vdwg.mxu0
        %v1530 = vrcp.pop %v1481
        %v1531 = vmul.f32 %v1524, %v1530
        %v1532 = vrcp.pop %v1484
        %v1533 = vmul.f32 %v1527, %v1532
        %v1534 = vpack.c.bf16 %v1533, %v1531
        %v1535 = vld [vmem:[%s889] sm:$0xf]
        %v1536 = vld [vmem:[%s889 + $0x4] sm:$0xf]
        %v1537 = vld [vmem:[%s889 + $0x8] sm:$0xf]
        %v1538 = vld [vmem:[%s889 + $0xc] sm:$0xf]
        %1540 = vrot.lane.b32.xlu0 %v1415, 96
        %v1541 = vpop.permute.xlu0 %1540
        %1543 = vrot.lane.b32.xlu0 %v1416, 96
        %v1544 = vpop.permute.xlu0 %1543
        %v1546 = vsel %vm1418, %v1541, 0
        %v1549 = vsel %vm1418, %v1544, 0
        %1551 = vmatprep.subr.bf16.mxu0 0
        %1552 = vmatpush1.bf16.xpose.msra.mxu0 %v1549
        %1553 = vmatprep.subr.bf16.mxu0 0
        %1554 = vmatpush1.bf16.xpose.msra.mxu0 0
        %1555 = vmatprep.subr.bf16.mxu0 0
        %1556 = vmatpush1.bf16.xpose.msra.mxu0 0
        %1557 = vmatprep.subr.bf16.mxu0 0
        %1558 = vmatpush1.bf16.xpose.msra.mxu0 0
        %1559 = vmatprep.subr.bf16.mxu0 0
        %1560 = vmatpush1.bf16.xpose.msra.mxu0 0
        %1561 = vmatprep.subr.bf16.mxu0 0
        %1562 = vmatpush1.bf16.xpose.msra.mxu0 0
        %1563 = vmatprep.subr.bf16.mxu0 0
        %1564 = vmatpush1.bf16.xpose.msra.mxu0 0
        %1565 = vmatprep.subr.bf16.mxu0 0
        %1566 = vmatpush1.bf16.xpose.msra.mxu0 0
        %1567 = vmatprep.subr.bf16.mxu0 0
        %1568 = vmatpush1.bf16.xpose.msra.mxu0 0
        %1569 = vmatprep.subr.bf16.mxu0 0
        %1570 = vmatpush1.bf16.xpose.msra.mxu0 0
        %1571 = vmatprep.subr.bf16.mxu0 0
        %1572 = vmatpush1.bf16.xpose.msra.mxu0 0
        %1573 = vmatprep.subr.bf16.mxu0 0
        %1574 = vmatpush1.bf16.xpose.msra.mxu0 0
        %1575 = vmatprep.subr.bf16.mxu0 0
        %1576 = vmatpush1.bf16.xpose.msra.mxu0 0
        %1577 = vmatprep.subr.bf16.mxu0 0
        %1578 = vmatpush1.bf16.xpose.msra.mxu0 0
        %1579 = vmatprep.subr.bf16.mxu0 0
        %1580 = vmatpush1.bf16.xpose.msra.mxu0 0
        %1581 = vmatprep.subr.bf16.mxu0 0
        %1582 = vmatpush1.bf16.xpose.msra.mxu0 0
        %1583 = vmatprep.mubr.bf16.mxu0 0
        %1584 = vmatmul.mubr.bf16.gmra.mrb[0].mxu0 %v1546
        %v1585 = vpop.f32.mrb[0].mxu0
        %v1586 = vadd.f32 %v1152, %v1585
        %v1587 = vpop.f32.mrb[0].mxu0
        %v1588 = vpop.f32.mrb[0].mxu0
        %v1589 = vadd.f32 %v1152, %v1588
        %v1590 = vpop.f32.mrb[0].mxu0
        %1591 = vdwg.mxu0
        %v1592 = vsel %vm1466, %v1586, -inf
        %1593 = vmax.xlane.f32.xlu0 %v1592
        %v1594 = vpop.xlane.xlu0 %1593
        %v1595 = vsel %vm1466, %v1589, -inf
        %1596 = vmax.xlane.f32.xlu0 %v1595
        %v1597 = vpop.xlane.xlu0 %1596
        %v1598 = vsub.f32 %v1586, %v1594
        %v1599 = vsub.f32 %v1589, %v1597
        %v1600 = vmul.f32 %v1598, 1.442695
        %v1601 = vpow.pop %v1600
        %v1602 = vmul.f32 %v1599, 1.442695
        %v1603 = vpow.pop %v1602
        %v1604 = vsel %vm1466, %v1601, 0.0
        %1605 = vadd.xlane.f32.xlu0 %v1604
        %v1606 = vpop.xlane.xlu0 %1605
        %v1607 = vsel %vm1466, %v1603, 0.0
        %1608 = vadd.xlane.f32.xlu0 %v1607
        %v1609 = vpop.xlane.xlu0 %1608
        %v1610 = vpack.c.bf16 %v1603, %v1601
        %1612 = vrot.lane.b32.xlu0 %v1417, 96
        %v1613 = vpop.permute.xlu0 %1612
        %v1616 = vsel %vm1466, %v1610, 0
        %1618 = vmatprep.subr.bf16.mxu0 0
        %1619 = vmatpush1.bf16.msra.mxu0 %v1613
        %1620 = vmatprep.subr.bf16.mxu0 0
        %1621 = vmatpush1.bf16.msra.mxu0 0
        %1622 = vmatprep.subr.bf16.mxu0 0
        %1623 = vmatpush1.bf16.msra.mxu0 0
        %1624 = vmatprep.subr.bf16.mxu0 0
        %1625 = vmatpush1.bf16.msra.mxu0 0
        %1626 = vmatprep.subr.bf16.mxu0 0
        %1627 = vmatpush1.bf16.msra.mxu0 0
        %1628 = vmatprep.subr.bf16.mxu0 0
        %1629 = vmatpush1.bf16.msra.mxu0 0
        %1630 = vmatprep.subr.bf16.mxu0 0
        %1631 = vmatpush1.bf16.msra.mxu0 0
        %1632 = vmatprep.subr.bf16.mxu0 0
        %1633 = vmatpush1.bf16.msra.mxu0 0
        %1634 = vmatprep.subr.bf16.mxu0 0
        %1635 = vmatpush1.bf16.msra.mxu0 0
        %1636 = vmatprep.subr.bf16.mxu0 0
        %1637 = vmatpush1.bf16.msra.mxu0 0
        %1638 = vmatprep.subr.bf16.mxu0 0
        %1639 = vmatpush1.bf16.msra.mxu0 0
        %1640 = vmatprep.subr.bf16.mxu0 0
        %1641 = vmatpush1.bf16.msra.mxu0 0
        %1642 = vmatprep.subr.bf16.mxu0 0
        %1643 = vmatpush1.bf16.msra.mxu0 0
        %1644 = vmatprep.subr.bf16.mxu0 0
        %1645 = vmatpush1.bf16.msra.mxu0 0
        %1646 = vmatprep.subr.bf16.mxu0 0
        %1647 = vmatpush1.bf16.msra.mxu0 0
        %1648 = vmatprep.subr.bf16.mxu0 0
        %1649 = vmatpush1.bf16.msra.mxu0 0
        %1650 = vmatprep.mubr.bf16.mxu0 0
        %1651 = vmatmul.mubr.bf16.gmra.mrb[0].mxu0 %v1616
        %v1652 = vpop.f32.mrb[0].mxu0
        %v1653 = vadd.f32 0.0, %v1652
        %v1654 = vpop.f32.mrb[0].mxu0
        %v1655 = vpop.f32.mrb[0].mxu0
        %v1656 = vadd.f32 0.0, %v1655
        %v1657 = vpop.f32.mrb[0].mxu0
        %1658 = vdwg.mxu0
        %v1659 = vrcp.pop %v1606
        %v1660 = vmul.f32 %v1653, %v1659
        %v1661 = vrcp.pop %v1609
        %v1662 = vmul.f32 %v1656, %v1661
        %v1663 = vpack.c.bf16 %v1662, %v1660
        %v1664 = vld [vmem:[%s889 + $0x10] sm:$0xf]
        %v1665 = vld [vmem:[%s889 + $0x14] sm:$0xf]
        %v1666 = vld [vmem:[%s889 + $0x18] sm:$0xf]
        %v1667 = vld [vmem:[%s889 + $0x1c] sm:$0xf]
        %v1672 = vunpack.c.l.b16 %v1664
        %v1673 = vunpack.c.l.b16 %v1665
        %v1674 = vunpack.c.l.b16 %v1666
        %v1675 = vunpack.c.l.b16 %v1667
        %v1676 = vpack.c.b16 %v1673, %v1672
        %v1677 = vpack.c.b16 %v1675, %v1674
        %v1681 = vsel %vm1418, %v1663, 0
        %1683 = vmatprep.subr.bf16.mxu0 0
        %1684 = vmatpush1.bf16.msra.mxu0 %v1676
        %1685 = vmatprep.subr.bf16.mxu0 0
        %1686 = vmatpush1.bf16.msra.mxu0 %v1677
        %1687 = vmatprep.subr.bf16.mxu0 0
        %1688 = vmatpush1.bf16.msra.mxu0 0
        %1689 = vmatprep.subr.bf16.mxu0 0
        %1690 = vmatpush1.bf16.msra.mxu0 0
        %1691 = vmatprep.subr.bf16.mxu0 0
        %1692 = vmatpush1.bf16.msra.mxu0 0
        %1693 = vmatprep.subr.bf16.mxu0 0
        %1694 = vmatpush1.bf16.msra.mxu0 0
        %1695 = vmatprep.subr.bf16.mxu0 0
        %1696 = vmatpush1.bf16.msra.mxu0 0
        %1697 = vmatprep.subr.bf16.mxu0 0
        %1698 = vmatpush1.bf16.msra.mxu0 0
        %1699 = vmatprep.subr.bf16.mxu0 0
        %1700 = vmatpush1.bf16.msra.mxu0 0
        %1701 = vmatprep.subr.bf16.mxu0 0
        %1702 = vmatpush1.bf16.msra.mxu0 0
        %1703 = vmatprep.subr.bf16.mxu0 0
        %1704 = vmatpush1.bf16.msra.mxu0 0
        %1705 = vmatprep.subr.bf16.mxu0 0
        %1706 = vmatpush1.bf16.msra.mxu0 0
        %1707 = vmatprep.subr.bf16.mxu0 0
        %1708 = vmatpush1.bf16.msra.mxu0 0
        %1709 = vmatprep.subr.bf16.mxu0 0
        %1710 = vmatpush1.bf16.msra.mxu0 0
        %1711 = vmatprep.subr.bf16.mxu0 0
        %1712 = vmatpush1.bf16.msra.mxu0 0
        %1713 = vmatprep.subr.bf16.mxu0 0
        %1714 = vmatpush1.bf16.msra.mxu0 0
        %1715 = vmatprep.mubr.bf16.mxu0 0
        %1716 = vmatmul.mubr.bf16.gmra.mrb[0].mxu0 %v1681
        %v1717 = vpop.f32.mrb[0].mxu0
        %v1718 = vadd.f32 0.0, %v1717
        %v1719 = vpop.f32.mrb[0].mxu0
        %v1720 = vpop.f32.mrb[0].mxu0
        %v1721 = vadd.f32 0.0, %v1720
        %v1722 = vpop.f32.mrb[0].mxu0
        %1723 = vdwg.mxu0
        %v1728 = vunpack.c.l.b16 %v1535
        %v1729 = vunpack.c.l.b16 %v1536
        %v1730 = vunpack.c.l.b16 %v1537
        %v1731 = vunpack.c.l.b16 %v1538
        %v1732 = vpack.c.b16 %v1729, %v1728
        %v1733 = vpack.c.b16 %v1731, %v1730
        %v1737 = vsel %vm1418, %v1534, 0
        %1739 = vmatprep.subr.bf16.mxu0 0
        %1740 = vmatpush1.bf16.msra.mxu0 %v1732
        %1741 = vmatprep.subr.bf16.mxu0 0
        %1742 = vmatpush1.bf16.msra.mxu0 %v1733
        %1743 = vmatprep.subr.bf16.mxu0 0
        %1744 = vmatpush1.bf16.msra.mxu0 0
        %1745 = vmatprep.subr.bf16.mxu0 0
        %1746 = vmatpush1.bf16.msra.mxu0 0
        %1747 = vmatprep.subr.bf16.mxu0 0
        %1748 = vmatpush1.bf16.msra.mxu0 0
        %1749 = vmatprep.subr.bf16.mxu0 0
        %1750 = vmatpush1.bf16.msra.mxu0 0
        %1751 = vmatprep.subr.bf16.mxu0 0
        %1752 = vmatpush1.bf16.msra.mxu0 0
        %1753 = vmatprep.subr.bf16.mxu0 0
        %1754 = vmatpush1.bf16.msra.mxu0 0
        %1755 = vmatprep.subr.bf16.mxu0 0
        %1756 = vmatpush1.bf16.msra.mxu0 0
        %1757 = vmatprep.subr.bf16.mxu0 0
        %1758 = vmatpush1.bf16.msra.mxu0 0
        %1759 = vmatprep.subr.bf16.mxu0 0
        %1760 = vmatpush1.bf16.msra.mxu0 0
        %1761 = vmatprep.subr.bf16.mxu0 0
        %1762 = vmatpush1.bf16.msra.mxu0 0
        %1763 = vmatprep.subr.bf16.mxu0 0
        %1764 = vmatpush1.bf16.msra.mxu0 0
        %1765 = vmatprep.subr.bf16.mxu0 0
        %1766 = vmatpush1.bf16.msra.mxu0 0
        %1767 = vmatprep.subr.bf16.mxu0 0
        %1768 = vmatpush1.bf16.msra.mxu0 0
        %1769 = vmatprep.subr.bf16.mxu0 0
        %1770 = vmatpush1.bf16.msra.mxu0 0
        %1771 = vmatprep.mubr.bf16.mxu0 0
        %1772 = vmatmul.mubr.bf16.gmra.mrb[0].mxu0 %v1737
        %v1773 = vpop.f32.mrb[0].mxu0
        %v1774 = vadd.f32 %v1718, %v1773
        %v1775 = vpop.f32.mrb[0].mxu0
        %v1776 = vpop.f32.mrb[0].mxu0
        %v1777 = vadd.f32 %v1721, %v1776
        %v1778 = vpop.f32.mrb[0].mxu0
        %1779 = vdwg.mxu0
        %1780 = vrot.lane.b32.xlu0 %v1415, 64
        %v1781 = vpop.permute.xlu0 %1780
        %1782 = vrot.lane.b32.xlu0 %v1416, 64
        %v1783 = vpop.permute.xlu0 %1782
        %v1785 = vsel %vm1418, %v1781, 0
        %v1788 = vsel %vm1418, %v1783, 0
        %1790 = vmatprep.subr.bf16.mxu0 0
        %1791 = vmatpush1.bf16.xpose.msra.mxu0 %v1788
        %1792 = vmatprep.subr.bf16.mxu0 0
        %1793 = vmatpush1.bf16.xpose.msra.mxu0 0
        %1794 = vmatprep.subr.bf16.mxu0 0
        %1795 = vmatpush1.bf16.xpose.msra.mxu0 0
        %1796 = vmatprep.subr.bf16.mxu0 0
        %1797 = vmatpush1.bf16.xpose.msra.mxu0 0
        %1798 = vmatprep.subr.bf16.mxu0 0
        %1799 = vmatpush1.bf16.xpose.msra.mxu0 0
        %1800 = vmatprep.subr.bf16.mxu0 0
        %1801 = vmatpush1.bf16.xpose.msra.mxu0 0
        %1802 = vmatprep.subr.bf16.mxu0 0
        %1803 = vmatpush1.bf16.xpose.msra.mxu0 0
        %1804 = vmatprep.subr.bf16.mxu0 0
        %1805 = vmatpush1.bf16.xpose.msra.mxu0 0
        %1806 = vmatprep.subr.bf16.mxu0 0
        %1807 = vmatpush1.bf16.xpose.msra.mxu0 0
        %1808 = vmatprep.subr.bf16.mxu0 0
        %1809 = vmatpush1.bf16.xpose.msra.mxu0 0
        %1810 = vmatprep.subr.bf16.mxu0 0
        %1811 = vmatpush1.bf16.xpose.msra.mxu0 0
        %1812 = vmatprep.subr.bf16.mxu0 0
        %1813 = vmatpush1.bf16.xpose.msra.mxu0 0
        %1814 = vmatprep.subr.bf16.mxu0 0
        %1815 = vmatpush1.bf16.xpose.msra.mxu0 0
        %1816 = vmatprep.subr.bf16.mxu0 0
        %1817 = vmatpush1.bf16.xpose.msra.mxu0 0
        %1818 = vmatprep.subr.bf16.mxu0 0
        %1819 = vmatpush1.bf16.xpose.msra.mxu0 0
        %1820 = vmatprep.subr.bf16.mxu0 0
        %1821 = vmatpush1.bf16.xpose.msra.mxu0 0
        %1822 = vmatprep.mubr.bf16.mxu0 0
        %1823 = vmatmul.mubr.bf16.gmra.mrb[0].mxu0 %v1785
        %v1824 = vpop.f32.mrb[0].mxu0
        %v1825 = vadd.f32 %v1152, %v1824
        %v1826 = vpop.f32.mrb[0].mxu0
        %v1827 = vpop.f32.mrb[0].mxu0
        %v1828 = vadd.f32 %v1152, %v1827
        %v1829 = vpop.f32.mrb[0].mxu0
        %1830 = vdwg.mxu0
        %v1831 = vsel %vm1466, %v1825, -inf
        %1832 = vmax.xlane.f32.xlu0 %v1831
        %v1833 = vpop.xlane.xlu0 %1832
        %v1834 = vsel %vm1466, %v1828, -inf
        %1835 = vmax.xlane.f32.xlu0 %v1834
        %v1836 = vpop.xlane.xlu0 %1835
        %v1837 = vsub.f32 %v1825, %v1833
        %v1838 = vsub.f32 %v1828, %v1836
        %v1839 = vmul.f32 %v1837, 1.442695
        %v1840 = vpow.pop %v1839
        %v1841 = vmul.f32 %v1838, 1.442695
        %v1842 = vpow.pop %v1841
        %v1843 = vsel %vm1466, %v1840, 0.0
        %1844 = vadd.xlane.f32.xlu0 %v1843
        %v1845 = vpop.xlane.xlu0 %1844
        %v1846 = vsel %vm1466, %v1842, 0.0
        %1847 = vadd.xlane.f32.xlu0 %v1846
        %v1848 = vpop.xlane.xlu0 %1847
        %v1849 = vpack.c.bf16 %v1842, %v1840
        %1850 = vrot.lane.b32.xlu0 %v1417, 64
        %v1851 = vpop.permute.xlu0 %1850
        %v1854 = vsel %vm1466, %v1849, 0
        %1856 = vmatprep.subr.bf16.mxu0 0
        %1857 = vmatpush1.bf16.msra.mxu0 %v1851
        %1858 = vmatprep.subr.bf16.mxu0 0
        %1859 = vmatpush1.bf16.msra.mxu0 0
        %1860 = vmatprep.subr.bf16.mxu0 0
        %1861 = vmatpush1.bf16.msra.mxu0 0
        %1862 = vmatprep.subr.bf16.mxu0 0
        %1863 = vmatpush1.bf16.msra.mxu0 0
        %1864 = vmatprep.subr.bf16.mxu0 0
        %1865 = vmatpush1.bf16.msra.mxu0 0
        %1866 = vmatprep.subr.bf16.mxu0 0
        %1867 = vmatpush1.bf16.msra.mxu0 0
        %1868 = vmatprep.subr.bf16.mxu0 0
        %1869 = vmatpush1.bf16.msra.mxu0 0
        %1870 = vmatprep.subr.bf16.mxu0 0
        %1871 = vmatpush1.bf16.msra.mxu0 0
        %1872 = vmatprep.subr.bf16.mxu0 0
        %1873 = vmatpush1.bf16.msra.mxu0 0
        %1874 = vmatprep.subr.bf16.mxu0 0
        %1875 = vmatpush1.bf16.msra.mxu0 0
        %1876 = vmatprep.subr.bf16.mxu0 0
        %1877 = vmatpush1.bf16.msra.mxu0 0
        %1878 = vmatprep.subr.bf16.mxu0 0
        %1879 = vmatpush1.bf16.msra.mxu0 0
        %1880 = vmatprep.subr.bf16.mxu0 0
        %1881 = vmatpush1.bf16.msra.mxu0 0
        %1882 = vmatprep.subr.bf16.mxu0 0
        %1883 = vmatpush1.bf16.msra.mxu0 0
        %1884 = vmatprep.subr.bf16.mxu0 0
        %1885 = vmatpush1.bf16.msra.mxu0 0
        %1886 = vmatprep.subr.bf16.mxu0 0
        %1887 = vmatpush1.bf16.msra.mxu0 0
        %1888 = vmatprep.mubr.bf16.mxu0 0
        %1889 = vmatmul.mubr.bf16.gmra.mrb[0].mxu0 %v1854
        %v1890 = vpop.f32.mrb[0].mxu0
        %v1891 = vadd.f32 0.0, %v1890
        %v1892 = vpop.f32.mrb[0].mxu0
        %v1893 = vpop.f32.mrb[0].mxu0
        %v1894 = vadd.f32 0.0, %v1893
        %v1895 = vpop.f32.mrb[0].mxu0
        %1896 = vdwg.mxu0
        %v1897 = vrcp.pop %v1845
        %v1898 = vmul.f32 %v1891, %v1897
        %v1899 = vrcp.pop %v1848
        %v1900 = vmul.f32 %v1894, %v1899
        %v1901 = vpack.c.bf16 %v1900, %v1898
        %v1902 = vld [vmem:[%s889 + $0x20] sm:$0xf]
        %v1903 = vld [vmem:[%s889 + $0x24] sm:$0xf]
        %v1904 = vld [vmem:[%s889 + $0x28] sm:$0xf]
        %v1905 = vld [vmem:[%s889 + $0x2c] sm:$0xf]
        %v1910 = vunpack.c.l.b16 %v1902
        %v1911 = vunpack.c.l.b16 %v1903
        %v1912 = vunpack.c.l.b16 %v1904
        %v1913 = vunpack.c.l.b16 %v1905
        %v1914 = vpack.c.b16 %v1911, %v1910
        %v1915 = vpack.c.b16 %v1913, %v1912
        %v1919 = vsel %vm1418, %v1901, 0
        %1921 = vmatprep.subr.bf16.mxu0 0
        %1922 = vmatpush1.bf16.msra.mxu0 %v1914
        %1923 = vmatprep.subr.bf16.mxu0 0
        %1924 = vmatpush1.bf16.msra.mxu0 %v1915
        %1925 = vmatprep.subr.bf16.mxu0 0
        %1926 = vmatpush1.bf16.msra.mxu0 0
        %1927 = vmatprep.subr.bf16.mxu0 0
        %1928 = vmatpush1.bf16.msra.mxu0 0
        %1929 = vmatprep.subr.bf16.mxu0 0
        %1930 = vmatpush1.bf16.msra.mxu0 0
        %1931 = vmatprep.subr.bf16.mxu0 0
        %1932 = vmatpush1.bf16.msra.mxu0 0
        %1933 = vmatprep.subr.bf16.mxu0 0
        %1934 = vmatpush1.bf16.msra.mxu0 0
        %1935 = vmatprep.subr.bf16.mxu0 0
        %1936 = vmatpush1.bf16.msra.mxu0 0
        %1937 = vmatprep.subr.bf16.mxu0 0
        %1938 = vmatpush1.bf16.msra.mxu0 0
        %1939 = vmatprep.subr.bf16.mxu0 0
        %1940 = vmatpush1.bf16.msra.mxu0 0
        %1941 = vmatprep.subr.bf16.mxu0 0
        %1942 = vmatpush1.bf16.msra.mxu0 0
        %1943 = vmatprep.subr.bf16.mxu0 0
        %1944 = vmatpush1.bf16.msra.mxu0 0
        %1945 = vmatprep.subr.bf16.mxu0 0
        %1946 = vmatpush1.bf16.msra.mxu0 0
        %1947 = vmatprep.subr.bf16.mxu0 0
        %1948 = vmatpush1.bf16.msra.mxu0 0
        %1949 = vmatprep.subr.bf16.mxu0 0
        %1950 = vmatpush1.bf16.msra.mxu0 0
        %1951 = vmatprep.subr.bf16.mxu0 0
        %1952 = vmatpush1.bf16.msra.mxu0 0
        %1953 = vmatprep.mubr.bf16.mxu0 0
        %1954 = vmatmul.mubr.bf16.gmra.mrb[0].mxu0 %v1919
        %v1955 = vpop.f32.mrb[0].mxu0
        %v1956 = vadd.f32 0.0, %v1955
        %v1957 = vpop.f32.mrb[0].mxu0
        %v1958 = vpop.f32.mrb[0].mxu0
        %v1959 = vadd.f32 0.0, %v1958
        %v1960 = vpop.f32.mrb[0].mxu0
        %1961 = vdwg.mxu0
        %v1962 = vadd.f32 %v1774, %v1956
        %v1963 = vadd.f32 %v1777, %v1959
        %1964 = vrot.lane.b32.xlu0 %v1415, 32
        %v1965 = vpop.permute.xlu0 %1964
        %1966 = vrot.lane.b32.xlu0 %v1416, 32
        %v1967 = vpop.permute.xlu0 %1966
        %v1969 = vsel %vm1418, %v1965, 0
        %v1972 = vsel %vm1418, %v1967, 0
        %1974 = vmatprep.subr.bf16.mxu0 0
        %1975 = vmatpush1.bf16.xpose.msra.mxu0 %v1972
        %1976 = vmatprep.subr.bf16.mxu0 0
        %1977 = vmatpush1.bf16.xpose.msra.mxu0 0
        %1978 = vmatprep.subr.bf16.mxu0 0
        %1979 = vmatpush1.bf16.xpose.msra.mxu0 0
        %1980 = vmatprep.subr.bf16.mxu0 0
        %1981 = vmatpush1.bf16.xpose.msra.mxu0 0
        %1982 = vmatprep.subr.bf16.mxu0 0
        %1983 = vmatpush1.bf16.xpose.msra.mxu0 0
        %1984 = vmatprep.subr.bf16.mxu0 0
        %1985 = vmatpush1.bf16.xpose.msra.mxu0 0
        %1986 = vmatprep.subr.bf16.mxu0 0
        %1987 = vmatpush1.bf16.xpose.msra.mxu0 0
        %1988 = vmatprep.subr.bf16.mxu0 0
        %1989 = vmatpush1.bf16.xpose.msra.mxu0 0
        %1990 = vmatprep.subr.bf16.mxu0 0
        %1991 = vmatpush1.bf16.xpose.msra.mxu0 0
        %1992 = vmatprep.subr.bf16.mxu0 0
        %1993 = vmatpush1.bf16.xpose.msra.mxu0 0
        %1994 = vmatprep.subr.bf16.mxu0 0
        %1995 = vmatpush1.bf16.xpose.msra.mxu0 0
        %1996 = vmatprep.subr.bf16.mxu0 0
        %1997 = vmatpush1.bf16.xpose.msra.mxu0 0
        %1998 = vmatprep.subr.bf16.mxu0 0
        %1999 = vmatpush1.bf16.xpose.msra.mxu0 0
        %2000 = vmatprep.subr.bf16.mxu0 0
        %2001 = vmatpush1.bf16.xpose.msra.mxu0 0
        %2002 = vmatprep.subr.bf16.mxu0 0
        %2003 = vmatpush1.bf16.xpose.msra.mxu0 0
        %2004 = vmatprep.subr.bf16.mxu0 0
        %2005 = vmatpush1.bf16.xpose.msra.mxu0 0
        %2006 = vmatprep.mubr.bf16.mxu0 0
        %2007 = vmatmul.mubr.bf16.gmra.mrb[0].mxu0 %v1969
        %v2008 = vpop.f32.mrb[0].mxu0
        %v2009 = vadd.f32 %v1152, %v2008
        %v2010 = vpop.f32.mrb[0].mxu0
        %v2011 = vpop.f32.mrb[0].mxu0
        %v2012 = vadd.f32 %v1152, %v2011
        %v2013 = vpop.f32.mrb[0].mxu0
        %2014 = vdwg.mxu0
        %v2015 = vsel %vm1466, %v2009, -inf
        %2016 = vmax.xlane.f32.xlu0 %v2015
        %v2017 = vpop.xlane.xlu0 %2016
        %v2018 = vsel %vm1466, %v2012, -inf
        %2019 = vmax.xlane.f32.xlu0 %v2018
        %v2020 = vpop.xlane.xlu0 %2019
        %v2021 = vsub.f32 %v2009, %v2017
        %v2022 = vsub.f32 %v2012, %v2020
        %v2023 = vmul.f32 %v2021, 1.442695
        %v2024 = vpow.pop %v2023
        %v2025 = vmul.f32 %v2022, 1.442695
        %v2026 = vpow.pop %v2025
        %v2027 = vsel %vm1466, %v2024, 0.0
        %2028 = vadd.xlane.f32.xlu0 %v2027
        %v2029 = vpop.xlane.xlu0 %2028
        %v2030 = vsel %vm1466, %v2026, 0.0
        %2031 = vadd.xlane.f32.xlu0 %v2030
        %v2032 = vpop.xlane.xlu0 %2031
        %v2033 = vpack.c.bf16 %v2026, %v2024
        %2034 = vrot.lane.b32.xlu0 %v1417, 32
        %v2035 = vpop.permute.xlu0 %2034
        %v2038 = vsel %vm1466, %v2033, 0
        %2040 = vmatprep.subr.bf16.mxu0 0
        %2041 = vmatpush1.bf16.msra.mxu0 %v2035
        %2042 = vmatprep.subr.bf16.mxu0 0
        %2043 = vmatpush1.bf16.msra.mxu0 0
        %2044 = vmatprep.subr.bf16.mxu0 0
        %2045 = vmatpush1.bf16.msra.mxu0 0
        %2046 = vmatprep.subr.bf16.mxu0 0
        %2047 = vmatpush1.bf16.msra.mxu0 0
        %2048 = vmatprep.subr.bf16.mxu0 0
        %2049 = vmatpush1.bf16.msra.mxu0 0
        %2050 = vmatprep.subr.bf16.mxu0 0
        %2051 = vmatpush1.bf16.msra.mxu0 0
        %2052 = vmatprep.subr.bf16.mxu0 0
        %2053 = vmatpush1.bf16.msra.mxu0 0
        %2054 = vmatprep.subr.bf16.mxu0 0
        %2055 = vmatpush1.bf16.msra.mxu0 0
        %2056 = vmatprep.subr.bf16.mxu0 0
        %2057 = vmatpush1.bf16.msra.mxu0 0
        %2058 = vmatprep.subr.bf16.mxu0 0
        %2059 = vmatpush1.bf16.msra.mxu0 0
        %2060 = vmatprep.subr.bf16.mxu0 0
        %2061 = vmatpush1.bf16.msra.mxu0 0
        %2062 = vmatprep.subr.bf16.mxu0 0
        %2063 = vmatpush1.bf16.msra.mxu0 0
        %2064 = vmatprep.subr.bf16.mxu0 0
        %2065 = vmatpush1.bf16.msra.mxu0 0
        %2066 = vmatprep.subr.bf16.mxu0 0
        %2067 = vmatpush1.bf16.msra.mxu0 0
        %2068 = vmatprep.subr.bf16.mxu0 0
        %2069 = vmatpush1.bf16.msra.mxu0 0
        %2070 = vmatprep.subr.bf16.mxu0 0
        %2071 = vmatpush1.bf16.msra.mxu0 0
        %2072 = vmatprep.mubr.bf16.mxu0 0
        %2073 = vmatmul.mubr.bf16.gmra.mrb[0].mxu0 %v2038
        %v2074 = vpop.f32.mrb[0].mxu0
        %v2075 = vadd.f32 0.0, %v2074
        %v2076 = vpop.f32.mrb[0].mxu0
        %v2077 = vpop.f32.mrb[0].mxu0
        %v2078 = vadd.f32 0.0, %v2077
        %v2079 = vpop.f32.mrb[0].mxu0
        %2080 = vdwg.mxu0
        %v2081 = vrcp.pop %v2029
        %v2082 = vmul.f32 %v2075, %v2081
        %v2083 = vrcp.pop %v2032
        %v2084 = vmul.f32 %v2078, %v2083
        %v2085 = vpack.c.bf16 %v2084, %v2082
        %v2086 = vld [vmem:[%s889 + $0x30] sm:$0xf]
        %v2087 = vld [vmem:[%s889 + $0x34] sm:$0xf]
        %v2088 = vld [vmem:[%s889 + $0x38] sm:$0xf]
        %v2089 = vld [vmem:[%s889 + $0x3c] sm:$0xf]
        %v2094 = vunpack.c.l.b16 %v2086
        %v2095 = vunpack.c.l.b16 %v2087
        %v2096 = vunpack.c.l.b16 %v2088
        %v2097 = vunpack.c.l.b16 %v2089
        %v2098 = vpack.c.b16 %v2095, %v2094
        %v2099 = vpack.c.b16 %v2097, %v2096
        %v2103 = vsel %vm1418, %v2085, 0
        %2105 = vmatprep.subr.bf16.mxu0 0
        %2106 = vmatpush1.bf16.msra.mxu0 %v2098
        %2107 = vmatprep.subr.bf16.mxu0 0
        %2108 = vmatpush1.bf16.msra.mxu0 %v2099
        %2109 = vmatprep.subr.bf16.mxu0 0
        %2110 = vmatpush1.bf16.msra.mxu0 0
        %2111 = vmatprep.subr.bf16.mxu0 0
        %2112 = vmatpush1.bf16.msra.mxu0 0
        %2113 = vmatprep.subr.bf16.mxu0 0
        %2114 = vmatpush1.bf16.msra.mxu0 0
        %2115 = vmatprep.subr.bf16.mxu0 0
        %2116 = vmatpush1.bf16.msra.mxu0 0
        %2117 = vmatprep.subr.bf16.mxu0 0
        %2118 = vmatpush1.bf16.msra.mxu0 0
        %2119 = vmatprep.subr.bf16.mxu0 0
        %2120 = vmatpush1.bf16.msra.mxu0 0
        %2121 = vmatprep.subr.bf16.mxu0 0
        %2122 = vmatpush1.bf16.msra.mxu0 0
        %2123 = vmatprep.subr.bf16.mxu0 0
        %2124 = vmatpush1.bf16.msra.mxu0 0
        %2125 = vmatprep.subr.bf16.mxu0 0
        %2126 = vmatpush1.bf16.msra.mxu0 0
        %2127 = vmatprep.subr.bf16.mxu0 0
        %2128 = vmatpush1.bf16.msra.mxu0 0
        %2129 = vmatprep.subr.bf16.mxu0 0
        %2130 = vmatpush1.bf16.msra.mxu0 0
        %2131 = vmatprep.subr.bf16.mxu0 0
        %2132 = vmatpush1.bf16.msra.mxu0 0
        %2133 = vmatprep.subr.bf16.mxu0 0
        %2134 = vmatpush1.bf16.msra.mxu0 0
        %2135 = vmatprep.subr.bf16.mxu0 0
        %2136 = vmatpush1.bf16.msra.mxu0 0
        %2137 = vmatprep.mubr.bf16.mxu0 0
        %2138 = vmatmul.mubr.bf16.gmra.mrb[0].mxu0 %v2103
        %v2139 = vpop.f32.mrb[0].mxu0
        %v2140 = vadd.f32 0.0, %v2139
        %v2141 = vpop.f32.mrb[0].mxu0
        %v2142 = vpop.f32.mrb[0].mxu0
        %v2143 = vadd.f32 0.0, %v2142
        %v2144 = vpop.f32.mrb[0].mxu0
        %2145 = vdwg.mxu0
        %v2146 = vadd.f32 %v1962, %v2140
        %v2147 = vadd.f32 %v1963, %v2143
        %v2148 = vld [vmem:[%s897] sm:$0x1]
        %v2150 = vlaneseq
        %v2151 = vshrl.u32 %v2150, 7
        %v2152 = vsub.s32 0, %v2151
        %v2153 = vrot.slane %v2148, %v2152
        %v2155 = vadd.f32 %v2146, %v2153
        %v2156 = vadd.f32 %v2147, %v2153
        %v2157 = vadd.f32 %v1147, %v2155
        %v2158 = vadd.f32 %v1148, %v2156
        %v2159 = vld [vmem:[%s905] sm:$0x1]
        %v2160 = vld [vmem:[%s913] sm:$0x1]
        %2161 = vadd.xlane.f32.xlu0 %v2157
        %v2162 = vpop.xlane.xlu0 %2161
        %2163 = vadd.xlane.f32.xlu0 %v2158
        %v2164 = vpop.xlane.xlu0 %2163
        %v2165 = vrcp.pop 128.0
        %v2166 = vmul.f32 %v2162, %v2165
        %v2167 = vmul.f32 %v2164, %v2165
        %v2168 = vsub.f32 %v2157, %v2166
        %v2169 = vsub.f32 %v2158, %v2167
        %v2170 = vmul.f32 %v2168, %v2168
        %v2171 = vmul.f32 %v2169, %v2169
        %2172 = vadd.xlane.f32.xlu0 %v2170
        %v2173 = vpop.xlane.xlu0 %2172
        %2174 = vadd.xlane.f32.xlu0 %v2171
        %v2175 = vpop.xlane.xlu0 %2174
        %v2176 = vmul.f32 %v2173, %v2165
        %v2177 = vmul.f32 %v2175, %v2165
        %v2178 = vadd.f32 %v2176, 1e-05
        %v2179 = vadd.f32 %v2177, 1e-05
        %v2180 = vrsqrt.pop %v2178
        %v2181 = vrsqrt.pop %v2179
        %v2182 = vmul.f32 %v2168, %v2180
        %v2183 = vmul.f32 %v2169, %v2181
        %v2185 = vlaneseq
        %v2186 = vshrl.u32 %v2185, 7
        %v2187 = vsub.s32 0, %v2186
        %v2188 = vrot.slane %v2159, %v2187
        %v2190 = vmul.f32 %v2182, %v2188
        %v2191 = vmul.f32 %v2183, %v2188
        %v2193 = vlaneseq
        %v2194 = vshrl.u32 %v2193, 7
        %v2195 = vsub.s32 0, %v2194
        %v2196 = vrot.slane %v2160, %v2195
        %v2198 = vadd.f32 %v2190, %v2196
        %v2199 = vadd.f32 %v2191, %v2196
        %v2200 = vpack.c.bf16 %v2199, %v2198
        %v2201 = vld [vmem:[%s922] sm:$0xff]
        %v2202 = vld [vmem:[%s922 + $0x8] sm:$0xff]
        %v2203 = vld [vmem:[%s922 + $0x10] sm:$0xff]
        %v2204 = vld [vmem:[%s922 + $0x18] sm:$0xff]
        %v2205 = vld [vmem:[%s922 + $0x20] sm:$0xff]
        %v2206 = vld [vmem:[%s922 + $0x28] sm:$0xff]
        %v2207 = vld [vmem:[%s922 + $0x30] sm:$0xff]
        %v2208 = vld [vmem:[%s922 + $0x38] sm:$0xff]
        %v2209 = vld [vmem:[%s922 + $0x40] sm:$0xff]
        %v2210 = vld [vmem:[%s922 + $0x48] sm:$0xff]
        %v2211 = vld [vmem:[%s922 + $0x50] sm:$0xff]
        %v2212 = vld [vmem:[%s922 + $0x58] sm:$0xff]
        %v2213 = vld [vmem:[%s922 + $0x60] sm:$0xff]
        %v2214 = vld [vmem:[%s922 + $0x68] sm:$0xff]
        %v2215 = vld [vmem:[%s922 + $0x70] sm:$0xff]
        %v2216 = vld [vmem:[%s922 + $0x78] sm:$0xff]
        %v2217 = vld [vmem:[%s922 + $0x80] sm:$0xff]
        %v2218 = vld [vmem:[%s922 + $0x88] sm:$0xff]
        %v2219 = vld [vmem:[%s922 + $0x90] sm:$0xff]
        %v2220 = vld [vmem:[%s922 + $0x98] sm:$0xff]
        %v2221 = vld [vmem:[%s922 + $0xa0] sm:$0xff]
        %v2222 = vld [vmem:[%s922 + $0xa8] sm:$0xff]
        %v2223 = vld [vmem:[%s922 + $0xb0] sm:$0xff]
        %v2224 = vld [vmem:[%s922 + $0xb8] sm:$0xff]
        %v2225 = vld [vmem:[%s922 + $0xc0] sm:$0xff]
        %v2226 = vld [vmem:[%s922 + $0xc8] sm:$0xff]
        %v2227 = vld [vmem:[%s922 + $0xd0] sm:$0xff]
        %v2228 = vld [vmem:[%s922 + $0xd8] sm:$0xff]
        %v2229 = vld [vmem:[%s922 + $0xe0] sm:$0xff]
        %v2230 = vld [vmem:[%s922 + $0xe8] sm:$0xff]
        %v2231 = vld [vmem:[%s922 + $0xf0] sm:$0xff]
        %v2232 = vld [vmem:[%s922 + $0xf8] sm:$0xff]
        %v2233 = vld [vmem:[%s922 + $0x100] sm:$0xff]
        %v2234 = vld [vmem:[%s922 + $0x108] sm:$0xff]
        %v2235 = vld [vmem:[%s922 + $0x110] sm:$0xff]
        %v2236 = vld [vmem:[%s922 + $0x118] sm:$0xff]
        %v2237 = vld [vmem:[%s922 + $0x120] sm:$0xff]
        %v2238 = vld [vmem:[%s922 + $0x128] sm:$0xff]
        %v2239 = vld [vmem:[%s922 + $0x130] sm:$0xff]
        %v2240 = vld [vmem:[%s922 + $0x138] sm:$0xff]
        %v2241 = vld [vmem:[%s922 + $0x140] sm:$0xff]
        %v2242 = vld [vmem:[%s922 + $0x148] sm:$0xff]
        %v2243 = vld [vmem:[%s922 + $0x150] sm:$0xff]
        %v2244 = vld [vmem:[%s922 + $0x158] sm:$0xff]
        %v2245 = vld [vmem:[%s922 + $0x160] sm:$0xff]
        %v2246 = vld [vmem:[%s922 + $0x168] sm:$0xff]
        %v2247 = vld [vmem:[%s922 + $0x170] sm:$0xff]
        %v2248 = vld [vmem:[%s922 + $0x178] sm:$0xff]
        %v2249 = vld [vmem:[%s922 + $0x180] sm:$0xff]
        %v2250 = vld [vmem:[%s922 + $0x188] sm:$0xff]
        %v2251 = vld [vmem:[%s922 + $0x190] sm:$0xff]
        %v2252 = vld [vmem:[%s922 + $0x198] sm:$0xff]
        %v2253 = vld [vmem:[%s922 + $0x1a0] sm:$0xff]
        %v2254 = vld [vmem:[%s922 + $0x1a8] sm:$0xff]
        %v2255 = vld [vmem:[%s922 + $0x1b0] sm:$0xff]
        %v2256 = vld [vmem:[%s922 + $0x1b8] sm:$0xff]
        %v2257 = vld [vmem:[%s922 + $0x1c0] sm:$0xff]
        %v2258 = vld [vmem:[%s922 + $0x1c8] sm:$0xff]
        %v2259 = vld [vmem:[%s922 + $0x1d0] sm:$0xff]
        %v2260 = vld [vmem:[%s922 + $0x1d8] sm:$0xff]
        %v2261 = vld [vmem:[%s922 + $0x1e0] sm:$0xff]
        %v2262 = vld [vmem:[%s922 + $0x1e8] sm:$0xff]
        %v2263 = vld [vmem:[%s922 + $0x1f0] sm:$0xff]
        %v2264 = vld [vmem:[%s922 + $0x1f8] sm:$0xff]
        %v2265 = vld [vmem:[%s922 + $0x200] sm:$0xff]
        %v2266 = vld [vmem:[%s922 + $0x208] sm:$0xff]
        %v2267 = vld [vmem:[%s922 + $0x210] sm:$0xff]
        %v2268 = vld [vmem:[%s922 + $0x218] sm:$0xff]
        %v2269 = vld [vmem:[%s922 + $0x220] sm:$0xff]
        %v2270 = vld [vmem:[%s922 + $0x228] sm:$0xff]
        %v2271 = vld [vmem:[%s922 + $0x230] sm:$0xff]
        %v2272 = vld [vmem:[%s922 + $0x238] sm:$0xff]
        %v2273 = vld [vmem:[%s922 + $0x240] sm:$0xff]
        %v2274 = vld [vmem:[%s922 + $0x248] sm:$0xff]
        %v2275 = vld [vmem:[%s922 + $0x250] sm:$0xff]
        %v2276 = vld [vmem:[%s922 + $0x258] sm:$0xff]
        %v2277 = vld [vmem:[%s922 + $0x260] sm:$0xff]
        %v2278 = vld [vmem:[%s922 + $0x268] sm:$0xff]
        %v2279 = vld [vmem:[%s922 + $0x270] sm:$0xff]
        %v2280 = vld [vmem:[%s922 + $0x278] sm:$0xff]
        %v2281 = vld [vmem:[%s922 + $0x280] sm:$0xff]
        %v2282 = vld [vmem:[%s922 + $0x288] sm:$0xff]
        %v2283 = vld [vmem:[%s922 + $0x290] sm:$0xff]
        %v2284 = vld [vmem:[%s922 + $0x298] sm:$0xff]
        %v2285 = vld [vmem:[%s922 + $0x2a0] sm:$0xff]
        %v2286 = vld [vmem:[%s922 + $0x2a8] sm:$0xff]
        %v2287 = vld [vmem:[%s922 + $0x2b0] sm:$0xff]
        %v2288 = vld [vmem:[%s922 + $0x2b8] sm:$0xff]
        %v2289 = vld [vmem:[%s922 + $0x2c0] sm:$0xff]
        %v2290 = vld [vmem:[%s922 + $0x2c8] sm:$0xff]
        %v2291 = vld [vmem:[%s922 + $0x2d0] sm:$0xff]
        %v2292 = vld [vmem:[%s922 + $0x2d8] sm:$0xff]
        %v2293 = vld [vmem:[%s922 + $0x2e0] sm:$0xff]
        %v2294 = vld [vmem:[%s922 + $0x2e8] sm:$0xff]
        %v2295 = vld [vmem:[%s922 + $0x2f0] sm:$0xff]
        %v2296 = vld [vmem:[%s922 + $0x2f8] sm:$0xff]
        %v2297 = vld [vmem:[%s922 + $0x300] sm:$0xff]
        %v2298 = vld [vmem:[%s922 + $0x308] sm:$0xff]
        %v2299 = vld [vmem:[%s922 + $0x310] sm:$0xff]
        %v2300 = vld [vmem:[%s922 + $0x318] sm:$0xff]
        %v2301 = vld [vmem:[%s922 + $0x320] sm:$0xff]
        %v2302 = vld [vmem:[%s922 + $0x328] sm:$0xff]
        %v2303 = vld [vmem:[%s922 + $0x330] sm:$0xff]
        %v2304 = vld [vmem:[%s922 + $0x338] sm:$0xff]
        %v2305 = vld [vmem:[%s922 + $0x340] sm:$0xff]
        %v2306 = vld [vmem:[%s922 + $0x348] sm:$0xff]
        %v2307 = vld [vmem:[%s922 + $0x350] sm:$0xff]
        %v2308 = vld [vmem:[%s922 + $0x358] sm:$0xff]
        %v2309 = vld [vmem:[%s922 + $0x360] sm:$0xff]
        %v2310 = vld [vmem:[%s922 + $0x368] sm:$0xff]
        %v2311 = vld [vmem:[%s922 + $0x370] sm:$0xff]
        %v2312 = vld [vmem:[%s922 + $0x378] sm:$0xff]
        %v2313 = vld [vmem:[%s922 + $0x380] sm:$0xff]
        %v2314 = vld [vmem:[%s922 + $0x388] sm:$0xff]
        %v2315 = vld [vmem:[%s922 + $0x390] sm:$0xff]
        %v2316 = vld [vmem:[%s922 + $0x398] sm:$0xff]
        %v2317 = vld [vmem:[%s922 + $0x3a0] sm:$0xff]
        %v2318 = vld [vmem:[%s922 + $0x3a8] sm:$0xff]
        %v2319 = vld [vmem:[%s922 + $0x3b0] sm:$0xff]
        %v2320 = vld [vmem:[%s922 + $0x3b8] sm:$0xff]
        %v2321 = vld [vmem:[%s922 + $0x3c0] sm:$0xff]
        %v2322 = vld [vmem:[%s922 + $0x3c8] sm:$0xff]
        %v2323 = vld [vmem:[%s922 + $0x3d0] sm:$0xff]
        %v2324 = vld [vmem:[%s922 + $0x3d8] sm:$0xff]
        %v2325 = vld [vmem:[%s922 + $0x3e0] sm:$0xff]
        %v2326 = vld [vmem:[%s922 + $0x3e8] sm:$0xff]
        %v2327 = vld [vmem:[%s922 + $0x3f0] sm:$0xff]
        %v2328 = vld [vmem:[%s922 + $0x3f8] sm:$0xff]
        %v2329 = vld [vmem:[%s931] sm:$0xff]
        %v2330 = vld [vmem:[%s931 + $0x8] sm:$0xff]
        %v2333 = vlaneseq
        %v2334 = vshrl.u32 %v2333, 7
        %v2335 = vsub.s32 0, %v2334
        %v2336 = vrot.slane %v2329, %v2335
        %v2337 = vlaneseq
        %v2338 = vshrl.u32 %v2337, 7
        %v2339 = vsub.s32 1, %v2338
        %v2340 = vrot.slane %v2329, %v2339
        %v2341 = vlaneseq
        %v2342 = vshrl.u32 %v2341, 7
        %v2343 = vsub.s32 2, %v2342
        %v2344 = vrot.slane %v2329, %v2343
        %v2345 = vlaneseq
        %v2346 = vshrl.u32 %v2345, 7
        %v2347 = vsub.s32 3, %v2346
        %v2348 = vrot.slane %v2329, %v2347
        %v2349 = vlaneseq
        %v2350 = vshrl.u32 %v2349, 7
        %v2351 = vsub.s32 4, %v2350
        %v2352 = vrot.slane %v2329, %v2351
        %v2353 = vlaneseq
        %v2354 = vshrl.u32 %v2353, 7
        %v2355 = vsub.s32 5, %v2354
        %v2356 = vrot.slane %v2329, %v2355
        %v2357 = vlaneseq
        %v2358 = vshrl.u32 %v2357, 7
        %v2359 = vsub.s32 6, %v2358
        %v2360 = vrot.slane %v2329, %v2359
        %v2361 = vlaneseq
        %v2362 = vshrl.u32 %v2361, 7
        %v2363 = vsub.s32 7, %v2362
        %v2364 = vrot.slane %v2329, %v2363
        %v2365 = vlaneseq
        %v2366 = vshrl.u32 %v2365, 7
        %v2367 = vsub.s32 0, %v2366
        %v2368 = vrot.slane %v2330, %v2367
        %v2369 = vlaneseq
        %v2370 = vshrl.u32 %v2369, 7
        %v2371 = vsub.s32 1, %v2370
        %v2372 = vrot.slane %v2330, %v2371
        %v2373 = vlaneseq
        %v2374 = vshrl.u32 %v2373, 7
        %v2375 = vsub.s32 2, %v2374
        %v2376 = vrot.slane %v2330, %v2375
        %v2377 = vlaneseq
        %v2378 = vshrl.u32 %v2377, 7
        %v2379 = vsub.s32 3, %v2378
        %v2380 = vrot.slane %v2330, %v2379
        %v2381 = vlaneseq
        %v2382 = vshrl.u32 %v2381, 7
        %v2383 = vsub.s32 4, %v2382
        %v2384 = vrot.slane %v2330, %v2383
        %v2385 = vlaneseq
        %v2386 = vshrl.u32 %v2385, 7
        %v2387 = vsub.s32 5, %v2386
        %v2388 = vrot.slane %v2330, %v2387
        %v2389 = vlaneseq
        %v2390 = vshrl.u32 %v2389, 7
        %v2391 = vsub.s32 6, %v2390
        %v2392 = vrot.slane %v2330, %v2391
        %v2393 = vlaneseq
        %v2394 = vshrl.u32 %v2393, 7
        %v2395 = vsub.s32 7, %v2394
        %v2396 = vrot.slane %v2330, %v2395
        %v2541 = vunpack.c.l.b16 %v2201
        %v2542 = vunpack.c.h.b16 %v2201
        %v2543 = vunpack.c.l.b16 %v2202
        %v2544 = vunpack.c.h.b16 %v2202
        %v2545 = vunpack.c.l.b16 %v2203
        %v2546 = vunpack.c.h.b16 %v2203
        %v2547 = vunpack.c.l.b16 %v2204
        %v2548 = vunpack.c.h.b16 %v2204
        %v2549 = vunpack.c.l.b16 %v2205
        %v2550 = vunpack.c.h.b16 %v2205
        %v2551 = vunpack.c.l.b16 %v2206
        %v2552 = vunpack.c.h.b16 %v2206
        %v2553 = vunpack.c.l.b16 %v2207
        %v2554 = vunpack.c.h.b16 %v2207
        %v2555 = vunpack.c.l.b16 %v2208
        %v2556 = vunpack.c.h.b16 %v2208
        %v2557 = vunpack.c.l.b16 %v2209
        %v2558 = vunpack.c.h.b16 %v2209
        %v2559 = vunpack.c.l.b16 %v2210
        %v2560 = vunpack.c.h.b16 %v2210
        %v2561 = vunpack.c.l.b16 %v2211
        %v2562 = vunpack.c.h.b16 %v2211
        %v2563 = vunpack.c.l.b16 %v2212
        %v2564 = vunpack.c.h.b16 %v2212
        %v2565 = vunpack.c.l.b16 %v2213
        %v2566 = vunpack.c.h.b16 %v2213
        %v2567 = vunpack.c.l.b16 %v2214
        %v2568 = vunpack.c.h.b16 %v2214
        %v2569 = vunpack.c.l.b16 %v2215
        %v2570 = vunpack.c.h.b16 %v2215
        %v2571 = vunpack.c.l.b16 %v2216
        %v2572 = vunpack.c.h.b16 %v2216
        %v2573 = vunpack.c.l.b16 %v2217
        %v2574 = vunpack.c.h.b16 %v2217
        %v2575 = vunpack.c.l.b16 %v2218
        %v2576 = vunpack.c.h.b16 %v2218
        %v2577 = vunpack.c.l.b16 %v2219
        %v2578 = vunpack.c.h.b16 %v2219
        %v2579 = vunpack.c.l.b16 %v2220
        %v2580 = vunpack.c.h.b16 %v2220
        %v2581 = vunpack.c.l.b16 %v2221
        %v2582 = vunpack.c.h.b16 %v2221
        %v2583 = vunpack.c.l.b16 %v2222
        %v2584 = vunpack.c.h.b16 %v2222
        %v2585 = vunpack.c.l.b16 %v2223
        %v2586 = vunpack.c.h.b16 %v2223
        %v2587 = vunpack.c.l.b16 %v2224
        %v2588 = vunpack.c.h.b16 %v2224
        %v2589 = vunpack.c.l.b16 %v2225
        %v2590 = vunpack.c.h.b16 %v2225
        %v2591 = vunpack.c.l.b16 %v2226
        %v2592 = vunpack.c.h.b16 %v2226
        %v2593 = vunpack.c.l.b16 %v2227
        %v2594 = vunpack.c.h.b16 %v2227
        %v2595 = vunpack.c.l.b16 %v2228
        %v2596 = vunpack.c.h.b16 %v2228
        %v2597 = vunpack.c.l.b16 %v2229
        %v2598 = vunpack.c.h.b16 %v2229
        %v2599 = vunpack.c.l.b16 %v2230
        %v2600 = vunpack.c.h.b16 %v2230
        %v2601 = vunpack.c.l.b16 %v2231
        %v2602 = vunpack.c.h.b16 %v2231
        %v2603 = vunpack.c.l.b16 %v2232
        %v2604 = vunpack.c.h.b16 %v2232
        %v2605 = vunpack.c.l.b16 %v2233
        %v2606 = vunpack.c.h.b16 %v2233
        %v2607 = vunpack.c.l.b16 %v2234
        %v2608 = vunpack.c.h.b16 %v2234
        %v2609 = vunpack.c.l.b16 %v2235
        %v2610 = vunpack.c.h.b16 %v2235
        %v2611 = vunpack.c.l.b16 %v2236
        %v2612 = vunpack.c.h.b16 %v2236
        %v2613 = vunpack.c.l.b16 %v2237
        %v2614 = vunpack.c.h.b16 %v2237
        %v2615 = vunpack.c.l.b16 %v2238
        %v2616 = vunpack.c.h.b16 %v2238
        %v2617 = vunpack.c.l.b16 %v2239
        %v2618 = vunpack.c.h.b16 %v2239
        %v2619 = vunpack.c.l.b16 %v2240
        %v2620 = vunpack.c.h.b16 %v2240
        %v2621 = vunpack.c.l.b16 %v2241
        %v2622 = vunpack.c.h.b16 %v2241
        %v2623 = vunpack.c.l.b16 %v2242
        %v2624 = vunpack.c.h.b16 %v2242
        %v2625 = vunpack.c.l.b16 %v2243
        %v2626 = vunpack.c.h.b16 %v2243
        %v2627 = vunpack.c.l.b16 %v2244
        %v2628 = vunpack.c.h.b16 %v2244
        %v2629 = vunpack.c.l.b16 %v2245
        %v2630 = vunpack.c.h.b16 %v2245
        %v2631 = vunpack.c.l.b16 %v2246
        %v2632 = vunpack.c.h.b16 %v2246
        %v2633 = vunpack.c.l.b16 %v2247
        %v2634 = vunpack.c.h.b16 %v2247
        %v2635 = vunpack.c.l.b16 %v2248
        %v2636 = vunpack.c.h.b16 %v2248
        %v2637 = vunpack.c.l.b16 %v2249
        %v2638 = vunpack.c.h.b16 %v2249
        %v2639 = vunpack.c.l.b16 %v2250
        %v2640 = vunpack.c.h.b16 %v2250
        %v2641 = vunpack.c.l.b16 %v2251
        %v2642 = vunpack.c.h.b16 %v2251
        %v2643 = vunpack.c.l.b16 %v2252
        %v2644 = vunpack.c.h.b16 %v2252
        %v2645 = vunpack.c.l.b16 %v2253
        %v2646 = vunpack.c.h.b16 %v2253
        %v2647 = vunpack.c.l.b16 %v2254
        %v2648 = vunpack.c.h.b16 %v2254
        %v2649 = vunpack.c.l.b16 %v2255
        %v2650 = vunpack.c.h.b16 %v2255
        %v2651 = vunpack.c.l.b16 %v2256
        %v2652 = vunpack.c.h.b16 %v2256
        %v2653 = vunpack.c.l.b16 %v2257
        %v2654 = vunpack.c.h.b16 %v2257
        %v2655 = vunpack.c.l.b16 %v2258
        %v2656 = vunpack.c.h.b16 %v2258
        %v2657 = vunpack.c.l.b16 %v2259
        %v2658 = vunpack.c.h.b16 %v2259
        %v2659 = vunpack.c.l.b16 %v2260
        %v2660 = vunpack.c.h.b16 %v2260
        %v2661 = vunpack.c.l.b16 %v2261
        %v2662 = vunpack.c.h.b16 %v2261
        %v2663 = vunpack.c.l.b16 %v2262
        %v2664 = vunpack.c.h.b16 %v2262
        %v2665 = vunpack.c.l.b16 %v2263
        %v2666 = vunpack.c.h.b16 %v2263
        %v2667 = vunpack.c.l.b16 %v2264
        %v2668 = vunpack.c.h.b16 %v2264
        %v2669 = vunpack.c.l.b16 %v2265
        %v2670 = vunpack.c.h.b16 %v2265
        %v2671 = vunpack.c.l.b16 %v2266
        %v2672 = vunpack.c.h.b16 %v2266
        %v2673 = vunpack.c.l.b16 %v2267
        %v2674 = vunpack.c.h.b16 %v2267
        %v2675 = vunpack.c.l.b16 %v2268
        %v2676 = vunpack.c.h.b16 %v2268
        %v2677 = vunpack.c.l.b16 %v2269
        %v2678 = vunpack.c.h.b16 %v2269
        %v2679 = vunpack.c.l.b16 %v2270
        %v2680 = vunpack.c.h.b16 %v2270
        %v2681 = vunpack.c.l.b16 %v2271
        %v2682 = vunpack.c.h.b16 %v2271
        %v2683 = vunpack.c.l.b16 %v2272
        %v2684 = vunpack.c.h.b16 %v2272
        %v2685 = vunpack.c.l.b16 %v2273
        %v2686 = vunpack.c.h.b16 %v2273
        %v2687 = vunpack.c.l.b16 %v2274
        %v2688 = vunpack.c.h.b16 %v2274
        %v2689 = vunpack.c.l.b16 %v2275
        %v2690 = vunpack.c.h.b16 %v2275
        %v2691 = vunpack.c.l.b16 %v2276
        %v2692 = vunpack.c.h.b16 %v2276
        %v2693 = vunpack.c.l.b16 %v2277
        %v2694 = vunpack.c.h.b16 %v2277
        %v2695 = vunpack.c.l.b16 %v2278
        %v2696 = vunpack.c.h.b16 %v2278
        %v2697 = vunpack.c.l.b16 %v2279
        %v2698 = vunpack.c.h.b16 %v2279
        %v2699 = vunpack.c.l.b16 %v2280
        %v2700 = vunpack.c.h.b16 %v2280
        %v2701 = vunpack.c.l.b16 %v2281
        %v2702 = vunpack.c.h.b16 %v2281
        %v2703 = vunpack.c.l.b16 %v2282
        %v2704 = vunpack.c.h.b16 %v2282
        %v2705 = vunpack.c.l.b16 %v2283
        %v2706 = vunpack.c.h.b16 %v2283
        %v2707 = vunpack.c.l.b16 %v2284
        %v2708 = vunpack.c.h.b16 %v2284
        %v2709 = vunpack.c.l.b16 %v2285
        %v2710 = vunpack.c.h.b16 %v2285
        %v2711 = vunpack.c.l.b16 %v2286
        %v2712 = vunpack.c.h.b16 %v2286
        %v2713 = vunpack.c.l.b16 %v2287
        %v2714 = vunpack.c.h.b16 %v2287
        %v2715 = vunpack.c.l.b16 %v2288
        %v2716 = vunpack.c.h.b16 %v2288
        %v2717 = vunpack.c.l.b16 %v2289
        %v2718 = vunpack.c.h.b16 %v2289
        %v2719 = vunpack.c.l.b16 %v2290
        %v2720 = vunpack.c.h.b16 %v2290
        %v2721 = vunpack.c.l.b16 %v2291
        %v2722 = vunpack.c.h.b16 %v2291
        %v2723 = vunpack.c.l.b16 %v2292
        %v2724 = vunpack.c.h.b16 %v2292
        %v2725 = vunpack.c.l.b16 %v2293
        %v2726 = vunpack.c.h.b16 %v2293
        %v2727 = vunpack.c.l.b16 %v2294
        %v2728 = vunpack.c.h.b16 %v2294
        %v2729 = vunpack.c.l.b16 %v2295
        %v2730 = vunpack.c.h.b16 %v2295
        %v2731 = vunpack.c.l.b16 %v2296
        %v2732 = vunpack.c.h.b16 %v2296
        %v2733 = vunpack.c.l.b16 %v2297
        %v2734 = vunpack.c.h.b16 %v2297
        %v2735 = vunpack.c.l.b16 %v2298
        %v2736 = vunpack.c.h.b16 %v2298
        %v2737 = vunpack.c.l.b16 %v2299
        %v2738 = vunpack.c.h.b16 %v2299
        %v2739 = vunpack.c.l.b16 %v2300
        %v2740 = vunpack.c.h.b16 %v2300
        %v2741 = vunpack.c.l.b16 %v2301
        %v2742 = vunpack.c.h.b16 %v2301
        %v2743 = vunpack.c.l.b16 %v2302
        %v2744 = vunpack.c.h.b16 %v2302
        %v2745 = vunpack.c.l.b16 %v2303
        %v2746 = vunpack.c.h.b16 %v2303
        %v2747 = vunpack.c.l.b16 %v2304
        %v2748 = vunpack.c.h.b16 %v2304
        %v2749 = vunpack.c.l.b16 %v2305
        %v2750 = vunpack.c.h.b16 %v2305
        %v2751 = vunpack.c.l.b16 %v2306
        %v2752 = vunpack.c.h.b16 %v2306
        %v2753 = vunpack.c.l.b16 %v2307
        %v2754 = vunpack.c.h.b16 %v2307
        %v2755 = vunpack.c.l.b16 %v2308
        %v2756 = vunpack.c.h.b16 %v2308
        %v2757 = vunpack.c.l.b16 %v2309
        %v2758 = vunpack.c.h.b16 %v2309
        %v2759 = vunpack.c.l.b16 %v2310
        %v2760 = vunpack.c.h.b16 %v2310
        %v2761 = vunpack.c.l.b16 %v2311
        %v2762 = vunpack.c.h.b16 %v2311
        %v2763 = vunpack.c.l.b16 %v2312
        %v2764 = vunpack.c.h.b16 %v2312
        %v2765 = vunpack.c.l.b16 %v2313
        %v2766 = vunpack.c.h.b16 %v2313
        %v2767 = vunpack.c.l.b16 %v2314
        %v2768 = vunpack.c.h.b16 %v2314
        %v2769 = vunpack.c.l.b16 %v2315
        %v2770 = vunpack.c.h.b16 %v2315
        %v2771 = vunpack.c.l.b16 %v2316
        %v2772 = vunpack.c.h.b16 %v2316
        %v2773 = vunpack.c.l.b16 %v2317
        %v2774 = vunpack.c.h.b16 %v2317
        %v2775 = vunpack.c.l.b16 %v2318
        %v2776 = vunpack.c.h.b16 %v2318
        %v2777 = vunpack.c.l.b16 %v2319
        %v2778 = vunpack.c.h.b16 %v2319
        %v2779 = vunpack.c.l.b16 %v2320
        %v2780 = vunpack.c.h.b16 %v2320
        %v2781 = vunpack.c.l.b16 %v2321
        %v2782 = vunpack.c.h.b16 %v2321
        %v2783 = vunpack.c.l.b16 %v2322
        %v2784 = vunpack.c.h.b16 %v2322
        %v2785 = vunpack.c.l.b16 %v2323
        %v2786 = vunpack.c.h.b16 %v2323
        %v2787 = vunpack.c.l.b16 %v2324
        %v2788 = vunpack.c.h.b16 %v2324
        %v2789 = vunpack.c.l.b16 %v2325
        %v2790 = vunpack.c.h.b16 %v2325
        %v2791 = vunpack.c.l.b16 %v2326
        %v2792 = vunpack.c.h.b16 %v2326
        %v2793 = vunpack.c.l.b16 %v2327
        %v2794 = vunpack.c.h.b16 %v2327
        %v2795 = vunpack.c.l.b16 %v2328
        %v2796 = vunpack.c.h.b16 %v2328
        %v2797 = vpack.c.b16 %v2557, %v2541
        %v2798 = vpack.c.b16 %v2558, %v2542
        %v2799 = vpack.c.b16 %v2559, %v2543
        %v2800 = vpack.c.b16 %v2560, %v2544
        %v2801 = vpack.c.b16 %v2561, %v2545
        %v2802 = vpack.c.b16 %v2562, %v2546
        %v2803 = vpack.c.b16 %v2563, %v2547
        %v2804 = vpack.c.b16 %v2564, %v2548
        %v2805 = vpack.c.b16 %v2565, %v2549
        %v2806 = vpack.c.b16 %v2566, %v2550
        %v2807 = vpack.c.b16 %v2567, %v2551
        %v2808 = vpack.c.b16 %v2568, %v2552
        %v2809 = vpack.c.b16 %v2569, %v2553
        %v2810 = vpack.c.b16 %v2570, %v2554
        %v2811 = vpack.c.b16 %v2571, %v2555
        %v2812 = vpack.c.b16 %v2572, %v2556
        %v2813 = vpack.c.b16 %v2589, %v2573
        %v2814 = vpack.c.b16 %v2590, %v2574
        %v2815 = vpack.c.b16 %v2591, %v2575
        %v2816 = vpack.c.b16 %v2592, %v2576
        %v2817 = vpack.c.b16 %v2593, %v2577
        %v2818 = vpack.c.b16 %v2594, %v2578
        %v2819 = vpack.c.b16 %v2595, %v2579
        %v2820 = vpack.c.b16 %v2596, %v2580
        %v2821 = vpack.c.b16 %v2597, %v2581
        %v2822 = vpack.c.b16 %v2598, %v2582
        %v2823 = vpack.c.b16 %v2599, %v2583
        %v2824 = vpack.c.b16 %v2600, %v2584
        %v2825 = vpack.c.b16 %v2601, %v2585
        %v2826 = vpack.c.b16 %v2602, %v2586
        %v2827 = vpack.c.b16 %v2603, %v2587
        %v2828 = vpack.c.b16 %v2604, %v2588
        %v2829 = vpack.c.b16 %v2621, %v2605
        %v2830 = vpack.c.b16 %v2622, %v2606
        %v2831 = vpack.c.b16 %v2623, %v2607
        %v2832 = vpack.c.b16 %v2624, %v2608
        %v2833 = vpack.c.b16 %v2625, %v2609
        %v2834 = vpack.c.b16 %v2626, %v2610
        %v2835 = vpack.c.b16 %v2627, %v2611
        %v2836 = vpack.c.b16 %v2628, %v2612
        %v2837 = vpack.c.b16 %v2629, %v2613
        %v2838 = vpack.c.b16 %v2630, %v2614
        %v2839 = vpack.c.b16 %v2631, %v2615
        %v2840 = vpack.c.b16 %v2632, %v2616
        %v2841 = vpack.c.b16 %v2633, %v2617
        %v2842 = vpack.c.b16 %v2634, %v2618
        %v2843 = vpack.c.b16 %v2635, %v2619
        %v2844 = vpack.c.b16 %v2636, %v2620
        %v2845 = vpack.c.b16 %v2653, %v2637
        %v2846 = vpack.c.b16 %v2654, %v2638
        %v2847 = vpack.c.b16 %v2655, %v2639
        %v2848 = vpack.c.b16 %v2656, %v2640
        %v2849 = vpack.c.b16 %v2657, %v2641
        %v2850 = vpack.c.b16 %v2658, %v2642
        %v2851 = vpack.c.b16 %v2659, %v2643
        %v2852 = vpack.c.b16 %v2660, %v2644
        %v2853 = vpack.c.b16 %v2661, %v2645
        %v2854 = vpack.c.b16 %v2662, %v2646
        %v2855 = vpack.c.b16 %v2663, %v2647
        %v2856 = vpack.c.b16 %v2664, %v2648
        %v2857 = vpack.c.b16 %v2665, %v2649
        %v2858 = vpack.c.b16 %v2666, %v2650
        %v2859 = vpack.c.b16 %v2667, %v2651
        %v2860 = vpack.c.b16 %v2668, %v2652
        %v2861 = vpack.c.b16 %v2685, %v2669
        %v2862 = vpack.c.b16 %v2686, %v2670
        %v2863 = vpack.c.b16 %v2687, %v2671
        %v2864 = vpack.c.b16 %v2688, %v2672
        %v2865 = vpack.c.b16 %v2689, %v2673
        %v2866 = vpack.c.b16 %v2690, %v2674
        %v2867 = vpack.c.b16 %v2691, %v2675
        %v2868 = vpack.c.b16 %v2692, %v2676
        %v2869 = vpack.c.b16 %v2693, %v2677
        %v2870 = vpack.c.b16 %v2694, %v2678
        %v2871 = vpack.c.b16 %v2695, %v2679
        %v2872 = vpack.c.b16 %v2696, %v2680
        %v2873 = vpack.c.b16 %v2697, %v2681
        %v2874 = vpack.c.b16 %v2698, %v2682
        %v2875 = vpack.c.b16 %v2699, %v2683
        %v2876 = vpack.c.b16 %v2700, %v2684
        %v2877 = vpack.c.b16 %v2717, %v2701
        %v2878 = vpack.c.b16 %v2718, %v2702
        %v2879 = vpack.c.b16 %v2719, %v2703
        %v2880 = vpack.c.b16 %v2720, %v2704
        %v2881 = vpack.c.b16 %v2721, %v2705
        %v2882 = vpack.c.b16 %v2722, %v2706
        %v2883 = vpack.c.b16 %v2723, %v2707
        %v2884 = vpack.c.b16 %v2724, %v2708
        %v2885 = vpack.c.b16 %v2725, %v2709
        %v2886 = vpack.c.b16 %v2726, %v2710
        %v2887 = vpack.c.b16 %v2727, %v2711
        %v2888 = vpack.c.b16 %v2728, %v2712
        %v2889 = vpack.c.b16 %v2729, %v2713
        %v2890 = vpack.c.b16 %v2730, %v2714
        %v2891 = vpack.c.b16 %v2731, %v2715
        %v2892 = vpack.c.b16 %v2732, %v2716
        %v2893 = vpack.c.b16 %v2749, %v2733
        %v2894 = vpack.c.b16 %v2750, %v2734
        %v2895 = vpack.c.b16 %v2751, %v2735
        %v2896 = vpack.c.b16 %v2752, %v2736
        %v2897 = vpack.c.b16 %v2753, %v2737
        %v2898 = vpack.c.b16 %v2754, %v2738
        %v2899 = vpack.c.b16 %v2755, %v2739
        %v2900 = vpack.c.b16 %v2756, %v2740
        %v2901 = vpack.c.b16 %v2757, %v2741
        %v2902 = vpack.c.b16 %v2758, %v2742
        %v2903 = vpack.c.b16 %v2759, %v2743
        %v2904 = vpack.c.b16 %v2760, %v2744
        %v2905 = vpack.c.b16 %v2761, %v2745
        %v2906 = vpack.c.b16 %v2762, %v2746
        %v2907 = vpack.c.b16 %v2763, %v2747
        %v2908 = vpack.c.b16 %v2764, %v2748
        %v2909 = vpack.c.b16 %v2781, %v2765
        %v2910 = vpack.c.b16 %v2782, %v2766
        %v2911 = vpack.c.b16 %v2783, %v2767
        %v2912 = vpack.c.b16 %v2784, %v2768
        %v2913 = vpack.c.b16 %v2785, %v2769
        %v2914 = vpack.c.b16 %v2786, %v2770
        %v2915 = vpack.c.b16 %v2787, %v2771
        %v2916 = vpack.c.b16 %v2788, %v2772
        %v2917 = vpack.c.b16 %v2789, %v2773
        %v2918 = vpack.c.b16 %v2790, %v2774
        %v2919 = vpack.c.b16 %v2791, %v2775
        %v2920 = vpack.c.b16 %v2792, %v2776
        %v2921 = vpack.c.b16 %v2793, %v2777
        %v2922 = vpack.c.b16 %v2794, %v2778
        %v2923 = vpack.c.b16 %v2795, %v2779
        %v2924 = vpack.c.b16 %v2796, %v2780
        %3053 = vmatprep.subr.bf16.mxu0 %v2798
        %3054 = vmatpush1.bf16.msra.mxu0 %v2797
        %3055 = vmatprep.subr.bf16.mxu0 %v2814
        %3056 = vmatpush1.bf16.msra.mxu0 %v2813
        %3057 = vmatprep.subr.bf16.mxu0 %v2830
        %3058 = vmatpush1.bf16.msra.mxu0 %v2829
        %3059 = vmatprep.subr.bf16.mxu0 %v2846
        %3060 = vmatpush1.bf16.msra.mxu0 %v2845
        %3061 = vmatprep.subr.bf16.mxu0 %v2862
        %3062 = vmatpush1.bf16.msra.mxu0 %v2861
        %3063 = vmatprep.subr.bf16.mxu0 %v2878
        %3064 = vmatpush1.bf16.msra.mxu0 %v2877
        %3065 = vmatprep.subr.bf16.mxu0 %v2894
        %3066 = vmatpush1.bf16.msra.mxu0 %v2893
        %3067 = vmatprep.subr.bf16.mxu0 %v2910
        %3068 = vmatpush1.bf16.msra.mxu0 %v2909
        %3069 = vmatprep.subr.bf16.mxu0 0
        %3070 = vmatpush1.bf16.msra.mxu0 0
        %3071 = vmatprep.subr.bf16.mxu0 0
        %3072 = vmatpush1.bf16.msra.mxu0 0
        %3073 = vmatprep.subr.bf16.mxu0 0
        %3074 = vmatpush1.bf16.msra.mxu0 0
        %3075 = vmatprep.subr.bf16.mxu0 0
        %3076 = vmatpush1.bf16.msra.mxu0 0
        %3077 = vmatprep.subr.bf16.mxu0 0
        %3078 = vmatpush1.bf16.msra.mxu0 0
        %3079 = vmatprep.subr.bf16.mxu0 0
        %3080 = vmatpush1.bf16.msra.mxu0 0
        %3081 = vmatprep.subr.bf16.mxu0 0
        %3082 = vmatpush1.bf16.msra.mxu0 0
        %3083 = vmatprep.subr.bf16.mxu0 0
        %3084 = vmatpush1.bf16.msra.mxu0 0
        %3085 = vmatprep.mubr.bf16.mxu0 0
        %3086 = vmatmul.mubr.bf16.gmra.mrb[0].mxu0 %v2200
        %v3087 = vpop.f32.mrb[0].mxu0
        %v3088 = vadd.f32 %v2336, %v3087
        %v3089 = vpop.f32.mrb[0].mxu0
        %v3090 = vadd.f32 %v2340, %v3089
        %v3091 = vpop.f32.mrb[0].mxu0
        %v3092 = vadd.f32 %v2336, %v3091
        %v3093 = vpop.f32.mrb[0].mxu0
        %v3094 = vadd.f32 %v2340, %v3093
        %3095 = vdwg.mxu0
        %3096 = vmatprep.subr.bf16.mxu0 %v2800
        %3097 = vmatpush1.bf16.msra.mxu0 %v2799
        %3098 = vmatprep.subr.bf16.mxu0 %v2816
        %3099 = vmatpush1.bf16.msra.mxu0 %v2815
        %3100 = vmatprep.subr.bf16.mxu0 %v2832
        %3101 = vmatpush1.bf16.msra.mxu0 %v2831
        %3102 = vmatprep.subr.bf16.mxu0 %v2848
        %3103 = vmatpush1.bf16.msra.mxu0 %v2847
        %3104 = vmatprep.subr.bf16.mxu0 %v2864
        %3105 = vmatpush1.bf16.msra.mxu0 %v2863
        %3106 = vmatprep.subr.bf16.mxu0 %v2880
        %3107 = vmatpush1.bf16.msra.mxu0 %v2879
        %3108 = vmatprep.subr.bf16.mxu0 %v2896
        %3109 = vmatpush1.bf16.msra.mxu0 %v2895
        %3110 = vmatprep.subr.bf16.mxu0 %v2912
        %3111 = vmatpush1.bf16.msra.mxu0 %v2911
        %3112 = vmatprep.subr.bf16.mxu0 0
        %3113 = vmatpush1.bf16.msra.mxu0 0
        %3114 = vmatprep.subr.bf16.mxu0 0
        %3115 = vmatpush1.bf16.msra.mxu0 0
        %3116 = vmatprep.subr.bf16.mxu0 0
        %3117 = vmatpush1.bf16.msra.mxu0 0
        %3118 = vmatprep.subr.bf16.mxu0 0
        %3119 = vmatpush1.bf16.msra.mxu0 0
        %3120 = vmatprep.subr.bf16.mxu0 0
        %3121 = vmatpush1.bf16.msra.mxu0 0
        %3122 = vmatprep.subr.bf16.mxu0 0
        %3123 = vmatpush1.bf16.msra.mxu0 0
        %3124 = vmatprep.subr.bf16.mxu0 0
        %3125 = vmatpush1.bf16.msra.mxu0 0
        %3126 = vmatprep.subr.bf16.mxu0 0
        %3127 = vmatpush1.bf16.msra.mxu0 0
        %3128 = vmatprep.mubr.bf16.mxu0 0
        %3129 = vmatmul.mubr.bf16.gmra.mrb[0].mxu0 %v2200
        %v3130 = vpop.f32.mrb[0].mxu0
        %v3131 = vadd.f32 %v2344, %v3130
        %v3132 = vpop.f32.mrb[0].mxu0
        %v3133 = vadd.f32 %v2348, %v3132
        %v3134 = vpop.f32.mrb[0].mxu0
        %v3135 = vadd.f32 %v2344, %v3134
        %v3136 = vpop.f32.mrb[0].mxu0
        %v3137 = vadd.f32 %v2348, %v3136
        %3138 = vdwg.mxu0
        %3139 = vmatprep.subr.bf16.mxu0 %v2802
        %3140 = vmatpush1.bf16.msra.mxu0 %v2801
        %3141 = vmatprep.subr.bf16.mxu0 %v2818
        %3142 = vmatpush1.bf16.msra.mxu0 %v2817
        %3143 = vmatprep.subr.bf16.mxu0 %v2834
        %3144 = vmatpush1.bf16.msra.mxu0 %v2833
        %3145 = vmatprep.subr.bf16.mxu0 %v2850
        %3146 = vmatpush1.bf16.msra.mxu0 %v2849
        %3147 = vmatprep.subr.bf16.mxu0 %v2866
        %3148 = vmatpush1.bf16.msra.mxu0 %v2865
        %3149 = vmatprep.subr.bf16.mxu0 %v2882
        %3150 = vmatpush1.bf16.msra.mxu0 %v2881
        %3151 = vmatprep.subr.bf16.mxu0 %v2898
        %3152 = vmatpush1.bf16.msra.mxu0 %v2897
        %3153 = vmatprep.subr.bf16.mxu0 %v2914
        %3154 = vmatpush1.bf16.msra.mxu0 %v2913
        %3155 = vmatprep.subr.bf16.mxu0 0
        %3156 = vmatpush1.bf16.msra.mxu0 0
        %3157 = vmatprep.subr.bf16.mxu0 0
        %3158 = vmatpush1.bf16.msra.mxu0 0
        %3159 = vmatprep.subr.bf16.mxu0 0
        %3160 = vmatpush1.bf16.msra.mxu0 0
        %3161 = vmatprep.subr.bf16.mxu0 0
        %3162 = vmatpush1.bf16.msra.mxu0 0
        %3163 = vmatprep.subr.bf16.mxu0 0
        %3164 = vmatpush1.bf16.msra.mxu0 0
        %3165 = vmatprep.subr.bf16.mxu0 0
        %3166 = vmatpush1.bf16.msra.mxu0 0
        %3167 = vmatprep.subr.bf16.mxu0 0
        %3168 = vmatpush1.bf16.msra.mxu0 0
        %3169 = vmatprep.subr.bf16.mxu0 0
        %3170 = vmatpush1.bf16.msra.mxu0 0
        %3171 = vmatprep.mubr.bf16.mxu0 0
        %3172 = vmatmul.mubr.bf16.gmra.mrb[0].mxu0 %v2200
        %v3173 = vpop.f32.mrb[0].mxu0
        %v3174 = vadd.f32 %v2352, %v3173
        %v3175 = vpop.f32.mrb[0].mxu0
        %v3176 = vadd.f32 %v2356, %v3175
        %v3177 = vpop.f32.mrb[0].mxu0
        %v3178 = vadd.f32 %v2352, %v3177
        %v3179 = vpop.f32.mrb[0].mxu0
        %v3180 = vadd.f32 %v2356, %v3179
        %3181 = vdwg.mxu0
        %3182 = vmatprep.subr.bf16.mxu0 %v2804
        %3183 = vmatpush1.bf16.msra.mxu0 %v2803
        %3184 = vmatprep.subr.bf16.mxu0 %v2820
        %3185 = vmatpush1.bf16.msra.mxu0 %v2819
        %3186 = vmatprep.subr.bf16.mxu0 %v2836
        %3187 = vmatpush1.bf16.msra.mxu0 %v2835
        %3188 = vmatprep.subr.bf16.mxu0 %v2852
        %3189 = vmatpush1.bf16.msra.mxu0 %v2851
        %3190 = vmatprep.subr.bf16.mxu0 %v2868
        %3191 = vmatpush1.bf16.msra.mxu0 %v2867
        %3192 = vmatprep.subr.bf16.mxu0 %v2884
        %3193 = vmatpush1.bf16.msra.mxu0 %v2883
        %3194 = vmatprep.subr.bf16.mxu0 %v2900
        %3195 = vmatpush1.bf16.msra.mxu0 %v2899
        %3196 = vmatprep.subr.bf16.mxu0 %v2916
        %3197 = vmatpush1.bf16.msra.mxu0 %v2915
        %3198 = vmatprep.subr.bf16.mxu0 0
        %3199 = vmatpush1.bf16.msra.mxu0 0
        %3200 = vmatprep.subr.bf16.mxu0 0
        %3201 = vmatpush1.bf16.msra.mxu0 0
        %3202 = vmatprep.subr.bf16.mxu0 0
        %3203 = vmatpush1.bf16.msra.mxu0 0
        %3204 = vmatprep.subr.bf16.mxu0 0
        %3205 = vmatpush1.bf16.msra.mxu0 0
        %3206 = vmatprep.subr.bf16.mxu0 0
        %3207 = vmatpush1.bf16.msra.mxu0 0
        %3208 = vmatprep.subr.bf16.mxu0 0
        %3209 = vmatpush1.bf16.msra.mxu0 0
        %3210 = vmatprep.subr.bf16.mxu0 0
        %3211 = vmatpush1.bf16.msra.mxu0 0
        %3212 = vmatprep.subr.bf16.mxu0 0
        %3213 = vmatpush1.bf16.msra.mxu0 0
        %3214 = vmatprep.mubr.bf16.mxu0 0
        %3215 = vmatmul.mubr.bf16.gmra.mrb[0].mxu0 %v2200
        %v3216 = vpop.f32.mrb[0].mxu0
        %v3217 = vadd.f32 %v2360, %v3216
        %v3218 = vpop.f32.mrb[0].mxu0
        %v3219 = vadd.f32 %v2364, %v3218
        %v3220 = vpop.f32.mrb[0].mxu0
        %v3221 = vadd.f32 %v2360, %v3220
        %v3222 = vpop.f32.mrb[0].mxu0
        %v3223 = vadd.f32 %v2364, %v3222
        %3224 = vdwg.mxu0
        %3225 = vmatprep.subr.bf16.mxu0 %v2806
        %3226 = vmatpush1.bf16.msra.mxu0 %v2805
        %3227 = vmatprep.subr.bf16.mxu0 %v2822
        %3228 = vmatpush1.bf16.msra.mxu0 %v2821
        %3229 = vmatprep.subr.bf16.mxu0 %v2838
        %3230 = vmatpush1.bf16.msra.mxu0 %v2837
        %3231 = vmatprep.subr.bf16.mxu0 %v2854
        %3232 = vmatpush1.bf16.msra.mxu0 %v2853
        %3233 = vmatprep.subr.bf16.mxu0 %v2870
        %3234 = vmatpush1.bf16.msra.mxu0 %v2869
        %3235 = vmatprep.subr.bf16.mxu0 %v2886
        %3236 = vmatpush1.bf16.msra.mxu0 %v2885
        %3237 = vmatprep.subr.bf16.mxu0 %v2902
        %3238 = vmatpush1.bf16.msra.mxu0 %v2901
        %3239 = vmatprep.subr.bf16.mxu0 %v2918
        %3240 = vmatpush1.bf16.msra.mxu0 %v2917
        %3241 = vmatprep.subr.bf16.mxu0 0
        %3242 = vmatpush1.bf16.msra.mxu0 0
        %3243 = vmatprep.subr.bf16.mxu0 0
        %3244 = vmatpush1.bf16.msra.mxu0 0
        %3245 = vmatprep.subr.bf16.mxu0 0
        %3246 = vmatpush1.bf16.msra.mxu0 0
        %3247 = vmatprep.subr.bf16.mxu0 0
        %3248 = vmatpush1.bf16.msra.mxu0 0
        %3249 = vmatprep.subr.bf16.mxu0 0
        %3250 = vmatpush1.bf16.msra.mxu0 0
        %3251 = vmatprep.subr.bf16.mxu0 0
        %3252 = vmatpush1.bf16.msra.mxu0 0
        %3253 = vmatprep.subr.bf16.mxu0 0
        %3254 = vmatpush1.bf16.msra.mxu0 0
        %3255 = vmatprep.subr.bf16.mxu0 0
        %3256 = vmatpush1.bf16.msra.mxu0 0
        %3257 = vmatprep.mubr.bf16.mxu0 0
        %3258 = vmatmul.mubr.bf16.gmra.mrb[0].mxu0 %v2200
        %v3259 = vpop.f32.mrb[0].mxu0
        %v3260 = vadd.f32 %v2368, %v3259
        %v3261 = vpop.f32.mrb[0].mxu0
        %v3262 = vadd.f32 %v2372, %v3261
        %v3263 = vpop.f32.mrb[0].mxu0
        %v3264 = vadd.f32 %v2368, %v3263
        %v3265 = vpop.f32.mrb[0].mxu0
        %v3266 = vadd.f32 %v2372, %v3265
        %3267 = vdwg.mxu0
        %3268 = vmatprep.subr.bf16.mxu0 %v2808
        %3269 = vmatpush1.bf16.msra.mxu0 %v2807
        %3270 = vmatprep.subr.bf16.mxu0 %v2824
        %3271 = vmatpush1.bf16.msra.mxu0 %v2823
        %3272 = vmatprep.subr.bf16.mxu0 %v2840
        %3273 = vmatpush1.bf16.msra.mxu0 %v2839
        %3274 = vmatprep.subr.bf16.mxu0 %v2856
        %3275 = vmatpush1.bf16.msra.mxu0 %v2855
        %3276 = vmatprep.subr.bf16.mxu0 %v2872
        %3277 = vmatpush1.bf16.msra.mxu0 %v2871
        %3278 = vmatprep.subr.bf16.mxu0 %v2888
        %3279 = vmatpush1.bf16.msra.mxu0 %v2887
        %3280 = vmatprep.subr.bf16.mxu0 %v2904
        %3281 = vmatpush1.bf16.msra.mxu0 %v2903
        %3282 = vmatprep.subr.bf16.mxu0 %v2920
        %3283 = vmatpush1.bf16.msra.mxu0 %v2919
        %3284 = vmatprep.subr.bf16.mxu0 0
        %3285 = vmatpush1.bf16.msra.mxu0 0
        %3286 = vmatprep.subr.bf16.mxu0 0
        %3287 = vmatpush1.bf16.msra.mxu0 0
        %3288 = vmatprep.subr.bf16.mxu0 0
        %3289 = vmatpush1.bf16.msra.mxu0 0
        %3290 = vmatprep.subr.bf16.mxu0 0
        %3291 = vmatpush1.bf16.msra.mxu0 0
        %3292 = vmatprep.subr.bf16.mxu0 0
        %3293 = vmatpush1.bf16.msra.mxu0 0
        %3294 = vmatprep.subr.bf16.mxu0 0
        %3295 = vmatpush1.bf16.msra.mxu0 0
        %3296 = vmatprep.subr.bf16.mxu0 0
        %3297 = vmatpush1.bf16.msra.mxu0 0
        %3298 = vmatprep.subr.bf16.mxu0 0
        %3299 = vmatpush1.bf16.msra.mxu0 0
        %3300 = vmatprep.mubr.bf16.mxu0 0
        %3301 = vmatmul.mubr.bf16.gmra.mrb[0].mxu0 %v2200
        %v3302 = vpop.f32.mrb[0].mxu0
        %v3303 = vadd.f32 %v2376, %v3302
        %v3304 = vpop.f32.mrb[0].mxu0
        %v3305 = vadd.f32 %v2380, %v3304
        %v3306 = vpop.f32.mrb[0].mxu0
        %v3307 = vadd.f32 %v2376, %v3306
        %v3308 = vpop.f32.mrb[0].mxu0
        %v3309 = vadd.f32 %v2380, %v3308
        %3310 = vdwg.mxu0
        %3311 = vmatprep.subr.bf16.mxu0 %v2810
        %3312 = vmatpush1.bf16.msra.mxu0 %v2809
        %3313 = vmatprep.subr.bf16.mxu0 %v2826
        %3314 = vmatpush1.bf16.msra.mxu0 %v2825
        %3315 = vmatprep.subr.bf16.mxu0 %v2842
        %3316 = vmatpush1.bf16.msra.mxu0 %v2841
        %3317 = vmatprep.subr.bf16.mxu0 %v2858
        %3318 = vmatpush1.bf16.msra.mxu0 %v2857
        %3319 = vmatprep.subr.bf16.mxu0 %v2874
        %3320 = vmatpush1.bf16.msra.mxu0 %v2873
        %3321 = vmatprep.subr.bf16.mxu0 %v2890
        %3322 = vmatpush1.bf16.msra.mxu0 %v2889
        %3323 = vmatprep.subr.bf16.mxu0 %v2906
        %3324 = vmatpush1.bf16.msra.mxu0 %v2905
        %3325 = vmatprep.subr.bf16.mxu0 %v2922
        %3326 = vmatpush1.bf16.msra.mxu0 %v2921
        %3327 = vmatprep.subr.bf16.mxu0 0
        %3328 = vmatpush1.bf16.msra.mxu0 0
        %3329 = vmatprep.subr.bf16.mxu0 0
        %3330 = vmatpush1.bf16.msra.mxu0 0
        %3331 = vmatprep.subr.bf16.mxu0 0
        %3332 = vmatpush1.bf16.msra.mxu0 0
        %3333 = vmatprep.subr.bf16.mxu0 0
        %3334 = vmatpush1.bf16.msra.mxu0 0
        %3335 = vmatprep.subr.bf16.mxu0 0
        %3336 = vmatpush1.bf16.msra.mxu0 0
        %3337 = vmatprep.subr.bf16.mxu0 0
        %3338 = vmatpush1.bf16.msra.mxu0 0
        %3339 = vmatprep.subr.bf16.mxu0 0
        %3340 = vmatpush1.bf16.msra.mxu0 0
        %3341 = vmatprep.subr.bf16.mxu0 0
        %3342 = vmatpush1.bf16.msra.mxu0 0
        %3343 = vmatprep.mubr.bf16.mxu0 0
        %3344 = vmatmul.mubr.bf16.gmra.mrb[0].mxu0 %v2200
        %v3345 = vpop.f32.mrb[0].mxu0
        %v3346 = vadd.f32 %v2384, %v3345
        %v3347 = vpop.f32.mrb[0].mxu0
        %v3348 = vadd.f32 %v2388, %v3347
        %v3349 = vpop.f32.mrb[0].mxu0
        %v3350 = vadd.f32 %v2384, %v3349
        %v3351 = vpop.f32.mrb[0].mxu0
        %v3352 = vadd.f32 %v2388, %v3351
        %3353 = vdwg.mxu0
        %3354 = vmatprep.subr.bf16.mxu0 %v2812
        %3355 = vmatpush1.bf16.msra.mxu0 %v2811
        %3356 = vmatprep.subr.bf16.mxu0 %v2828
        %3357 = vmatpush1.bf16.msra.mxu0 %v2827
        %3358 = vmatprep.subr.bf16.mxu0 %v2844
        %3359 = vmatpush1.bf16.msra.mxu0 %v2843
        %3360 = vmatprep.subr.bf16.mxu0 %v2860
        %3361 = vmatpush1.bf16.msra.mxu0 %v2859
        %3362 = vmatprep.subr.bf16.mxu0 %v2876
        %3363 = vmatpush1.bf16.msra.mxu0 %v2875
        %3364 = vmatprep.subr.bf16.mxu0 %v2892
        %3365 = vmatpush1.bf16.msra.mxu0 %v2891
        %3366 = vmatprep.subr.bf16.mxu0 %v2908
        %3367 = vmatpush1.bf16.msra.mxu0 %v2907
        %3368 = vmatprep.subr.bf16.mxu0 %v2924
        %3369 = vmatpush1.bf16.msra.mxu0 %v2923
        %3370 = vmatprep.subr.bf16.mxu0 0
        %3371 = vmatpush1.bf16.msra.mxu0 0
        %3372 = vmatprep.subr.bf16.mxu0 0
        %3373 = vmatpush1.bf16.msra.mxu0 0
        %3374 = vmatprep.subr.bf16.mxu0 0
        %3375 = vmatpush1.bf16.msra.mxu0 0
        %3376 = vmatprep.subr.bf16.mxu0 0
        %3377 = vmatpush1.bf16.msra.mxu0 0
        %3378 = vmatprep.subr.bf16.mxu0 0
        %3379 = vmatpush1.bf16.msra.mxu0 0
        %3380 = vmatprep.subr.bf16.mxu0 0
        %3381 = vmatpush1.bf16.msra.mxu0 0
        %3382 = vmatprep.subr.bf16.mxu0 0
        %3383 = vmatpush1.bf16.msra.mxu0 0
        %3384 = vmatprep.subr.bf16.mxu0 0
        %3385 = vmatpush1.bf16.msra.mxu0 0
        %3386 = vmatprep.mubr.bf16.mxu0 0
        %3387 = vmatmul.mubr.bf16.gmra.mrb[0].mxu0 %v2200
        %v3388 = vpop.f32.mrb[0].mxu0
        %v3389 = vadd.f32 %v2392, %v3388
        %v3390 = vpop.f32.mrb[0].mxu0
        %v3391 = vadd.f32 %v2396, %v3390
        %v3392 = vpop.f32.mrb[0].mxu0
        %v3393 = vadd.f32 %v2392, %v3392
        %v3394 = vpop.f32.mrb[0].mxu0
        %v3395 = vadd.f32 %v2396, %v3394
        %3396 = vdwg.mxu0
        %v3397 = vmax.f32 %v3088, 0.0
        %v3398 = vmax.f32 %v3090, 0.0
        %v3399 = vmax.f32 %v3131, 0.0
        %v3400 = vmax.f32 %v3133, 0.0
        %v3401 = vmax.f32 %v3174, 0.0
        %v3402 = vmax.f32 %v3176, 0.0
        %v3403 = vmax.f32 %v3217, 0.0
        %v3404 = vmax.f32 %v3219, 0.0
        %v3405 = vmax.f32 %v3260, 0.0
        %v3406 = vmax.f32 %v3262, 0.0
        %v3407 = vmax.f32 %v3303, 0.0
        %v3408 = vmax.f32 %v3305, 0.0
        %v3409 = vmax.f32 %v3346, 0.0
        %v3410 = vmax.f32 %v3348, 0.0
        %v3411 = vmax.f32 %v3389, 0.0
        %v3412 = vmax.f32 %v3391, 0.0
        %v3413 = vmax.f32 %v3092, 0.0
        %v3414 = vmax.f32 %v3094, 0.0
        %v3415 = vmax.f32 %v3135, 0.0
        %v3416 = vmax.f32 %v3137, 0.0
        %v3417 = vmax.f32 %v3178, 0.0
        %v3418 = vmax.f32 %v3180, 0.0
        %v3419 = vmax.f32 %v3221, 0.0
        %v3420 = vmax.f32 %v3223, 0.0
        %v3421 = vmax.f32 %v3264, 0.0
        %v3422 = vmax.f32 %v3266, 0.0
        %v3423 = vmax.f32 %v3307, 0.0
        %v3424 = vmax.f32 %v3309, 0.0
        %v3425 = vmax.f32 %v3350, 0.0
        %v3426 = vmax.f32 %v3352, 0.0
        %v3427 = vmax.f32 %v3393, 0.0
        %v3428 = vmax.f32 %v3395, 0.0
        %v3429 = vpack.c.bf16 %v3413, %v3397
        %v3430 = vpack.c.bf16 %v3414, %v3398
        %v3431 = vpack.c.bf16 %v3415, %v3399
        %v3432 = vpack.c.bf16 %v3416, %v3400
        %v3433 = vpack.c.bf16 %v3417, %v3401
        %v3434 = vpack.c.bf16 %v3418, %v3402
        %v3435 = vpack.c.bf16 %v3419, %v3403
        %v3436 = vpack.c.bf16 %v3420, %v3404
        %v3437 = vpack.c.bf16 %v3421, %v3405
        %v3438 = vpack.c.bf16 %v3422, %v3406
        %v3439 = vpack.c.bf16 %v3423, %v3407
        %v3440 = vpack.c.bf16 %v3424, %v3408
        %v3441 = vpack.c.bf16 %v3425, %v3409
        %v3442 = vpack.c.bf16 %v3426, %v3410
        %v3443 = vpack.c.bf16 %v3427, %v3411
        %v3444 = vpack.c.bf16 %v3428, %v3412
        %v3445 = vld [vmem:[%s940] sm:$0xf]
        %v3446 = vld [vmem:[%s940 + $0x4] sm:$0xf]
        %v3447 = vld [vmem:[%s940 + $0x8] sm:$0xf]
        %v3448 = vld [vmem:[%s940 + $0xc] sm:$0xf]
        %v3449 = vld [vmem:[%s940 + $0x10] sm:$0xf]
        %v3450 = vld [vmem:[%s940 + $0x14] sm:$0xf]
        %v3451 = vld [vmem:[%s940 + $0x18] sm:$0xf]
        %v3452 = vld [vmem:[%s940 + $0x1c] sm:$0xf]
        %v3453 = vld [vmem:[%s940 + $0x20] sm:$0xf]
        %v3454 = vld [vmem:[%s940 + $0x24] sm:$0xf]
        %v3455 = vld [vmem:[%s940 + $0x28] sm:$0xf]
        %v3456 = vld [vmem:[%s940 + $0x2c] sm:$0xf]
        %v3457 = vld [vmem:[%s940 + $0x30] sm:$0xf]
        %v3458 = vld [vmem:[%s940 + $0x34] sm:$0xf]
        %v3459 = vld [vmem:[%s940 + $0x38] sm:$0xf]
        %v3460 = vld [vmem:[%s940 + $0x3c] sm:$0xf]
        %v3461 = vld [vmem:[%s940 + $0x40] sm:$0xf]
        %v3462 = vld [vmem:[%s940 + $0x44] sm:$0xf]
        %v3463 = vld [vmem:[%s940 + $0x48] sm:$0xf]
        %v3464 = vld [vmem:[%s940 + $0x4c] sm:$0xf]
        %v3465 = vld [vmem:[%s940 + $0x50] sm:$0xf]
        %v3466 = vld [vmem:[%s940 + $0x54] sm:$0xf]
        %v3467 = vld [vmem:[%s940 + $0x58] sm:$0xf]
        %v3468 = vld [vmem:[%s940 + $0x5c] sm:$0xf]
        %v3469 = vld [vmem:[%s940 + $0x60] sm:$0xf]
        %v3470 = vld [vmem:[%s940 + $0x64] sm:$0xf]
        %v3471 = vld [vmem:[%s940 + $0x68] sm:$0xf]
        %v3472 = vld [vmem:[%s940 + $0x6c] sm:$0xf]
        %v3473 = vld [vmem:[%s940 + $0x70] sm:$0xf]
        %v3474 = vld [vmem:[%s940 + $0x74] sm:$0xf]
        %v3475 = vld [vmem:[%s940 + $0x78] sm:$0xf]
        %v3476 = vld [vmem:[%s940 + $0x7c] sm:$0xf]
        %v3477 = vld [vmem:[%s940 + $0x80] sm:$0xf]
        %v3478 = vld [vmem:[%s940 + $0x84] sm:$0xf]
        %v3479 = vld [vmem:[%s940 + $0x88] sm:$0xf]
        %v3480 = vld [vmem:[%s940 + $0x8c] sm:$0xf]
        %v3481 = vld [vmem:[%s940 + $0x90] sm:$0xf]
        %v3482 = vld [vmem:[%s940 + $0x94] sm:$0xf]
        %v3483 = vld [vmem:[%s940 + $0x98] sm:$0xf]
        %v3484 = vld [vmem:[%s940 + $0x9c] sm:$0xf]
        %v3485 = vld [vmem:[%s940 + $0xa0] sm:$0xf]
        %v3486 = vld [vmem:[%s940 + $0xa4] sm:$0xf]
        %v3487 = vld [vmem:[%s940 + $0xa8] sm:$0xf]
        %v3488 = vld [vmem:[%s940 + $0xac] sm:$0xf]
        %v3489 = vld [vmem:[%s940 + $0xb0] sm:$0xf]
        %v3490 = vld [vmem:[%s940 + $0xb4] sm:$0xf]
        %v3491 = vld [vmem:[%s940 + $0xb8] sm:$0xf]
        %v3492 = vld [vmem:[%s940 + $0xbc] sm:$0xf]
        %v3493 = vld [vmem:[%s940 + $0xc0] sm:$0xf]
        %v3494 = vld [vmem:[%s940 + $0xc4] sm:$0xf]
        %v3495 = vld [vmem:[%s940 + $0xc8] sm:$0xf]
        %v3496 = vld [vmem:[%s940 + $0xcc] sm:$0xf]
        %v3497 = vld [vmem:[%s940 + $0xd0] sm:$0xf]
        %v3498 = vld [vmem:[%s940 + $0xd4] sm:$0xf]
        %v3499 = vld [vmem:[%s940 + $0xd8] sm:$0xf]
        %v3500 = vld [vmem:[%s940 + $0xdc] sm:$0xf]
        %v3501 = vld [vmem:[%s940 + $0xe0] sm:$0xf]
        %v3502 = vld [vmem:[%s940 + $0xe4] sm:$0xf]
        %v3503 = vld [vmem:[%s940 + $0xe8] sm:$0xf]
        %v3504 = vld [vmem:[%s940 + $0xec] sm:$0xf]
        %v3505 = vld [vmem:[%s940 + $0xf0] sm:$0xf]
        %v3506 = vld [vmem:[%s940 + $0xf4] sm:$0xf]
        %v3507 = vld [vmem:[%s940 + $0xf8] sm:$0xf]
        %v3508 = vld [vmem:[%s940 + $0xfc] sm:$0xf]
        %v3509 = vld [vmem:[%s940 + $0x100] sm:$0xf]
        %v3510 = vld [vmem:[%s940 + $0x104] sm:$0xf]
        %v3511 = vld [vmem:[%s940 + $0x108] sm:$0xf]
        %v3512 = vld [vmem:[%s940 + $0x10c] sm:$0xf]
        %v3513 = vld [vmem:[%s940 + $0x110] sm:$0xf]
        %v3514 = vld [vmem:[%s940 + $0x114] sm:$0xf]
        %v3515 = vld [vmem:[%s940 + $0x118] sm:$0xf]
        %v3516 = vld [vmem:[%s940 + $0x11c] sm:$0xf]
        %v3517 = vld [vmem:[%s940 + $0x120] sm:$0xf]
        %v3518 = vld [vmem:[%s940 + $0x124] sm:$0xf]
        %v3519 = vld [vmem:[%s940 + $0x128] sm:$0xf]
        %v3520 = vld [vmem:[%s940 + $0x12c] sm:$0xf]
        %v3521 = vld [vmem:[%s940 + $0x130] sm:$0xf]
        %v3522 = vld [vmem:[%s940 + $0x134] sm:$0xf]
        %v3523 = vld [vmem:[%s940 + $0x138] sm:$0xf]
        %v3524 = vld [vmem:[%s940 + $0x13c] sm:$0xf]
        %v3525 = vld [vmem:[%s940 + $0x140] sm:$0xf]
        %v3526 = vld [vmem:[%s940 + $0x144] sm:$0xf]
        %v3527 = vld [vmem:[%s940 + $0x148] sm:$0xf]
        %v3528 = vld [vmem:[%s940 + $0x14c] sm:$0xf]
        %v3529 = vld [vmem:[%s940 + $0x150] sm:$0xf]
        %v3530 = vld [vmem:[%s940 + $0x154] sm:$0xf]
        %v3531 = vld [vmem:[%s940 + $0x158] sm:$0xf]
        %v3532 = vld [vmem:[%s940 + $0x15c] sm:$0xf]
        %v3533 = vld [vmem:[%s940 + $0x160] sm:$0xf]
        %v3534 = vld [vmem:[%s940 + $0x164] sm:$0xf]
        %v3535 = vld [vmem:[%s940 + $0x168] sm:$0xf]
        %v3536 = vld [vmem:[%s940 + $0x16c] sm:$0xf]
        %v3537 = vld [vmem:[%s940 + $0x170] sm:$0xf]
        %v3538 = vld [vmem:[%s940 + $0x174] sm:$0xf]
        %v3539 = vld [vmem:[%s940 + $0x178] sm:$0xf]
        %v3540 = vld [vmem:[%s940 + $0x17c] sm:$0xf]
        %v3541 = vld [vmem:[%s940 + $0x180] sm:$0xf]
        %v3542 = vld [vmem:[%s940 + $0x184] sm:$0xf]
        %v3543 = vld [vmem:[%s940 + $0x188] sm:$0xf]
        %v3544 = vld [vmem:[%s940 + $0x18c] sm:$0xf]
        %v3545 = vld [vmem:[%s940 + $0x190] sm:$0xf]
        %v3546 = vld [vmem:[%s940 + $0x194] sm:$0xf]
        %v3547 = vld [vmem:[%s940 + $0x198] sm:$0xf]
        %v3548 = vld [vmem:[%s940 + $0x19c] sm:$0xf]
        %v3549 = vld [vmem:[%s940 + $0x1a0] sm:$0xf]
        %v3550 = vld [vmem:[%s940 + $0x1a4] sm:$0xf]
        %v3551 = vld [vmem:[%s940 + $0x1a8] sm:$0xf]
        %v3552 = vld [vmem:[%s940 + $0x1ac] sm:$0xf]
        %v3553 = vld [vmem:[%s940 + $0x1b0] sm:$0xf]
        %v3554 = vld [vmem:[%s940 + $0x1b4] sm:$0xf]
        %v3555 = vld [vmem:[%s940 + $0x1b8] sm:$0xf]
        %v3556 = vld [vmem:[%s940 + $0x1bc] sm:$0xf]
        %v3557 = vld [vmem:[%s940 + $0x1c0] sm:$0xf]
        %v3558 = vld [vmem:[%s940 + $0x1c4] sm:$0xf]
        %v3559 = vld [vmem:[%s940 + $0x1c8] sm:$0xf]
        %v3560 = vld [vmem:[%s940 + $0x1cc] sm:$0xf]
        %v3561 = vld [vmem:[%s940 + $0x1d0] sm:$0xf]
        %v3562 = vld [vmem:[%s940 + $0x1d4] sm:$0xf]
        %v3563 = vld [vmem:[%s940 + $0x1d8] sm:$0xf]
        %v3564 = vld [vmem:[%s940 + $0x1dc] sm:$0xf]
        %v3565 = vld [vmem:[%s940 + $0x1e0] sm:$0xf]
        %v3566 = vld [vmem:[%s940 + $0x1e4] sm:$0xf]
        %v3567 = vld [vmem:[%s940 + $0x1e8] sm:$0xf]
        %v3568 = vld [vmem:[%s940 + $0x1ec] sm:$0xf]
        %v3569 = vld [vmem:[%s940 + $0x1f0] sm:$0xf]
        %v3570 = vld [vmem:[%s940 + $0x1f4] sm:$0xf]
        %v3571 = vld [vmem:[%s940 + $0x1f8] sm:$0xf]
        %v3572 = vld [vmem:[%s940 + $0x1fc] sm:$0xf]
        %v3573 = vld [vmem:[%s940 + $0x200] sm:$0xf]
        %v3574 = vld [vmem:[%s940 + $0x204] sm:$0xf]
        %v3575 = vld [vmem:[%s940 + $0x208] sm:$0xf]
        %v3576 = vld [vmem:[%s940 + $0x20c] sm:$0xf]
        %v3577 = vld [vmem:[%s940 + $0x210] sm:$0xf]
        %v3578 = vld [vmem:[%s940 + $0x214] sm:$0xf]
        %v3579 = vld [vmem:[%s940 + $0x218] sm:$0xf]
        %v3580 = vld [vmem:[%s940 + $0x21c] sm:$0xf]
        %v3581 = vld [vmem:[%s940 + $0x220] sm:$0xf]
        %v3582 = vld [vmem:[%s940 + $0x224] sm:$0xf]
        %v3583 = vld [vmem:[%s940 + $0x228] sm:$0xf]
        %v3584 = vld [vmem:[%s940 + $0x22c] sm:$0xf]
        %v3585 = vld [vmem:[%s940 + $0x230] sm:$0xf]
        %v3586 = vld [vmem:[%s940 + $0x234] sm:$0xf]
        %v3587 = vld [vmem:[%s940 + $0x238] sm:$0xf]
        %v3588 = vld [vmem:[%s940 + $0x23c] sm:$0xf]
        %v3589 = vld [vmem:[%s940 + $0x240] sm:$0xf]
        %v3590 = vld [vmem:[%s940 + $0x244] sm:$0xf]
        %v3591 = vld [vmem:[%s940 + $0x248] sm:$0xf]
        %v3592 = vld [vmem:[%s940 + $0x24c] sm:$0xf]
        %v3593 = vld [vmem:[%s940 + $0x250] sm:$0xf]
        %v3594 = vld [vmem:[%s940 + $0x254] sm:$0xf]
        %v3595 = vld [vmem:[%s940 + $0x258] sm:$0xf]
        %v3596 = vld [vmem:[%s940 + $0x25c] sm:$0xf]
        %v3597 = vld [vmem:[%s940 + $0x260] sm:$0xf]
        %v3598 = vld [vmem:[%s940 + $0x264] sm:$0xf]
        %v3599 = vld [vmem:[%s940 + $0x268] sm:$0xf]
        %v3600 = vld [vmem:[%s940 + $0x26c] sm:$0xf]
        %v3601 = vld [vmem:[%s940 + $0x270] sm:$0xf]
        %v3602 = vld [vmem:[%s940 + $0x274] sm:$0xf]
        %v3603 = vld [vmem:[%s940 + $0x278] sm:$0xf]
        %v3604 = vld [vmem:[%s940 + $0x27c] sm:$0xf]
        %v3605 = vld [vmem:[%s940 + $0x280] sm:$0xf]
        %v3606 = vld [vmem:[%s940 + $0x284] sm:$0xf]
        %v3607 = vld [vmem:[%s940 + $0x288] sm:$0xf]
        %v3608 = vld [vmem:[%s940 + $0x28c] sm:$0xf]
        %v3609 = vld [vmem:[%s940 + $0x290] sm:$0xf]
        %v3610 = vld [vmem:[%s940 + $0x294] sm:$0xf]
        %v3611 = vld [vmem:[%s940 + $0x298] sm:$0xf]
        %v3612 = vld [vmem:[%s940 + $0x29c] sm:$0xf]
        %v3613 = vld [vmem:[%s940 + $0x2a0] sm:$0xf]
        %v3614 = vld [vmem:[%s940 + $0x2a4] sm:$0xf]
        %v3615 = vld [vmem:[%s940 + $0x2a8] sm:$0xf]
        %v3616 = vld [vmem:[%s940 + $0x2ac] sm:$0xf]
        %v3617 = vld [vmem:[%s940 + $0x2b0] sm:$0xf]
        %v3618 = vld [vmem:[%s940 + $0x2b4] sm:$0xf]
        %v3619 = vld [vmem:[%s940 + $0x2b8] sm:$0xf]
        %v3620 = vld [vmem:[%s940 + $0x2bc] sm:$0xf]
        %v3621 = vld [vmem:[%s940 + $0x2c0] sm:$0xf]
        %v3622 = vld [vmem:[%s940 + $0x2c4] sm:$0xf]
        %v3623 = vld [vmem:[%s940 + $0x2c8] sm:$0xf]
        %v3624 = vld [vmem:[%s940 + $0x2cc] sm:$0xf]
        %v3625 = vld [vmem:[%s940 + $0x2d0] sm:$0xf]
        %v3626 = vld [vmem:[%s940 + $0x2d4] sm:$0xf]
        %v3627 = vld [vmem:[%s940 + $0x2d8] sm:$0xf]
        %v3628 = vld [vmem:[%s940 + $0x2dc] sm:$0xf]
        %v3629 = vld [vmem:[%s940 + $0x2e0] sm:$0xf]
        %v3630 = vld [vmem:[%s940 + $0x2e4] sm:$0xf]
        %v3631 = vld [vmem:[%s940 + $0x2e8] sm:$0xf]
        %v3632 = vld [vmem:[%s940 + $0x2ec] sm:$0xf]
        %v3633 = vld [vmem:[%s940 + $0x2f0] sm:$0xf]
        %v3634 = vld [vmem:[%s940 + $0x2f4] sm:$0xf]
        %v3635 = vld [vmem:[%s940 + $0x2f8] sm:$0xf]
        %v3636 = vld [vmem:[%s940 + $0x2fc] sm:$0xf]
        %v3637 = vld [vmem:[%s940 + $0x300] sm:$0xf]
        %v3638 = vld [vmem:[%s940 + $0x304] sm:$0xf]
        %v3639 = vld [vmem:[%s940 + $0x308] sm:$0xf]
        %v3640 = vld [vmem:[%s940 + $0x30c] sm:$0xf]
        %v3641 = vld [vmem:[%s940 + $0x310] sm:$0xf]
        %v3642 = vld [vmem:[%s940 + $0x314] sm:$0xf]
        %v3643 = vld [vmem:[%s940 + $0x318] sm:$0xf]
        %v3644 = vld [vmem:[%s940 + $0x31c] sm:$0xf]
        %v3645 = vld [vmem:[%s940 + $0x320] sm:$0xf]
        %v3646 = vld [vmem:[%s940 + $0x324] sm:$0xf]
        %v3647 = vld [vmem:[%s940 + $0x328] sm:$0xf]
        %v3648 = vld [vmem:[%s940 + $0x32c] sm:$0xf]
        %v3649 = vld [vmem:[%s940 + $0x330] sm:$0xf]
        %v3650 = vld [vmem:[%s940 + $0x334] sm:$0xf]
        %v3651 = vld [vmem:[%s940 + $0x338] sm:$0xf]
        %v3652 = vld [vmem:[%s940 + $0x33c] sm:$0xf]
        %v3653 = vld [vmem:[%s940 + $0x340] sm:$0xf]
        %v3654 = vld [vmem:[%s940 + $0x344] sm:$0xf]
        %v3655 = vld [vmem:[%s940 + $0x348] sm:$0xf]
        %v3656 = vld [vmem:[%s940 + $0x34c] sm:$0xf]
        %v3657 = vld [vmem:[%s940 + $0x350] sm:$0xf]
        %v3658 = vld [vmem:[%s940 + $0x354] sm:$0xf]
        %v3659 = vld [vmem:[%s940 + $0x358] sm:$0xf]
        %v3660 = vld [vmem:[%s940 + $0x35c] sm:$0xf]
        %v3661 = vld [vmem:[%s940 + $0x360] sm:$0xf]
        %v3662 = vld [vmem:[%s940 + $0x364] sm:$0xf]
        %v3663 = vld [vmem:[%s940 + $0x368] sm:$0xf]
        %v3664 = vld [vmem:[%s940 + $0x36c] sm:$0xf]
        %v3665 = vld [vmem:[%s940 + $0x370] sm:$0xf]
        %v3666 = vld [vmem:[%s940 + $0x374] sm:$0xf]
        %v3667 = vld [vmem:[%s940 + $0x378] sm:$0xf]
        %v3668 = vld [vmem:[%s940 + $0x37c] sm:$0xf]
        %v3669 = vld [vmem:[%s940 + $0x380] sm:$0xf]
        %v3670 = vld [vmem:[%s940 + $0x384] sm:$0xf]
        %v3671 = vld [vmem:[%s940 + $0x388] sm:$0xf]
        %v3672 = vld [vmem:[%s940 + $0x38c] sm:$0xf]
        %v3673 = vld [vmem:[%s940 + $0x390] sm:$0xf]
        %v3674 = vld [vmem:[%s940 + $0x394] sm:$0xf]
        %v3675 = vld [vmem:[%s940 + $0x398] sm:$0xf]
        %v3676 = vld [vmem:[%s940 + $0x39c] sm:$0xf]
        %v3677 = vld [vmem:[%s940 + $0x3a0] sm:$0xf]
        %v3678 = vld [vmem:[%s940 + $0x3a4] sm:$0xf]
        %v3679 = vld [vmem:[%s940 + $0x3a8] sm:$0xf]
        %v3680 = vld [vmem:[%s940 + $0x3ac] sm:$0xf]
        %v3681 = vld [vmem:[%s940 + $0x3b0] sm:$0xf]
        %v3682 = vld [vmem:[%s940 + $0x3b4] sm:$0xf]
        %v3683 = vld [vmem:[%s940 + $0x3b8] sm:$0xf]
        %v3684 = vld [vmem:[%s940 + $0x3bc] sm:$0xf]
        %v3685 = vld [vmem:[%s940 + $0x3c0] sm:$0xf]
        %v3686 = vld [vmem:[%s940 + $0x3c4] sm:$0xf]
        %v3687 = vld [vmem:[%s940 + $0x3c8] sm:$0xf]
        %v3688 = vld [vmem:[%s940 + $0x3cc] sm:$0xf]
        %v3689 = vld [vmem:[%s940 + $0x3d0] sm:$0xf]
        %v3690 = vld [vmem:[%s940 + $0x3d4] sm:$0xf]
        %v3691 = vld [vmem:[%s940 + $0x3d8] sm:$0xf]
        %v3692 = vld [vmem:[%s940 + $0x3dc] sm:$0xf]
        %v3693 = vld [vmem:[%s940 + $0x3e0] sm:$0xf]
        %v3694 = vld [vmem:[%s940 + $0x3e4] sm:$0xf]
        %v3695 = vld [vmem:[%s940 + $0x3e8] sm:$0xf]
        %v3696 = vld [vmem:[%s940 + $0x3ec] sm:$0xf]
        %v3697 = vld [vmem:[%s940 + $0x3f0] sm:$0xf]
        %v3698 = vld [vmem:[%s940 + $0x3f4] sm:$0xf]
        %v3699 = vld [vmem:[%s940 + $0x3f8] sm:$0xf]
        %v3700 = vld [vmem:[%s940 + $0x3fc] sm:$0xf]
        %v3701 = vld [vmem:[%s948] sm:$0x1]
        %v3703 = vlaneseq
        %v3704 = vshrl.u32 %v3703, 7
        %v3705 = vsub.s32 0, %v3704
        %v3706 = vrot.slane %v3701, %v3705
        %v3964 = vunpack.c.l.b16 %v3445
        %v3965 = vunpack.c.l.b16 %v3446
        %v3966 = vunpack.c.l.b16 %v3447
        %v3967 = vunpack.c.l.b16 %v3448
        %v3968 = vunpack.c.l.b16 %v3449
        %v3969 = vunpack.c.l.b16 %v3450
        %v3970 = vunpack.c.l.b16 %v3451
        %v3971 = vunpack.c.l.b16 %v3452
        %v3972 = vunpack.c.l.b16 %v3453
        %v3973 = vunpack.c.l.b16 %v3454
        %v3974 = vunpack.c.l.b16 %v3455
        %v3975 = vunpack.c.l.b16 %v3456
        %v3976 = vunpack.c.l.b16 %v3457
        %v3977 = vunpack.c.l.b16 %v3458
        %v3978 = vunpack.c.l.b16 %v3459
        %v3979 = vunpack.c.l.b16 %v3460
        %v3980 = vunpack.c.l.b16 %v3461
        %v3981 = vunpack.c.l.b16 %v3462
        %v3982 = vunpack.c.l.b16 %v3463
        %v3983 = vunpack.c.l.b16 %v3464
        %v3984 = vunpack.c.l.b16 %v3465
        %v3985 = vunpack.c.l.b16 %v3466
        %v3986 = vunpack.c.l.b16 %v3467
        %v3987 = vunpack.c.l.b16 %v3468
        %v3988 = vunpack.c.l.b16 %v3469
        %v3989 = vunpack.c.l.b16 %v3470
        %v3990 = vunpack.c.l.b16 %v3471
        %v3991 = vunpack.c.l.b16 %v3472
        %v3992 = vunpack.c.l.b16 %v3473
        %v3993 = vunpack.c.l.b16 %v3474
        %v3994 = vunpack.c.l.b16 %v3475
        %v3995 = vunpack.c.l.b16 %v3476
        %v3996 = vunpack.c.l.b16 %v3477
        %v3997 = vunpack.c.l.b16 %v3478
        %v3998 = vunpack.c.l.b16 %v3479
        %v3999 = vunpack.c.l.b16 %v3480
        %v4000 = vunpack.c.l.b16 %v3481
        %v4001 = vunpack.c.l.b16 %v3482
        %v4002 = vunpack.c.l.b16 %v3483
        %v4003 = vunpack.c.l.b16 %v3484
        %v4004 = vunpack.c.l.b16 %v3485
        %v4005 = vunpack.c.l.b16 %v3486
        %v4006 = vunpack.c.l.b16 %v3487
        %v4007 = vunpack.c.l.b16 %v3488
        %v4008 = vunpack.c.l.b16 %v3489
        %v4009 = vunpack.c.l.b16 %v3490
        %v4010 = vunpack.c.l.b16 %v3491
        %v4011 = vunpack.c.l.b16 %v3492
        %v4012 = vunpack.c.l.b16 %v3493
        %v4013 = vunpack.c.l.b16 %v3494
        %v4014 = vunpack.c.l.b16 %v3495
        %v4015 = vunpack.c.l.b16 %v3496
        %v4016 = vunpack.c.l.b16 %v3497
        %v4017 = vunpack.c.l.b16 %v3498
        %v4018 = vunpack.c.l.b16 %v3499
        %v4019 = vunpack.c.l.b16 %v3500
        %v4020 = vunpack.c.l.b16 %v3501
        %v4021 = vunpack.c.l.b16 %v3502
        %v4022 = vunpack.c.l.b16 %v3503
        %v4023 = vunpack.c.l.b16 %v3504
        %v4024 = vunpack.c.l.b16 %v3505
        %v4025 = vunpack.c.l.b16 %v3506
        %v4026 = vunpack.c.l.b16 %v3507
        %v4027 = vunpack.c.l.b16 %v3508
        %v4028 = vunpack.c.l.b16 %v3509
        %v4029 = vunpack.c.l.b16 %v3510
        %v4030 = vunpack.c.l.b16 %v3511
        %v4031 = vunpack.c.l.b16 %v3512
        %v4032 = vunpack.c.l.b16 %v3513
        %v4033 = vunpack.c.l.b16 %v3514
        %v4034 = vunpack.c.l.b16 %v3515
        %v4035 = vunpack.c.l.b16 %v3516
        %v4036 = vunpack.c.l.b16 %v3517
        %v4037 = vunpack.c.l.b16 %v3518
        %v4038 = vunpack.c.l.b16 %v3519
        %v4039 = vunpack.c.l.b16 %v3520
        %v4040 = vunpack.c.l.b16 %v3521
        %v4041 = vunpack.c.l.b16 %v3522
        %v4042 = vunpack.c.l.b16 %v3523
        %v4043 = vunpack.c.l.b16 %v3524
        %v4044 = vunpack.c.l.b16 %v3525
        %v4045 = vunpack.c.l.b16 %v3526
        %v4046 = vunpack.c.l.b16 %v3527
        %v4047 = vunpack.c.l.b16 %v3528
        %v4048 = vunpack.c.l.b16 %v3529
        %v4049 = vunpack.c.l.b16 %v3530
        %v4050 = vunpack.c.l.b16 %v3531
        %v4051 = vunpack.c.l.b16 %v3532
        %v4052 = vunpack.c.l.b16 %v3533
        %v4053 = vunpack.c.l.b16 %v3534
        %v4054 = vunpack.c.l.b16 %v3535
        %v4055 = vunpack.c.l.b16 %v3536
        %v4056 = vunpack.c.l.b16 %v3537
        %v4057 = vunpack.c.l.b16 %v3538
        %v4058 = vunpack.c.l.b16 %v3539
        %v4059 = vunpack.c.l.b16 %v3540
        %v4060 = vunpack.c.l.b16 %v3541
        %v4061 = vunpack.c.l.b16 %v3542
        %v4062 = vunpack.c.l.b16 %v3543
        %v4063 = vunpack.c.l.b16 %v3544
        %v4064 = vunpack.c.l.b16 %v3545
        %v4065 = vunpack.c.l.b16 %v3546
        %v4066 = vunpack.c.l.b16 %v3547
        %v4067 = vunpack.c.l.b16 %v3548
        %v4068 = vunpack.c.l.b16 %v3549
        %v4069 = vunpack.c.l.b16 %v3550
        %v4070 = vunpack.c.l.b16 %v3551
        %v4071 = vunpack.c.l.b16 %v3552
        %v4072 = vunpack.c.l.b16 %v3553
        %v4073 = vunpack.c.l.b16 %v3554
        %v4074 = vunpack.c.l.b16 %v3555
        %v4075 = vunpack.c.l.b16 %v3556
        %v4076 = vunpack.c.l.b16 %v3557
        %v4077 = vunpack.c.l.b16 %v3558
        %v4078 = vunpack.c.l.b16 %v3559
        %v4079 = vunpack.c.l.b16 %v3560
        %v4080 = vunpack.c.l.b16 %v3561
        %v4081 = vunpack.c.l.b16 %v3562
        %v4082 = vunpack.c.l.b16 %v3563
        %v4083 = vunpack.c.l.b16 %v3564
        %v4084 = vunpack.c.l.b16 %v3565
        %v4085 = vunpack.c.l.b16 %v3566
        %v4086 = vunpack.c.l.b16 %v3567
        %v4087 = vunpack.c.l.b16 %v3568
        %v4088 = vunpack.c.l.b16 %v3569
        %v4089 = vunpack.c.l.b16 %v3570
        %v4090 = vunpack.c.l.b16 %v3571
        %v4091 = vunpack.c.l.b16 %v3572
        %v4092 = vunpack.c.l.b16 %v3573
        %v4093 = vunpack.c.l.b16 %v3574
        %v4094 = vunpack.c.l.b16 %v3575
        %v4095 = vunpack.c.l.b16 %v3576
        %v4096 = vunpack.c.l.b16 %v3577
        %v4097 = vunpack.c.l.b16 %v3578
        %v4098 = vunpack.c.l.b16 %v3579
        %v4099 = vunpack.c.l.b16 %v3580
        %v4100 = vunpack.c.l.b16 %v3581
        %v4101 = vunpack.c.l.b16 %v3582
        %v4102 = vunpack.c.l.b16 %v3583
        %v4103 = vunpack.c.l.b16 %v3584
        %v4104 = vunpack.c.l.b16 %v3585
        %v4105 = vunpack.c.l.b16 %v3586
        %v4106 = vunpack.c.l.b16 %v3587
        %v4107 = vunpack.c.l.b16 %v3588
        %v4108 = vunpack.c.l.b16 %v3589
        %v4109 = vunpack.c.l.b16 %v3590
        %v4110 = vunpack.c.l.b16 %v3591
        %v4111 = vunpack.c.l.b16 %v3592
        %v4112 = vunpack.c.l.b16 %v3593
        %v4113 = vunpack.c.l.b16 %v3594
        %v4114 = vunpack.c.l.b16 %v3595
        %v4115 = vunpack.c.l.b16 %v3596
        %v4116 = vunpack.c.l.b16 %v3597
        %v4117 = vunpack.c.l.b16 %v3598
        %v4118 = vunpack.c.l.b16 %v3599
        %v4119 = vunpack.c.l.b16 %v3600
        %v4120 = vunpack.c.l.b16 %v3601
        %v4121 = vunpack.c.l.b16 %v3602
        %v4122 = vunpack.c.l.b16 %v3603
        %v4123 = vunpack.c.l.b16 %v3604
        %v4124 = vunpack.c.l.b16 %v3605
        %v4125 = vunpack.c.l.b16 %v3606
        %v4126 = vunpack.c.l.b16 %v3607
        %v4127 = vunpack.c.l.b16 %v3608
        %v4128 = vunpack.c.l.b16 %v3609
        %v4129 = vunpack.c.l.b16 %v3610
        %v4130 = vunpack.c.l.b16 %v3611
        %v4131 = vunpack.c.l.b16 %v3612
        %v4132 = vunpack.c.l.b16 %v3613
        %v4133 = vunpack.c.l.b16 %v3614
        %v4134 = vunpack.c.l.b16 %v3615
        %v4135 = vunpack.c.l.b16 %v3616
        %v4136 = vunpack.c.l.b16 %v3617
        %v4137 = vunpack.c.l.b16 %v3618
        %v4138 = vunpack.c.l.b16 %v3619
        %v4139 = vunpack.c.l.b16 %v3620
        %v4140 = vunpack.c.l.b16 %v3621
        %v4141 = vunpack.c.l.b16 %v3622
        %v4142 = vunpack.c.l.b16 %v3623
        %v4143 = vunpack.c.l.b16 %v3624
        %v4144 = vunpack.c.l.b16 %v3625
        %v4145 = vunpack.c.l.b16 %v3626
        %v4146 = vunpack.c.l.b16 %v3627
        %v4147 = vunpack.c.l.b16 %v3628
        %v4148 = vunpack.c.l.b16 %v3629
        %v4149 = vunpack.c.l.b16 %v3630
        %v4150 = vunpack.c.l.b16 %v3631
        %v4151 = vunpack.c.l.b16 %v3632
        %v4152 = vunpack.c.l.b16 %v3633
        %v4153 = vunpack.c.l.b16 %v3634
        %v4154 = vunpack.c.l.b16 %v3635
        %v4155 = vunpack.c.l.b16 %v3636
        %v4156 = vunpack.c.l.b16 %v3637
        %v4157 = vunpack.c.l.b16 %v3638
        %v4158 = vunpack.c.l.b16 %v3639
        %v4159 = vunpack.c.l.b16 %v3640
        %v4160 = vunpack.c.l.b16 %v3641
        %v4161 = vunpack.c.l.b16 %v3642
        %v4162 = vunpack.c.l.b16 %v3643
        %v4163 = vunpack.c.l.b16 %v3644
        %v4164 = vunpack.c.l.b16 %v3645
        %v4165 = vunpack.c.l.b16 %v3646
        %v4166 = vunpack.c.l.b16 %v3647
        %v4167 = vunpack.c.l.b16 %v3648
        %v4168 = vunpack.c.l.b16 %v3649
        %v4169 = vunpack.c.l.b16 %v3650
        %v4170 = vunpack.c.l.b16 %v3651
        %v4171 = vunpack.c.l.b16 %v3652
        %v4172 = vunpack.c.l.b16 %v3653
        %v4173 = vunpack.c.l.b16 %v3654
        %v4174 = vunpack.c.l.b16 %v3655
        %v4175 = vunpack.c.l.b16 %v3656
        %v4176 = vunpack.c.l.b16 %v3657
        %v4177 = vunpack.c.l.b16 %v3658
        %v4178 = vunpack.c.l.b16 %v3659
        %v4179 = vunpack.c.l.b16 %v3660
        %v4180 = vunpack.c.l.b16 %v3661
        %v4181 = vunpack.c.l.b16 %v3662
        %v4182 = vunpack.c.l.b16 %v3663
        %v4183 = vunpack.c.l.b16 %v3664
        %v4184 = vunpack.c.l.b16 %v3665
        %v4185 = vunpack.c.l.b16 %v3666
        %v4186 = vunpack.c.l.b16 %v3667
        %v4187 = vunpack.c.l.b16 %v3668
        %v4188 = vunpack.c.l.b16 %v3669
        %v4189 = vunpack.c.l.b16 %v3670
        %v4190 = vunpack.c.l.b16 %v3671
        %v4191 = vunpack.c.l.b16 %v3672
        %v4192 = vunpack.c.l.b16 %v3673
        %v4193 = vunpack.c.l.b16 %v3674
        %v4194 = vunpack.c.l.b16 %v3675
        %v4195 = vunpack.c.l.b16 %v3676
        %v4196 = vunpack.c.l.b16 %v3677
        %v4197 = vunpack.c.l.b16 %v3678
        %v4198 = vunpack.c.l.b16 %v3679
        %v4199 = vunpack.c.l.b16 %v3680
        %v4200 = vunpack.c.l.b16 %v3681
        %v4201 = vunpack.c.l.b16 %v3682
        %v4202 = vunpack.c.l.b16 %v3683
        %v4203 = vunpack.c.l.b16 %v3684
        %v4204 = vunpack.c.l.b16 %v3685
        %v4205 = vunpack.c.l.b16 %v3686
        %v4206 = vunpack.c.l.b16 %v3687
        %v4207 = vunpack.c.l.b16 %v3688
        %v4208 = vunpack.c.l.b16 %v3689
        %v4209 = vunpack.c.l.b16 %v3690
        %v4210 = vunpack.c.l.b16 %v3691
        %v4211 = vunpack.c.l.b16 %v3692
        %v4212 = vunpack.c.l.b16 %v3693
        %v4213 = vunpack.c.l.b16 %v3694
        %v4214 = vunpack.c.l.b16 %v3695
        %v4215 = vunpack.c.l.b16 %v3696
        %v4216 = vunpack.c.l.b16 %v3697
        %v4217 = vunpack.c.l.b16 %v3698
        %v4218 = vunpack.c.l.b16 %v3699
        %v4219 = vunpack.c.l.b16 %v3700
        %v4220 = vpack.c.b16 %v3965, %v3964
        %v4221 = vpack.c.b16 %v3967, %v3966
        %v4222 = vpack.c.b16 %v3969, %v3968
        %v4223 = vpack.c.b16 %v3971, %v3970
        %v4224 = vpack.c.b16 %v3973, %v3972
        %v4225 = vpack.c.b16 %v3975, %v3974
        %v4226 = vpack.c.b16 %v3977, %v3976
        %v4227 = vpack.c.b16 %v3979, %v3978
        %v4228 = vpack.c.b16 %v3981, %v3980
        %v4229 = vpack.c.b16 %v3983, %v3982
        %v4230 = vpack.c.b16 %v3985, %v3984
        %v4231 = vpack.c.b16 %v3987, %v3986
        %v4232 = vpack.c.b16 %v3989, %v3988
        %v4233 = vpack.c.b16 %v3991, %v3990
        %v4234 = vpack.c.b16 %v3993, %v3992
        %v4235 = vpack.c.b16 %v3995, %v3994
        %v4236 = vpack.c.b16 %v3997, %v3996
        %v4237 = vpack.c.b16 %v3999, %v3998
        %v4238 = vpack.c.b16 %v4001, %v4000
        %v4239 = vpack.c.b16 %v4003, %v4002
        %v4240 = vpack.c.b16 %v4005, %v4004
        %v4241 = vpack.c.b16 %v4007, %v4006
        %v4242 = vpack.c.b16 %v4009, %v4008
        %v4243 = vpack.c.b16 %v4011, %v4010
        %v4244 = vpack.c.b16 %v4013, %v4012
        %v4245 = vpack.c.b16 %v4015, %v4014
        %v4246 = vpack.c.b16 %v4017, %v4016
        %v4247 = vpack.c.b16 %v4019, %v4018
        %v4248 = vpack.c.b16 %v4021, %v4020
        %v4249 = vpack.c.b16 %v4023, %v4022
        %v4250 = vpack.c.b16 %v4025, %v4024
        %v4251 = vpack.c.b16 %v4027, %v4026
        %v4252 = vpack.c.b16 %v4029, %v4028
        %v4253 = vpack.c.b16 %v4031, %v4030
        %v4254 = vpack.c.b16 %v4033, %v4032
        %v4255 = vpack.c.b16 %v4035, %v4034
        %v4256 = vpack.c.b16 %v4037, %v4036
        %v4257 = vpack.c.b16 %v4039, %v4038
        %v4258 = vpack.c.b16 %v4041, %v4040
        %v4259 = vpack.c.b16 %v4043, %v4042
        %v4260 = vpack.c.b16 %v4045, %v4044
        %v4261 = vpack.c.b16 %v4047, %v4046
        %v4262 = vpack.c.b16 %v4049, %v4048
        %v4263 = vpack.c.b16 %v4051, %v4050
        %v4264 = vpack.c.b16 %v4053, %v4052
        %v4265 = vpack.c.b16 %v4055, %v4054
        %v4266 = vpack.c.b16 %v4057, %v4056
        %v4267 = vpack.c.b16 %v4059, %v4058
        %v4268 = vpack.c.b16 %v4061, %v4060
        %v4269 = vpack.c.b16 %v4063, %v4062
        %v4270 = vpack.c.b16 %v4065, %v4064
        %v4271 = vpack.c.b16 %v4067, %v4066
        %v4272 = vpack.c.b16 %v4069, %v4068
        %v4273 = vpack.c.b16 %v4071, %v4070
        %v4274 = vpack.c.b16 %v4073, %v4072
        %v4275 = vpack.c.b16 %v4075, %v4074
        %v4276 = vpack.c.b16 %v4077, %v4076
        %v4277 = vpack.c.b16 %v4079, %v4078
        %v4278 = vpack.c.b16 %v4081, %v4080
        %v4279 = vpack.c.b16 %v4083, %v4082
        %v4280 = vpack.c.b16 %v4085, %v4084
        %v4281 = vpack.c.b16 %v4087, %v4086
        %v4282 = vpack.c.b16 %v4089, %v4088
        %v4283 = vpack.c.b16 %v4091, %v4090
        %v4284 = vpack.c.b16 %v4093, %v4092
        %v4285 = vpack.c.b16 %v4095, %v4094
        %v4286 = vpack.c.b16 %v4097, %v4096
        %v4287 = vpack.c.b16 %v4099, %v4098
        %v4288 = vpack.c.b16 %v4101, %v4100
        %v4289 = vpack.c.b16 %v4103, %v4102
        %v4290 = vpack.c.b16 %v4105, %v4104
        %v4291 = vpack.c.b16 %v4107, %v4106
        %v4292 = vpack.c.b16 %v4109, %v4108
        %v4293 = vpack.c.b16 %v4111, %v4110
        %v4294 = vpack.c.b16 %v4113, %v4112
        %v4295 = vpack.c.b16 %v4115, %v4114
        %v4296 = vpack.c.b16 %v4117, %v4116
        %v4297 = vpack.c.b16 %v4119, %v4118
        %v4298 = vpack.c.b16 %v4121, %v4120
        %v4299 = vpack.c.b16 %v4123, %v4122
        %v4300 = vpack.c.b16 %v4125, %v4124
        %v4301 = vpack.c.b16 %v4127, %v4126
        %v4302 = vpack.c.b16 %v4129, %v4128
        %v4303 = vpack.c.b16 %v4131, %v4130
        %v4304 = vpack.c.b16 %v4133, %v4132
        %v4305 = vpack.c.b16 %v4135, %v4134
        %v4306 = vpack.c.b16 %v4137, %v4136
        %v4307 = vpack.c.b16 %v4139, %v4138
        %v4308 = vpack.c.b16 %v4141, %v4140
        %v4309 = vpack.c.b16 %v4143, %v4142
        %v4310 = vpack.c.b16 %v4145, %v4144
        %v4311 = vpack.c.b16 %v4147, %v4146
        %v4312 = vpack.c.b16 %v4149, %v4148
        %v4313 = vpack.c.b16 %v4151, %v4150
        %v4314 = vpack.c.b16 %v4153, %v4152
        %v4315 = vpack.c.b16 %v4155, %v4154
        %v4316 = vpack.c.b16 %v4157, %v4156
        %v4317 = vpack.c.b16 %v4159, %v4158
        %v4318 = vpack.c.b16 %v4161, %v4160
        %v4319 = vpack.c.b16 %v4163, %v4162
        %v4320 = vpack.c.b16 %v4165, %v4164
        %v4321 = vpack.c.b16 %v4167, %v4166
        %v4322 = vpack.c.b16 %v4169, %v4168
        %v4323 = vpack.c.b16 %v4171, %v4170
        %v4324 = vpack.c.b16 %v4173, %v4172
        %v4325 = vpack.c.b16 %v4175, %v4174
        %v4326 = vpack.c.b16 %v4177, %v4176
        %v4327 = vpack.c.b16 %v4179, %v4178
        %v4328 = vpack.c.b16 %v4181, %v4180
        %v4329 = vpack.c.b16 %v4183, %v4182
        %v4330 = vpack.c.b16 %v4185, %v4184
        %v4331 = vpack.c.b16 %v4187, %v4186
        %v4332 = vpack.c.b16 %v4189, %v4188
        %v4333 = vpack.c.b16 %v4191, %v4190
        %v4334 = vpack.c.b16 %v4193, %v4192
        %v4335 = vpack.c.b16 %v4195, %v4194
        %v4336 = vpack.c.b16 %v4197, %v4196
        %v4337 = vpack.c.b16 %v4199, %v4198
        %v4338 = vpack.c.b16 %v4201, %v4200
        %v4339 = vpack.c.b16 %v4203, %v4202
        %v4340 = vpack.c.b16 %v4205, %v4204
        %v4341 = vpack.c.b16 %v4207, %v4206
        %v4342 = vpack.c.b16 %v4209, %v4208
        %v4343 = vpack.c.b16 %v4211, %v4210
        %v4344 = vpack.c.b16 %v4213, %v4212
        %v4345 = vpack.c.b16 %v4215, %v4214
        %v4346 = vpack.c.b16 %v4217, %v4216
        %v4347 = vpack.c.b16 %v4219, %v4218
        %4476 = vmatprep.subr.bf16.mxu0 0
        %4477 = vmatpush1.bf16.msra.mxu0 %v4220
        %4478 = vmatprep.subr.bf16.mxu0 0
        %4479 = vmatpush1.bf16.msra.mxu0 %v4221
        %4480 = vmatprep.subr.bf16.mxu0 0
        %4481 = vmatpush1.bf16.msra.mxu0 %v4222
        %4482 = vmatprep.subr.bf16.mxu0 0
        %4483 = vmatpush1.bf16.msra.mxu0 %v4223
        %4484 = vmatprep.subr.bf16.mxu0 0
        %4485 = vmatpush1.bf16.msra.mxu0 %v4224
        %4486 = vmatprep.subr.bf16.mxu0 0
        %4487 = vmatpush1.bf16.msra.mxu0 %v4225
        %4488 = vmatprep.subr.bf16.mxu0 0
        %4489 = vmatpush1.bf16.msra.mxu0 %v4226
        %4490 = vmatprep.subr.bf16.mxu0 0
        %4491 = vmatpush1.bf16.msra.mxu0 %v4227
        %4492 = vmatprep.subr.bf16.mxu0 0
        %4493 = vmatpush1.bf16.msra.mxu0 %v4228
        %4494 = vmatprep.subr.bf16.mxu0 0
        %4495 = vmatpush1.bf16.msra.mxu0 %v4229
        %4496 = vmatprep.subr.bf16.mxu0 0
        %4497 = vmatpush1.bf16.msra.mxu0 %v4230
        %4498 = vmatprep.subr.bf16.mxu0 0
        %4499 = vmatpush1.bf16.msra.mxu0 %v4231
        %4500 = vmatprep.subr.bf16.mxu0 0
        %4501 = vmatpush1.bf16.msra.mxu0 %v4232
        %4502 = vmatprep.subr.bf16.mxu0 0
        %4503 = vmatpush1.bf16.msra.mxu0 %v4233
        %4504 = vmatprep.subr.bf16.mxu0 0
        %4505 = vmatpush1.bf16.msra.mxu0 %v4234
        %4506 = vmatprep.subr.bf16.mxu0 0
        %4507 = vmatpush1.bf16.msra.mxu0 %v4235
        %4508 = vmatprep.mubr.bf16.mxu0 %v3430
        %4509 = vmatmul.mubr.bf16.gmra.mrb[0].mxu0 %v3429
        %v4510 = vpop.f32.mrb[0].mxu0
        %v4511 = vadd.f32 %v3706, %v4510
        %v4512 = vpop.f32.mrb[0].mxu0
        %v4513 = vpop.f32.mrb[0].mxu0
        %v4514 = vadd.f32 %v3706, %v4513
        %v4515 = vpop.f32.mrb[0].mxu0
        %4516 = vdwg.mxu0
        %4517 = vmatprep.subr.bf16.mxu0 0
        %4518 = vmatpush1.bf16.msra.mxu0 %v4236
        %4519 = vmatprep.subr.bf16.mxu0 0
        %4520 = vmatpush1.bf16.msra.mxu0 %v4237
        %4521 = vmatprep.subr.bf16.mxu0 0
        %4522 = vmatpush1.bf16.msra.mxu0 %v4238
        %4523 = vmatprep.subr.bf16.mxu0 0
        %4524 = vmatpush1.bf16.msra.mxu0 %v4239
        %4525 = vmatprep.subr.bf16.mxu0 0
        %4526 = vmatpush1.bf16.msra.mxu0 %v4240
        %4527 = vmatprep.subr.bf16.mxu0 0
        %4528 = vmatpush1.bf16.msra.mxu0 %v4241
        %4529 = vmatprep.subr.bf16.mxu0 0
        %4530 = vmatpush1.bf16.msra.mxu0 %v4242
        %4531 = vmatprep.subr.bf16.mxu0 0
        %4532 = vmatpush1.bf16.msra.mxu0 %v4243
        %4533 = vmatprep.subr.bf16.mxu0 0
        %4534 = vmatpush1.bf16.msra.mxu0 %v4244
        %4535 = vmatprep.subr.bf16.mxu0 0
        %4536 = vmatpush1.bf16.msra.mxu0 %v4245
        %4537 = vmatprep.subr.bf16.mxu0 0
        %4538 = vmatpush1.bf16.msra.mxu0 %v4246
        %4539 = vmatprep.subr.bf16.mxu0 0
        %4540 = vmatpush1.bf16.msra.mxu0 %v4247
        %4541 = vmatprep.subr.bf16.mxu0 0
        %4542 = vmatpush1.bf16.msra.mxu0 %v4248
        %4543 = vmatprep.subr.bf16.mxu0 0
        %4544 = vmatpush1.bf16.msra.mxu0 %v4249
        %4545 = vmatprep.subr.bf16.mxu0 0
        %4546 = vmatpush1.bf16.msra.mxu0 %v4250
        %4547 = vmatprep.subr.bf16.mxu0 0
        %4548 = vmatpush1.bf16.msra.mxu0 %v4251
        %4549 = vmatprep.mubr.bf16.mxu0 %v3432
        %4550 = vmatmul.mubr.bf16.gmra.mrb[0].mxu0 %v3431
        %v4551 = vpop.f32.mrb[0].mxu0
        %v4552 = vadd.f32 %v4511, %v4551
        %v4553 = vpop.f32.mrb[0].mxu0
        %v4554 = vpop.f32.mrb[0].mxu0
        %v4555 = vadd.f32 %v4514, %v4554
        %v4556 = vpop.f32.mrb[0].mxu0
        %4557 = vdwg.mxu0
        %4558 = vmatprep.subr.bf16.mxu0 0
        %4559 = vmatpush1.bf16.msra.mxu0 %v4252
        %4560 = vmatprep.subr.bf16.mxu0 0
        %4561 = vmatpush1.bf16.msra.mxu0 %v4253
        %4562 = vmatprep.subr.bf16.mxu0 0
        %4563 = vmatpush1.bf16.msra.mxu0 %v4254
        %4564 = vmatprep.subr.bf16.mxu0 0
        %4565 = vmatpush1.bf16.msra.mxu0 %v4255
        %4566 = vmatprep.subr.bf16.mxu0 0
        %4567 = vmatpush1.bf16.msra.mxu0 %v4256
        %4568 = vmatprep.subr.bf16.mxu0 0
        %4569 = vmatpush1.bf16.msra.mxu0 %v4257
        %4570 = vmatprep.subr.bf16.mxu0 0
        %4571 = vmatpush1.bf16.msra.mxu0 %v4258
        %4572 = vmatprep.subr.bf16.mxu0 0
        %4573 = vmatpush1.bf16.msra.mxu0 %v4259
        %4574 = vmatprep.subr.bf16.mxu0 0
        %4575 = vmatpush1.bf16.msra.mxu0 %v4260
        %4576 = vmatprep.subr.bf16.mxu0 0
        %4577 = vmatpush1.bf16.msra.mxu0 %v4261
        %4578 = vmatprep.subr.bf16.mxu0 0
        %4579 = vmatpush1.bf16.msra.mxu0 %v4262
        %4580 = vmatprep.subr.bf16.mxu0 0
        %4581 = vmatpush1.bf16.msra.mxu0 %v4263
        %4582 = vmatprep.subr.bf16.mxu0 0
        %4583 = vmatpush1.bf16.msra.mxu0 %v4264
        %4584 = vmatprep.subr.bf16.mxu0 0
        %4585 = vmatpush1.bf16.msra.mxu0 %v4265
        %4586 = vmatprep.subr.bf16.mxu0 0
        %4587 = vmatpush1.bf16.msra.mxu0 %v4266
        %4588 = vmatprep.subr.bf16.mxu0 0
        %4589 = vmatpush1.bf16.msra.mxu0 %v4267
        %4590 = vmatprep.mubr.bf16.mxu0 %v3434
        %4591 = vmatmul.mubr.bf16.gmra.mrb[0].mxu0 %v3433
        %v4592 = vpop.f32.mrb[0].mxu0
        %v4593 = vadd.f32 %v4552, %v4592
        %v4594 = vpop.f32.mrb[0].mxu0
        %v4595 = vpop.f32.mrb[0].mxu0
        %v4596 = vadd.f32 %v4555, %v4595
        %v4597 = vpop.f32.mrb[0].mxu0
        %4598 = vdwg.mxu0
        %4599 = vmatprep.subr.bf16.mxu0 0
        %4600 = vmatpush1.bf16.msra.mxu0 %v4268
        %4601 = vmatprep.subr.bf16.mxu0 0
        %4602 = vmatpush1.bf16.msra.mxu0 %v4269
        %4603 = vmatprep.subr.bf16.mxu0 0
        %4604 = vmatpush1.bf16.msra.mxu0 %v4270
        %4605 = vmatprep.subr.bf16.mxu0 0
        %4606 = vmatpush1.bf16.msra.mxu0 %v4271
        %4607 = vmatprep.subr.bf16.mxu0 0
        %4608 = vmatpush1.bf16.msra.mxu0 %v4272
        %4609 = vmatprep.subr.bf16.mxu0 0
        %4610 = vmatpush1.bf16.msra.mxu0 %v4273
        %4611 = vmatprep.subr.bf16.mxu0 0
        %4612 = vmatpush1.bf16.msra.mxu0 %v4274
        %4613 = vmatprep.subr.bf16.mxu0 0
        %4614 = vmatpush1.bf16.msra.mxu0 %v4275
        %4615 = vmatprep.subr.bf16.mxu0 0
        %4616 = vmatpush1.bf16.msra.mxu0 %v4276
        %4617 = vmatprep.subr.bf16.mxu0 0
        %4618 = vmatpush1.bf16.msra.mxu0 %v4277
        %4619 = vmatprep.subr.bf16.mxu0 0
        %4620 = vmatpush1.bf16.msra.mxu0 %v4278
        %4621 = vmatprep.subr.bf16.mxu0 0
        %4622 = vmatpush1.bf16.msra.mxu0 %v4279
        %4623 = vmatprep.subr.bf16.mxu0 0
        %4624 = vmatpush1.bf16.msra.mxu0 %v4280
        %4625 = vmatprep.subr.bf16.mxu0 0
        %4626 = vmatpush1.bf16.msra.mxu0 %v4281
        %4627 = vmatprep.subr.bf16.mxu0 0
        %4628 = vmatpush1.bf16.msra.mxu0 %v4282
        %4629 = vmatprep.subr.bf16.mxu0 0
        %4630 = vmatpush1.bf16.msra.mxu0 %v4283
        %4631 = vmatprep.mubr.bf16.mxu0 %v3436
        %4632 = vmatmul.mubr.bf16.gmra.mrb[0].mxu0 %v3435
        %v4633 = vpop.f32.mrb[0].mxu0
        %v4634 = vadd.f32 %v4593, %v4633
        %v4635 = vpop.f32.mrb[0].mxu0
        %v4636 = vpop.f32.mrb[0].mxu0
        %v4637 = vadd.f32 %v4596, %v4636
        %v4638 = vpop.f32.mrb[0].mxu0
        %4639 = vdwg.mxu0
        %4640 = vmatprep.subr.bf16.mxu0 0
        %4641 = vmatpush1.bf16.msra.mxu0 %v4284
        %4642 = vmatprep.subr.bf16.mxu0 0
        %4643 = vmatpush1.bf16.msra.mxu0 %v4285
        %4644 = vmatprep.subr.bf16.mxu0 0
        %4645 = vmatpush1.bf16.msra.mxu0 %v4286
        %4646 = vmatprep.subr.bf16.mxu0 0
        %4647 = vmatpush1.bf16.msra.mxu0 %v4287
        %4648 = vmatprep.subr.bf16.mxu0 0
        %4649 = vmatpush1.bf16.msra.mxu0 %v4288
        %4650 = vmatprep.subr.bf16.mxu0 0
        %4651 = vmatpush1.bf16.msra.mxu0 %v4289
        %4652 = vmatprep.subr.bf16.mxu0 0
        %4653 = vmatpush1.bf16.msra.mxu0 %v4290
        %4654 = vmatprep.subr.bf16.mxu0 0
        %4655 = vmatpush1.bf16.msra.mxu0 %v4291
        %4656 = vmatprep.subr.bf16.mxu0 0
        %4657 = vmatpush1.bf16.msra.mxu0 %v4292
        %4658 = vmatprep.subr.bf16.mxu0 0
        %4659 = vmatpush1.bf16.msra.mxu0 %v4293
        %4660 = vmatprep.subr.bf16.mxu0 0
        %4661 = vmatpush1.bf16.msra.mxu0 %v4294
        %4662 = vmatprep.subr.bf16.mxu0 0
        %4663 = vmatpush1.bf16.msra.mxu0 %v4295
        %4664 = vmatprep.subr.bf16.mxu0 0
        %4665 = vmatpush1.bf16.msra.mxu0 %v4296
        %4666 = vmatprep.subr.bf16.mxu0 0
        %4667 = vmatpush1.bf16.msra.mxu0 %v4297
        %4668 = vmatprep.subr.bf16.mxu0 0
        %4669 = vmatpush1.bf16.msra.mxu0 %v4298
        %4670 = vmatprep.subr.bf16.mxu0 0
        %4671 = vmatpush1.bf16.msra.mxu0 %v4299
        %4672 = vmatprep.mubr.bf16.mxu0 %v3438
        %4673 = vmatmul.mubr.bf16.gmra.mrb[0].mxu0 %v3437
        %v4674 = vpop.f32.mrb[0].mxu0
        %v4675 = vadd.f32 %v4634, %v4674
        %v4676 = vpop.f32.mrb[0].mxu0
        %v4677 = vpop.f32.mrb[0].mxu0
        %v4678 = vadd.f32 %v4637, %v4677
        %v4679 = vpop.f32.mrb[0].mxu0
        %4680 = vdwg.mxu0
        %4681 = vmatprep.subr.bf16.mxu0 0
        %4682 = vmatpush1.bf16.msra.mxu0 %v4300
        %4683 = vmatprep.subr.bf16.mxu0 0
        %4684 = vmatpush1.bf16.msra.mxu0 %v4301
        %4685 = vmatprep.subr.bf16.mxu0 0
        %4686 = vmatpush1.bf16.msra.mxu0 %v4302
        %4687 = vmatprep.subr.bf16.mxu0 0
        %4688 = vmatpush1.bf16.msra.mxu0 %v4303
        %4689 = vmatprep.subr.bf16.mxu0 0
        %4690 = vmatpush1.bf16.msra.mxu0 %v4304
        %4691 = vmatprep.subr.bf16.mxu0 0
        %4692 = vmatpush1.bf16.msra.mxu0 %v4305
        %4693 = vmatprep.subr.bf16.mxu0 0
        %4694 = vmatpush1.bf16.msra.mxu0 %v4306
        %4695 = vmatprep.subr.bf16.mxu0 0
        %4696 = vmatpush1.bf16.msra.mxu0 %v4307
        %4697 = vmatprep.subr.bf16.mxu0 0
        %4698 = vmatpush1.bf16.msra.mxu0 %v4308
        %4699 = vmatprep.subr.bf16.mxu0 0
        %4700 = vmatpush1.bf16.msra.mxu0 %v4309
        %4701 = vmatprep.subr.bf16.mxu0 0
        %4702 = vmatpush1.bf16.msra.mxu0 %v4310
        %4703 = vmatprep.subr.bf16.mxu0 0
        %4704 = vmatpush1.bf16.msra.mxu0 %v4311
        %4705 = vmatprep.subr.bf16.mxu0 0
        %4706 = vmatpush1.bf16.msra.mxu0 %v4312
        %4707 = vmatprep.subr.bf16.mxu0 0
        %4708 = vmatpush1.bf16.msra.mxu0 %v4313
        %4709 = vmatprep.subr.bf16.mxu0 0
        %4710 = vmatpush1.bf16.msra.mxu0 %v4314
        %4711 = vmatprep.subr.bf16.mxu0 0
        %4712 = vmatpush1.bf16.msra.mxu0 %v4315
        %4713 = vmatprep.mubr.bf16.mxu0 %v3440
        %4714 = vmatmul.mubr.bf16.gmra.mrb[0].mxu0 %v3439
        %v4715 = vpop.f32.mrb[0].mxu0
        %v4716 = vadd.f32 %v4675, %v4715
        %v4717 = vpop.f32.mrb[0].mxu0
        %v4718 = vpop.f32.mrb[0].mxu0
        %v4719 = vadd.f32 %v4678, %v4718
        %v4720 = vpop.f32.mrb[0].mxu0
        %4721 = vdwg.mxu0
        %4722 = vmatprep.subr.bf16.mxu0 0
        %4723 = vmatpush1.bf16.msra.mxu0 %v4316
        %4724 = vmatprep.subr.bf16.mxu0 0
        %4725 = vmatpush1.bf16.msra.mxu0 %v4317
        %4726 = vmatprep.subr.bf16.mxu0 0
        %4727 = vmatpush1.bf16.msra.mxu0 %v4318
        %4728 = vmatprep.subr.bf16.mxu0 0
        %4729 = vmatpush1.bf16.msra.mxu0 %v4319
        %4730 = vmatprep.subr.bf16.mxu0 0
        %4731 = vmatpush1.bf16.msra.mxu0 %v4320
        %4732 = vmatprep.subr.bf16.mxu0 0
        %4733 = vmatpush1.bf16.msra.mxu0 %v4321
        %4734 = vmatprep.subr.bf16.mxu0 0
        %4735 = vmatpush1.bf16.msra.mxu0 %v4322
        %4736 = vmatprep.subr.bf16.mxu0 0
        %4737 = vmatpush1.bf16.msra.mxu0 %v4323
        %4738 = vmatprep.subr.bf16.mxu0 0
        %4739 = vmatpush1.bf16.msra.mxu0 %v4324
        %4740 = vmatprep.subr.bf16.mxu0 0
        %4741 = vmatpush1.bf16.msra.mxu0 %v4325
        %4742 = vmatprep.subr.bf16.mxu0 0
        %4743 = vmatpush1.bf16.msra.mxu0 %v4326
        %4744 = vmatprep.subr.bf16.mxu0 0
        %4745 = vmatpush1.bf16.msra.mxu0 %v4327
        %4746 = vmatprep.subr.bf16.mxu0 0
        %4747 = vmatpush1.bf16.msra.mxu0 %v4328
        %4748 = vmatprep.subr.bf16.mxu0 0
        %4749 = vmatpush1.bf16.msra.mxu0 %v4329
        %4750 = vmatprep.subr.bf16.mxu0 0
        %4751 = vmatpush1.bf16.msra.mxu0 %v4330
        %4752 = vmatprep.subr.bf16.mxu0 0
        %4753 = vmatpush1.bf16.msra.mxu0 %v4331
        %4754 = vmatprep.mubr.bf16.mxu0 %v3442
        %4755 = vmatmul.mubr.bf16.gmra.mrb[0].mxu0 %v3441
        %v4756 = vpop.f32.mrb[0].mxu0
        %v4757 = vadd.f32 %v4716, %v4756
        %v4758 = vpop.f32.mrb[0].mxu0
        %v4759 = vpop.f32.mrb[0].mxu0
        %v4760 = vadd.f32 %v4719, %v4759
        %v4761 = vpop.f32.mrb[0].mxu0
        %4762 = vdwg.mxu0
        %4763 = vmatprep.subr.bf16.mxu0 0
        %4764 = vmatpush1.bf16.msra.mxu0 %v4332
        %4765 = vmatprep.subr.bf16.mxu0 0
        %4766 = vmatpush1.bf16.msra.mxu0 %v4333
        %4767 = vmatprep.subr.bf16.mxu0 0
        %4768 = vmatpush1.bf16.msra.mxu0 %v4334
        %4769 = vmatprep.subr.bf16.mxu0 0
        %4770 = vmatpush1.bf16.msra.mxu0 %v4335
        %4771 = vmatprep.subr.bf16.mxu0 0
        %4772 = vmatpush1.bf16.msra.mxu0 %v4336
        %4773 = vmatprep.subr.bf16.mxu0 0
        %4774 = vmatpush1.bf16.msra.mxu0 %v4337
        %4775 = vmatprep.subr.bf16.mxu0 0
        %4776 = vmatpush1.bf16.msra.mxu0 %v4338
        %4777 = vmatprep.subr.bf16.mxu0 0
        %4778 = vmatpush1.bf16.msra.mxu0 %v4339
        %4779 = vmatprep.subr.bf16.mxu0 0
        %4780 = vmatpush1.bf16.msra.mxu0 %v4340
        %4781 = vmatprep.subr.bf16.mxu0 0
        %4782 = vmatpush1.bf16.msra.mxu0 %v4341
        %4783 = vmatprep.subr.bf16.mxu0 0
        %4784 = vmatpush1.bf16.msra.mxu0 %v4342
        %4785 = vmatprep.subr.bf16.mxu0 0
        %4786 = vmatpush1.bf16.msra.mxu0 %v4343
        %4787 = vmatprep.subr.bf16.mxu0 0
        %4788 = vmatpush1.bf16.msra.mxu0 %v4344
        %4789 = vmatprep.subr.bf16.mxu0 0
        %4790 = vmatpush1.bf16.msra.mxu0 %v4345
        %4791 = vmatprep.subr.bf16.mxu0 0
        %4792 = vmatpush1.bf16.msra.mxu0 %v4346
        %4793 = vmatprep.subr.bf16.mxu0 0
        %4794 = vmatpush1.bf16.msra.mxu0 %v4347
        %4795 = vmatprep.mubr.bf16.mxu0 %v3444
        %4796 = vmatmul.mubr.bf16.gmra.mrb[0].mxu0 %v3443
        %v4797 = vpop.f32.mrb[0].mxu0
        %v4798 = vadd.f32 %v4757, %v4797
        %v4799 = vpop.f32.mrb[0].mxu0
        %v4800 = vpop.f32.mrb[0].mxu0
        %v4801 = vadd.f32 %v4760, %v4800
        %v4802 = vpop.f32.mrb[0].mxu0
        %4803 = vdwg.mxu0
        %v4804 = vadd.f32 %v2198, %v4798
        %v4805 = vadd.f32 %v2199, %v4801
        %v4806 = vld [vmem:[%s956] sm:$0x1]
        %v4807 = vld [vmem:[%s964] sm:$0x1]
        %4808 = vadd.xlane.f32.xlu0 %v4804
        %v4809 = vpop.xlane.xlu0 %4808
        %4810 = vadd.xlane.f32.xlu0 %v4805
        %v4811 = vpop.xlane.xlu0 %4810
        %v4812 = vmul.f32 %v4809, %v2165
        %v4813 = vmul.f32 %v4811, %v2165
        %v4814 = vsub.f32 %v4804, %v4812
        %v4815 = vsub.f32 %v4805, %v4813
        %v4816 = vmul.f32 %v4814, %v4814
        %v4817 = vmul.f32 %v4815, %v4815
        %4818 = vadd.xlane.f32.xlu0 %v4816
        %v4819 = vpop.xlane.xlu0 %4818
        %4820 = vadd.xlane.f32.xlu0 %v4817
        %v4821 = vpop.xlane.xlu0 %4820
        %v4822 = vmul.f32 %v4819, %v2165
        %v4823 = vmul.f32 %v4821, %v2165
        %v4824 = vadd.f32 %v4822, 1e-05
        %v4825 = vadd.f32 %v4823, 1e-05
        %v4826 = vrsqrt.pop %v4824
        %v4827 = vrsqrt.pop %v4825
        %v4828 = vmul.f32 %v4814, %v4826
        %v4829 = vmul.f32 %v4815, %v4827
        %v4831 = vlaneseq
        %v4832 = vshrl.u32 %v4831, 7
        %v4833 = vsub.s32 0, %v4832
        %v4834 = vrot.slane %v4806, %v4833
        %v4836 = vmul.f32 %v4828, %v4834
        %v4837 = vmul.f32 %v4829, %v4834
        %v4839 = vlaneseq
        %v4840 = vshrl.u32 %v4839, 7
        %v4841 = vsub.s32 0, %v4840
        %v4842 = vrot.slane %v4807, %v4841
        %v4844 = vadd.f32 %v4836, %v4842
        %v4845 = vadd.f32 %v4837, %v4842
        %4846 = vst [vmem:[#allocation2] sm:$0xff] %v4844
        %4847 = vst [vmem:[#allocation2 + $0x8] sm:$0xff] %v4845
        %p4848 = scmp.eq.s32.totalorder %s61, 3
        // Predicated region
        $region161: #{tpu_custom_call.1} parent=87 // pred_check
          %p4849 = pneg %p4848
        $region162: #{tpu_custom_call.1} parent=87 // pred_check_branch
          %4851 = sbr.rel (%p4849) target = $region164
        $region163: #{tpu_custom_call.1} parent=87 // pred_region
          %v4852 = vpack.c.bf16 %v4844, %v4844
          %v4853 = vld [vmem:[#allocation27] sm:$0xf]
          %v4854 = vld [vmem:[#allocation27 + $0x4] sm:$0xf]
          %v4855 = vld [vmem:[#allocation27 + $0x8] sm:$0xf]
          %v4856 = vld [vmem:[#allocation27 + $0xc] sm:$0xf]
          %v4857 = vld [vmem:[#allocation27 + $0x10] sm:$0xf]
          %v4858 = vld [vmem:[#allocation27 + $0x14] sm:$0xf]
          %v4859 = vld [vmem:[#allocation27 + $0x18] sm:$0xf]
          %v4860 = vld [vmem:[#allocation27 + $0x1c] sm:$0xf]
          %v4861 = vld [vmem:[#allocation27 + $0x20] sm:$0xf]
          %v4862 = vld [vmem:[#allocation27 + $0x24] sm:$0xf]
          %v4863 = vld [vmem:[#allocation27 + $0x28] sm:$0xf]
          %v4864 = vld [vmem:[#allocation27 + $0x2c] sm:$0xf]
          %v4865 = vld [vmem:[#allocation27 + $0x30] sm:$0xf]
          %v4866 = vld [vmem:[#allocation27 + $0x34] sm:$0xf]
          %v4867 = vld [vmem:[#allocation27 + $0x38] sm:$0xf]
          %v4868 = vld [vmem:[#allocation27 + $0x3c] sm:$0xf]
          %v4869 = vld [vmem:[#allocation29] sm:$0x1]
          %v4871 = vlaneseq
          %v4872 = vshrl.u32 %v4871, 7
          %v4873 = vsub.s32 0, %v4872
          %v4874 = vrot.slane %v4869, %v4873
          %v4892 = vunpack.c.l.b16 %v4853
          %v4893 = vunpack.c.l.b16 %v4854
          %v4894 = vunpack.c.l.b16 %v4855
          %v4895 = vunpack.c.l.b16 %v4856
          %v4896 = vunpack.c.l.b16 %v4857
          %v4897 = vunpack.c.l.b16 %v4858
          %v4898 = vunpack.c.l.b16 %v4859
          %v4899 = vunpack.c.l.b16 %v4860
          %v4900 = vunpack.c.l.b16 %v4861
          %v4901 = vunpack.c.l.b16 %v4862
          %v4902 = vunpack.c.l.b16 %v4863
          %v4903 = vunpack.c.l.b16 %v4864
          %v4904 = vunpack.c.l.b16 %v4865
          %v4905 = vunpack.c.l.b16 %v4866
          %v4906 = vunpack.c.l.b16 %v4867
          %v4907 = vunpack.c.l.b16 %v4868
          %v4908 = vpack.c.b16 %v4893, %v4892
          %v4909 = vpack.c.b16 %v4895, %v4894
          %v4910 = vpack.c.b16 %v4897, %v4896
          %v4911 = vpack.c.b16 %v4899, %v4898
          %v4912 = vpack.c.b16 %v4901, %v4900
          %v4913 = vpack.c.b16 %v4903, %v4902
          %v4914 = vpack.c.b16 %v4905, %v4904
          %v4915 = vpack.c.b16 %v4907, %v4906
          %4924 = vmatprep.subr.bf16.mxu0 0
          %4925 = vmatpush1.bf16.msra.mxu0 %v4908
          %4926 = vmatprep.subr.bf16.mxu0 0
          %4927 = vmatpush1.bf16.msra.mxu0 %v4909
          %4928 = vmatprep.subr.bf16.mxu0 0
          %4929 = vmatpush1.bf16.msra.mxu0 %v4910
          %4930 = vmatprep.subr.bf16.mxu0 0
          %4931 = vmatpush1.bf16.msra.mxu0 %v4911
          %4932 = vmatprep.subr.bf16.mxu0 0
          %4933 = vmatpush1.bf16.msra.mxu0 %v4912
          %4934 = vmatprep.subr.bf16.mxu0 0
          %4935 = vmatpush1.bf16.msra.mxu0 %v4913
          %4936 = vmatprep.subr.bf16.mxu0 0
          %4937 = vmatpush1.bf16.msra.mxu0 %v4914
          %4938 = vmatprep.subr.bf16.mxu0 0
          %4939 = vmatpush1.bf16.msra.mxu0 %v4915
          %4940 = vmatprep.subr.bf16.mxu0 0
          %4941 = vmatpush1.bf16.msra.mxu0 0
          %4942 = vmatprep.subr.bf16.mxu0 0
          %4943 = vmatpush1.bf16.msra.mxu0 0
          %4944 = vmatprep.subr.bf16.mxu0 0
          %4945 = vmatpush1.bf16.msra.mxu0 0
          %4946 = vmatprep.subr.bf16.mxu0 0
          %4947 = vmatpush1.bf16.msra.mxu0 0
          %4948 = vmatprep.subr.bf16.mxu0 0
          %4949 = vmatpush1.bf16.msra.mxu0 0
          %4950 = vmatprep.subr.bf16.mxu0 0
          %4951 = vmatpush1.bf16.msra.mxu0 0
          %4952 = vmatprep.subr.bf16.mxu0 0
          %4953 = vmatpush1.bf16.msra.mxu0 0
          %4954 = vmatprep.subr.bf16.mxu0 0
          %4955 = vmatpush1.bf16.msra.mxu0 0
          %4956 = vmatprep.mubr.bf16.mxu0 0
          %4957 = vmatmul.mubr.bf16.gmra.mrb[0].mxu0 %v4852
          %v4958 = vpop.f32.mrb[0].mxu0
          %v4959 = vadd.f32 %v4874, %v4958
          %v4960 = vpop.f32.mrb[0].mxu0
          %v4961 = vpop.f32.mrb[0].mxu0
          %v4962 = vpop.f32.mrb[0].mxu0
          %4963 = vdwg.mxu0
          %4964 = vst [vmem:[%s1081] sm:$0xff] %v4959
        $region164: #{tpu_custom_call.1} parent=87 // pred_fallthru
          _
        %s4965 = sand.u32 %s503, 1
        %s4966 = scalar_lea.sflag [#allocation5], %s4965
        %s4967 = sand.u32 %s503, 1
        %s4968 = smul.addr %s4967, 8
        %s4969 = scalar_lea.vmem [#allocation30], %s4968
        // Predicated region
        $region165: #{tpu_custom_call.1} parent=87 // pred_check
          %p4970 = pneg %p513
        $region166: #{tpu_custom_call.1} parent=87 // pred_check_branch
          %4972 = sbr.rel (%p4970) target = $region168
        $region167: #{tpu_custom_call.1} parent=87 // pred_region
          %s4974 = ssub.s32 128, 128
          %4975 = vsyncadd %s4966, %s4974
          %s4976 = smul.addr %s60, 128
          %s4977 = scalar_lea.hbm %s17, %s4976
          %s4979 = sshll.u32 %s4969, 4
          %s4980 = int_to_ptr.vmem [resolvable:$true] %s4979
          %4982 = dma.vmem_to_hbm [thread:$0]  %s4980, 128, %s4977, %s4966
        $region168: #{tpu_custom_call.1} parent=87 // pred_fallthru
          _
      $region88: #{tpu_custom_call.1} parent=5 // pred_fallthru
        _
      %p4983 = scmp.le.s32.totalorder 2, %s51
      // Predicated region
      $region169: #{tpu_custom_call.1} parent=5 // pred_check
        %p4984 = pneg %p4983
      $region170: #{tpu_custom_call.1} parent=5 // pred_check_branch
        %4986 = sbr.rel (%p4984) target = $region172
      $region171: #{tpu_custom_call.1} parent=5 // pred_region
        %s4987 = ssub.s32 %s51, 2
        // Predicated region
        $region173: #{tpu_custom_call.1} parent=171 // pred_check
          %p4988 = pneg %p519
        $region174: #{tpu_custom_call.1} parent=171 // pred_check_branch
          %4990 = sbr.rel (%p4988) target = $region176
        $region175: #{tpu_custom_call.1} parent=171 // pred_region
          %s4991 = sand.u32 %s504, 1
          %s4992 = scalar_lea.sflag [#allocation5], %s4991
          %s4993 = sand.u32 %s504, 1
          %s4994 = smul.addr %s4993, 8
          %s4995 = scalar_lea.vmem [#allocation30], %s4994
          %4996 = dma.done %s4992, 128
        $region176: #{tpu_custom_call.1} parent=171 // pred_fallthru
          _
      $region172: #{tpu_custom_call.1} parent=5 // pred_fallthru
        _
    $region6: #{tpu_custom_call.1} parent=1 // loop_footer
      %s55 = sadd.s32 1, %s51
    $region7: #{tpu_custom_call.1} parent=1 // loop_footer_branch
      %50 = sbr.rel target = $region3
    $region8: #{tpu_custom_call.1} parent=1 // loop_exit
      _
    %4997 = vsyncpa [#allocation4], 1
    %s4998 = scalar_lea.sflag [#allocation4], 1
    %4999 = vsyncpa %s4998, 1
    %5000 = vsyncpa [#allocation7], 1
    %s5001 = scalar_lea.sflag [#allocation7], 1
    %5002 = vsyncpa %s5001, 1
    %5003 = vsyncpa [#allocation10], 1
    %s5004 = scalar_lea.sflag [#allocation10], 1
    %5005 = vsyncpa %s5004, 1
    %5006 = vsyncpa [#allocation13], 1
    %s5007 = scalar_lea.sflag [#allocation13], 1
    %5008 = vsyncpa %s5007, 1
    %5009 = vsyncpa [#allocation16], 1
    %s5010 = scalar_lea.sflag [#allocation16], 1
    %5011 = vsyncpa %s5010, 1
    %5012 = vsyncpa [#allocation19], 1
    %s5013 = scalar_lea.sflag [#allocation19], 1
    %5014 = vsyncpa %s5013, 1
    %5015 = vsyncpa [#allocation22], 1
    %s5016 = scalar_lea.sflag [#allocation22], 1
    %5017 = vsyncpa %s5016, 1
    %5018 = vsyncpa [#allocation25], 1
    %s5019 = scalar_lea.sflag [#allocation25], 1
    %5020 = vsyncpa %s5019, 1
    %5021 = vsyncpa [#allocation28], 1
    %5022 = vsyncpa [#allocation5], 1
    %s5023 = scalar_lea.sflag [#allocation5], 1
    %5024 = vsyncpa %s5023, 1

</llo_original>
